<compile_context>
chip_gen: v7x
topology: tpu7x:2x2x1
jax: 0.10.0
libtpu: 0.0.40
codegen_flags: <defaults>
</compile_context>

<pallas_src>
import jax
import jax.numpy as jnp
from jax.experimental import pallas as pl
from jax.experimental.pallas import tpu as pltpu


# --------------------------------------------------------------------------------------
# Pallas kernels
# --------------------------------------------------------------------------------------

def _conv1x1_kernel(x_ref, w_ref, b_ref, o_ref):
    """Lane-dense pointwise-conv tile: (Cout, Cin) @ (Cin, tN) + bias. bf16 MXU, f32 acc."""
    o_ref[...] = (
        jnp.dot(w_ref[...], x_ref[...], preferred_element_type=jnp.float32)
        + b_ref[...]
    ).astype(o_ref.dtype)


def _lr_core_kernel(km_ref, qc_ref, gpk_ref, xv_ref, fw_ref, fb_ref, o_ref, acc_ref):
    """softmax(km*qc + gpk) over K2 -> weighted sum of x over K2 -> fused final 1x1 conv.

    km_ref : (Ck, K2, tL)     bf16 key map (torch-view layout, window index L on lanes)
    qc_ref : (Ck, 1,  tL)     f32  query 'center' column of the torch view
    gpk_ref: (Ck, K2, 1)      f32  geometry prior
    xv_ref : (m, Ck, K2, tL)  bf16 unfolded input, group axis leading
    fw_ref : (C, C)           bf16 final 1x1 conv weight
    fb_ref : (C, 1)           f32  final 1x1 conv bias
    o_ref  : (C, tL)          f32  layer output tile (lane-dense store)
    acc_ref: (C, tL)          f32  VMEM scratch holding pre_output for the MXU epilogue
    """
    km = km_ref[...].astype(jnp.float32)
    qc = qc_ref[...]
    gpk = gpk_ref[...]

    logits = km * qc + gpk                           # (Ck, K2, tL), lane-dense VPU work
    mx = jnp.max(logits, axis=-2, keepdims=True)     # K2 reduction on sublanes (XLU)
    e = jnp.exp(logits - mx)                         # EUP
    s = jnp.sum(e, axis=-2, keepdims=True)
    r = pl.reciprocal(s, approx=True)                # EUP slot
    r = r * (2.0 - s * r)                            # one Newton step -> ~exact softmax
    wgt = e * r                                      # (Ck, K2, tL)

    m_groups, ck, k2, _ = xv_ref.shape
    # Accumulate over K2 (static unroll; m*k2 is small).  Live vregs stay ~Ck*tL per group
    # instead of a full (m, Ck, K2, tL) product -> no spills at larger lane tiles.
    for g in range(m_groups):
        acc = wgt[:, 0:1, :] * xv_ref[g, :, 0:1, :].astype(jnp.float32)
        for j in range(1, k2):
            acc = acc + wgt[:, j:j + 1, :] * xv_ref[g, :, j:j + 1, :].astype(jnp.float32)
        acc_ref[g * ck:(g + 1) * ck, :] = acc[:, 0, :]   # rows [g*Ck, (g+1)*Ck) of pre

    # Fused final 1x1 conv: (C, C) @ (C, tL) on the MXU, lane-dense f32 store.
    pre = acc_ref[...].astype(jnp.bfloat16)
    o_ref[...] = (
        jnp.dot(fw_ref[...], pre, preferred_element_type=jnp.float32) + fb_ref[...]
    ).astype(o_ref.dtype)


# --------------------------------------------------------------------------------------
# Wrappers
# --------------------------------------------------------------------------------------

def conv1x1(x_nchw, weight, bias, *, max_lane_tile=4096):
    """Pointwise conv on NCHW input, computed per batch as W @ X with H*W on output lanes.

    weight: (Cout, Cin), bias: (Cout,).  No NHWC transposes; bf16 MXU operands, f32 output.
    """
    b, cin, h, w = x_nchw.shape
    cout = weight.shape[0]
    n = h * w
    tn = n if n <= max_lane_tile else max_lane_tile          # 4096 is 128-aligned
    x3 = x_nchw.reshape(b, cin, n).astype(jnp.bfloat16)      # free reshape of NCHW
    out = pl.pallas_call(
        _conv1x1_kernel,
        out_shape=jax.ShapeDtypeStruct((b, cout, n), jnp.float32),
        grid=(b, pl.cdiv(n, tn)),                            # edge block may be partial
        in_specs=[
            pl.BlockSpec((None, cin, tn), lambda i, j: (i, 0, j)),
            pl.BlockSpec((cout, cin), lambda i, j: (0, 0)),
            pl.BlockSpec((cout, 1), lambda i, j: (0, 0)),
        ],
        out_specs=pl.BlockSpec((None, cout, tn), lambda i, j: (i, 0, j)),
        compiler_params=pltpu.CompilerParams(
            dimension_semantics=("parallel", "parallel")),
    )(x3, weight.astype(jnp.bfloat16), bias.reshape(cout, 1).astype(jnp.float32))
    return out.reshape(b, cout, h, w)


def geometry_prior(position, w1, b1, w2, b2, k):
    """position: (1, 2, k, k) -> (Cgp, k*k).  Tiny: plain jnp (kernel launch > math)."""
    k2 = k * k
    pos2 = position.reshape(2, k2).T                         # rows indexed by ki*k + kj
    h = jnp.maximum(pos2 @ w1.T + b1, 0.0)
    g = h @ w2.T + b2                                        # (k2, Cgp)
    return g.T                                               # (Cgp, k2)


def _shifted_slices(a, k, padding, stride, h_out, w_out):
    """For kk = ki*k + kj, yields the (B, C, h_out, w_out) strided slice == Unfold column block kk."""
    if padding > 0:
        a = jnp.pad(a, ((0, 0), (0, 0), (padding, padding), (padding, padding)))
    for ki in range(k):
        for kj in range(k):
            yield a[:, :, ki:ki + (h_out - 1) * stride + 1:stride,
                          kj:kj + (w_out - 1) * stride + 1:stride]


def unfold_view_t(a, k, padding, stride, h_out, w_out):
    """unfold(a).view(B, C, L, k2).transpose(-1, -2) -> (B, C, k2, L), L on the last (lane) axis.

    Reproduces torch's contiguous-view reinterpretation exactly, without materializing the
    (B, C*k2, L) Unfold output.  Requires k2 | L.
    """
    b, c = a.shape[:2]
    k2 = k * k
    L = h_out * w_out
    M = L // k2
    blocks = []
    for sl in _shifted_slices(a, k, padding, stride, h_out, w_out):
        blocks.append(sl.reshape(b, c, M, k2).transpose(0, 1, 3, 2))   # (B, C, k2, M)
    return jnp.concatenate(blocks, axis=-1)                            # (B, C, k2, L)


def query_center(qm, k, padding, stride, h_out, w_out):
    """qc[b, c, l] == unfold(qm).view(B, Ck, L, k2)[b, c, l, k2 // 2], without unfolding qm."""
    b, c = qm.shape[:2]
    k2 = k * k
    L = h_out * w_out
    cols = []
    for sl in _shifted_slices(qm, k, padding, stride, h_out, w_out):
        cols.append(sl.reshape(b, c, L)[:, :, k2 // 2::k2])            # (B, Ck, M)
    return jnp.concatenate(cols, axis=-1)                              # (B, Ck, L)


def _pick_l_tile(L, bytes_per_l, budget=6 << 20):
    """Largest lane tile (multiple of 128, dividing L) whose pipelined VMEM footprint fits a
    conservative budget (safe under v5e's 16 MiB default scoped VMEM and v7x's 64 MiB/TC)."""
    if L % 128 != 0:
        return L                     # full-extent block is the only legal choice
    for t in (512, 256, 128):
        if L % t == 0 and t * bytes_per_l <= budget:
            return t
    return 128


def lr_core(km_t, qc, gpk, x_t, fw, fb):
    """km_t:(B,Ck,k2,L) bf16; qc:(B,Ck,1,L) f32; gpk:(Ck,k2,1) f32; x_t:(B,m,Ck,k2,L) bf16;
    fw:(C,C) bf16; fb:(C,1) f32  ->  (B, C, L) f32 with the final 1x1 conv already applied."""
    b, ck, k2, L = km_t.shape
    m = x_t.shape[1]
    c = fw.shape[0]
    # Per-L-element bytes: double-buffered (x2) tiled inputs + output, plus the f32 scratch.
    bytes_per_l = 2 * (ck * k2 * 2 + ck * 4 + m * ck * k2 * 2 + c * 4) + c * 4
    tl = _pick_l_tile(L, bytes_per_l)
    return pl.pallas_call(
        _lr_core_kernel,
        out_shape=jax.ShapeDtypeStruct((b, c, L), jnp.float32),
        grid=(b, L // tl),
        in_specs=[
            pl.BlockSpec((None, ck, k2, tl), lambda i, j: (i, 0, 0, j)),
            pl.BlockSpec((None, ck, 1, tl), lambda i, j: (i, 0, 0, j)),
            pl.BlockSpec((ck, k2, 1), lambda i, j: (0, 0, 0)),
            pl.BlockSpec((None, m, ck, k2, tl), lambda i, j: (i, 0, 0, 0, j)),
            pl.BlockSpec((c, c), lambda i, j: (0, 0)),
            pl.BlockSpec((c, 1), lambda i, j: (0, 0)),
        ],
        out_specs=pl.BlockSpec((None, c, tl), lambda i, j: (i, 0, j)),
        scratch_shapes=[pltpu.VMEM((c, tl), jnp.float32)],
        compiler_params=pltpu.CompilerParams(
            dimension_semantics=("parallel", "parallel")),
    )(km_t, qc, gpk, x_t, fw, fb)


def local_relational_layer(x, params, *, channels, k, stride, m, padding):
    b, c, h, w = x.shape
    assert c == channels
    ck = c // k                      # kmap/qmap output channels (torch passes k as divisor)
    assert ck == c // m, "torch combine_prior broadcast requires C//k == C//m"
    k2 = k * k

    h_out = (h + 2 * padding - (k - 1) - 1) // stride + 1
    w_out = (w + 2 * padding - (k - 1) - 1) // stride + 1
    L = h_out * w_out
    assert L % k2 == 0, "optimized layout requires k*k to divide h_out*w_out"

    # geometry prior, precomputed in the (Ck, k2, 1) layout the kernel consumes
    gpk = geometry_prior(params["position"], params["gp_w1"], params["gp_b1"],
                         params["gp_w2"], params["gp_b2"], k)[:, :, None]

    # key / query maps: one fused, lane-dense, bf16 1x1-conv matmul over x
    kq_w = jnp.concatenate([params["k_w"], params["q_w"]], axis=0)
    kq_b = jnp.concatenate([params["k_b"], params["q_b"]], axis=0)
    kq = conv1x1(x, kq_w, kq_b)                                      # (B, 2*Ck, H, W) f32
    km, qm = kq[:, :ck], kq[:, ck:]

    # TODO(synk): fully fuse the unfold into the core kernel (per-batch VMEM residency +
    # in-kernel (h,w)->(M,k2) relayout of the torch flat-view) to remove the remaining k^2
    # HBM staging; interim mitigation: stage the k^2-inflated operands in bf16.
    km_t = unfold_view_t(km, k, padding, stride, h_out, w_out).astype(jnp.bfloat16)
    x_t = unfold_view_t(x, k, padding, stride, h_out, w_out).astype(jnp.bfloat16)
    x_t = x_t.reshape(b, m, c // m, k2, L)                           # group axis leading
    qc = query_center(qm, k, padding, stride, h_out, w_out)[:, :, None, :]   # (B, Ck, 1, L)

    # softmax(appearance + geometry), weighted sum over K2, fused final 1x1 conv
    out = lr_core(km_t, qc, gpk, x_t,
                  params["f_w"].astype(jnp.bfloat16),
                  params["f_b"].reshape(c, 1).astype(jnp.float32))   # (B, C, L)
    return out.reshape(b, c, h_out, w_out)


def init_params(key, channels, k, m):
    ck = channels // k
    cg = channels // m
    c1 = int(0.5 * cg)
    ks = jax.random.split(key, 11)
    s = 0.1
    return {
        "k_w": s * jax.random.normal(ks[0], (ck, channels), jnp.float32),
        "k_b": s * jax.random.normal(ks[1], (ck,), jnp.float32),
        "q_w": s * jax.random.normal(ks[2], (ck, channels), jnp.float32),
        "q_b": s * jax.random.normal(ks[3], (ck,), jnp.float32),
        "position": jax.random.uniform(ks[4], (1, 2, k, k), jnp.float32, -1.0, 1.0),
        "gp_w1": s * jax.random.normal(ks[5], (c1, 2), jnp.float32),
        "gp_b1": s * jax.random.normal(ks[6], (c1,), jnp.float32),
        "gp_w2": s * jax.random.normal(ks[7], (cg, c1), jnp.float32),
        "gp_b2": s * jax.random.normal(ks[8], (cg,), jnp.float32),
        "f_w": s * jax.random.normal(ks[9], (channels, channels), jnp.float32),
        "f_b": s * jax.random.normal(ks[10], (channels,), jnp.float32),
    }


if __name__ == "__main__":
    # Shapes chosen so the reference PyTorch forward actually runs:
    # C=16, k=m=4, H=W=19, stride=1, pad=0 -> h_out=w_out=16, L=256, C//k == C//m, k*k | L.
    B, C, H, W = 2, 16, 19, 19
    k, m, stride, padding = 4, 4, 1, 0

    root = jax.random.PRNGKey(0)
    kx, kp = jax.random.split(root)
    x = jax.random.normal(kx, (B, C, H, W), jnp.float32)
    params = init_params(kp, C, k, m)

    fwd = jax.jit(lambda xx, pp: local_relational_layer(
        xx, pp, channels=C, k=k, stride=stride, m=m, padding=padding))
    out = jax.block_until_ready(fwd(x, params))
    assert out.shape == (B, C, 16, 16), out.shape
    print("KERNEL_OK")
</pallas_src>

<mosaic_0001>
module attributes {stable_mosaic.version = 11 : i64} {
  func.func @_conv1x1_kernel(%arg0: i32, %arg1: i32, %arg2: memref<1x16x361xbf16, #tpu.memory_space<vmem>>, %arg3: memref<8x16xbf16, #tpu.memory_space<vmem>>, %arg4: memref<8x1xf32, #tpu.memory_space<vmem>>, %arg5: memref<1x8x361xf32, #tpu.memory_space<vmem>>) attributes {dimension_semantics = [#tpu.dimension_semantics<parallel>, #tpu.dimension_semantics<parallel>], iteration_bounds = array<i64: 2, 1>, scalar_prefetch = 0 : i64, scratch_operands = 0 : i64, tpu.core_type = #tpu.core_type<tc>, window_params = [{transform_indices = @transform_0, window_bounds = array<i64: 1, 16, 361>}, {pipeline_mode = #tpu.pipeline_mode<synchronous>, transform_indices = @transform_1, window_bounds = array<i64: 8, 16>}, {pipeline_mode = #tpu.pipeline_mode<synchronous>, transform_indices = @transform_2, window_bounds = array<i64: 8, 1>}, {transform_indices = @transform_3, window_bounds = array<i64: 1, 8, 361>}]} {
    %c0 = arith.constant 0 : index
    %c0_0 = arith.constant 0 : index
    %0 = vector.load %arg3[%c0, %c0_0] : memref<8x16xbf16, #tpu.memory_space<vmem>>, vector<8x16xbf16>
    %c0_1 = arith.constant 0 : index
    %c0_2 = arith.constant 0 : index
    %c0_3 = arith.constant 0 : index
    %1 = vector.load %arg2[%c0_1, %c0_2, %c0_3] : memref<1x16x361xbf16, #tpu.memory_space<vmem>>, vector<1x16x361xbf16>
    %2 = vector.shape_cast %1 : vector<1x16x361xbf16> to vector<16x361xbf16>
    %cst = arith.constant dense<0.000000e+00> : vector<8x361xf32>
    %3 = tpu.matmul %0, %2, %cst {dimension_numbers = #tpu.dot_dimension_numbers<[1], [0], [0], [1], [0, 0, 1, 1], [], []>} : vector<8x16xbf16>, vector<16x361xbf16>, vector<8x361xf32> -> vector<8x361xf32>
    %c0_4 = arith.constant 0 : index
    %c0_5 = arith.constant 0 : index
    %4 = vector.load %arg4[%c0_4, %c0_5] : memref<8x1xf32, #tpu.memory_space<vmem>>, vector<8x1xf32>
    %5 = vector.broadcast %4 : vector<8x1xf32> to vector<8x361xf32>
    %6 = arith.addf %3, %5 : vector<8x361xf32>
    %c0_6 = arith.constant 0 : index
    %c0_7 = arith.constant 0 : index
    %c0_8 = arith.constant 0 : index
    %7 = vector.load %arg5[%c0_6, %c0_7, %c0_8] : memref<1x8x361xf32, #tpu.memory_space<vmem>>, vector<1x8x361xf32>
    %8 = vector.shape_cast %7 : vector<1x8x361xf32> to vector<8x361xf32>
    %9 = vector.shape_cast %6 : vector<8x361xf32> to vector<1x8x361xf32>
    tpu.vector_store %arg5[%c0_6, %c0_7, %c0_8], %9 {strides = array<i32>} : memref<1x8x361xf32, #tpu.memory_space<vmem>>, vector<1x8x361xf32>,
    return
  }
  func.func @transform_0(%arg0: i32, %arg1: i32) -> (i32, i32, i32) {
    %c0_i32 = arith.constant 0 : i32
    %c0_i32_0 = arith.constant 0 : i32
    return %arg0, %c0_i32, %arg1 : i32, i32, i32
  }
  func.func @transform_1(%arg0: i32, %arg1: i32) -> (i32, i32) {
    %c0_i32 = arith.constant 0 : i32
    %c0_i32_0 = arith.constant 0 : i32
    %c0_i32_1 = arith.constant 0 : i32
    return %c0_i32, %c0_i32_0 : i32, i32
  }
  func.func @transform_2(%arg0: i32, %arg1: i32) -> (i32, i32) {
    %c0_i32 = arith.constant 0 : i32
    %c0_i32_0 = arith.constant 0 : i32
    %c0_i32_1 = arith.constant 0 : i32
    return %c0_i32, %c0_i32_0 : i32, i32
  }
  func.func @transform_3(%arg0: i32, %arg1: i32) -> (i32, i32, i32) {
    %c0_i32 = arith.constant 0 : i32
    %c0_i32_0 = arith.constant 0 : i32
    return %arg0, %c0_i32, %arg1 : i32, i32, i32
  }
}

module attributes {stable_mosaic.version = 11 : i64} {
  func.func @_lr_core_kernel(%arg0: i32, %arg1: i32, %arg2: memref<1x4x16x256xbf16, #tpu.memory_space<vmem>>, %arg3: memref<1x4x1x256xf32, #tpu.memory_space<vmem>>, %arg4: memref<4x16x1xf32, #tpu.memory_space<vmem>>, %arg5: memref<1x4x4x16x256xbf16, #tpu.memory_space<vmem>>, %arg6: memref<16x16xbf16, #tpu.memory_space<vmem>>, %arg7: memref<16x1xf32, #tpu.memory_space<vmem>>, %arg8: memref<1x16x256xf32, #tpu.memory_space<vmem>>, %arg9: memref<16x256xf32, #tpu.memory_space<vmem>>) attributes {dimension_semantics = [#tpu.dimension_semantics<parallel>, #tpu.dimension_semantics<parallel>], iteration_bounds = array<i64: 2, 1>, scalar_prefetch = 0 : i64, scratch_operands = 1 : i64, tpu.core_type = #tpu.core_type<tc>, window_params = [{transform_indices = @transform_0, window_bounds = array<i64: 1, 4, 16, 256>}, {transform_indices = @transform_1, window_bounds = array<i64: 1, 4, 1, 256>}, {pipeline_mode = #tpu.pipeline_mode<synchronous>, transform_indices = @transform_2, window_bounds = array<i64: 4, 16, 1>}, {transform_indices = @transform_3, window_bounds = array<i64: 1, 4, 4, 16, 256>}, {pipeline_mode = #tpu.pipeline_mode<synchronous>, transform_indices = @transform_4, window_bounds = array<i64: 16, 16>}, {pipeline_mode = #tpu.pipeline_mode<synchronous>, transform_indices = @transform_5, window_bounds = array<i64: 16, 1>}, {transform_indices = @transform_6, window_bounds = array<i64: 1, 16, 256>}]} {
    %c0 = arith.constant 0 : index
    %c0_0 = arith.constant 0 : index
    %c0_1 = arith.constant 0 : index
    %c0_2 = arith.constant 0 : index
    %0 = vector.load %arg2[%c0, %c0_0, %c0_1, %c0_2] : memref<1x4x16x256xbf16, #tpu.memory_space<vmem>>, vector<1x4x16x256xbf16>
    %1 = vector.shape_cast %0 : vector<1x4x16x256xbf16> to vector<4x16x256xbf16>
    %2 = arith.extf %1 : vector<4x16x256xbf16> to vector<4x16x256xf32>
    %c0_3 = arith.constant 0 : index
    %c0_4 = arith.constant 0 : index
    %c0_5 = arith.constant 0 : index
    %c0_6 = arith.constant 0 : index
    %3 = vector.load %arg3[%c0_3, %c0_4, %c0_5, %c0_6] : memref<1x4x1x256xf32, #tpu.memory_space<vmem>>, vector<1x4x1x256xf32>
    %4 = vector.shape_cast %3 : vector<1x4x1x256xf32> to vector<4x1x256xf32>
    %c0_7 = arith.constant 0 : index
    %c0_8 = arith.constant 0 : index
    %c0_9 = arith.constant 0 : index
    %5 = vector.load %arg4[%c0_7, %c0_8, %c0_9] : memref<4x16x1xf32, #tpu.memory_space<vmem>>, vector<4x16x1xf32>
    %6 = vector.broadcast %4 : vector<4x1x256xf32> to vector<4x16x256xf32>
    %7 = arith.mulf %2, %6 : vector<4x16x256xf32>
    %8 = vector.broadcast %5 : vector<4x16x1xf32> to vector<4x16x256xf32>
    %9 = arith.addf %7, %8 : vector<4x16x256xf32>
    %cst = arith.constant dense<0xFF800000> : vector<4x256xf32>
    %10 = vector.multi_reduction <maximumf>, %9, %cst [1] : vector<4x16x256xf32> to vector<4x256xf32>
    %11 = vector.shape_cast %10 : vector<4x256xf32> to vector<4x1x256xf32>
    %12 = vector.broadcast %11 : vector<4x1x256xf32> to vector<4x16x256xf32>
    %13 = arith.subf %9, %12 : vector<4x16x256xf32>
    %14 = math.exp %13 : vector<4x16x256xf32>
    %cst_10 = arith.constant dense<0.000000e+00> : vector<4x256xf32>
    %15 = vector.multi_reduction <add>, %14, %cst_10 [1] : vector<4x16x256xf32> to vector<4x256xf32>
    %16 = vector.shape_cast %15 : vector<4x256xf32> to vector<4x1x256xf32>
    %17 = tpu.reciprocal %16 {approx = true} : vector<4x1x256xf32> -> vector<4x1x256xf32>
    %18 = arith.mulf %16, %17 : vector<4x1x256xf32>
    %cst_11 = arith.constant 2.000000e+00 : f32
    %19 = vector.broadcast %cst_11 : f32 to vector<4x1x256xf32>
    %20 = arith.subf %19, %18 : vector<4x1x256xf32>
    %21 = arith.mulf %17, %20 : vector<4x1x256xf32>
    %22 = vector.broadcast %21 : vector<4x1x256xf32> to vector<4x16x256xf32>
    %23 = arith.mulf %14, %22 : vector<4x16x256xf32>
    %24 = vector.extract_strided_slice %23 {offsets = [0, 0, 0], sizes = [4, 1, 256], strides = [1, 1, 1]} : vector<4x16x256xf32> to vector<4x1x256xf32>
    %c0_12 = arith.constant 0 : index
    %c0_13 = arith.constant 0 : index
    %c0_14 = arith.constant 0 : index
    %c0_15 = arith.constant 0 : index
    %c0_16 = arith.constant 0 : index
    %25 = vector.load %arg5[%c0_12, %c0_13, %c0_14, %c0_15, %c0_16] : memref<1x4x4x16x256xbf16, #tpu.memory_space<vmem>>, vector<1x1x4x1x256xbf16>
    %26 = vector.shape_cast %25 : vector<1x1x4x1x256xbf16> to vector<4x1x256xbf16>
    %27 = arith.extf %26 : vector<4x1x256xbf16> to vector<4x1x256xf32>
    %28 = arith.mulf %24, %27 : vector<4x1x256xf32>
    %29 = vector.extract_strided_slice %23 {offsets = [0, 1, 0], sizes = [4, 1, 256], strides = [1, 1, 1]} : vector<4x16x256xf32> to vector<4x1x256xf32>
    %c0_17 = arith.constant 0 : index
    %c0_18 = arith.constant 0 : index
    %c0_19 = arith.constant 0 : index
    %c1 = arith.constant 1 : index
    %c0_20 = arith.constant 0 : index
    %30 = vector.load %arg5[%c0_17, %c0_18, %c0_19, %c1, %c0_20] : memref<1x4x4x16x256xbf16, #tpu.memory_space<vmem>>, vector<1x1x4x1x256xbf16>
    %31 = vector.shape_cast %30 : vector<1x1x4x1x256xbf16> to vector<4x1x256xbf16>
    %32 = arith.extf %31 : vector<4x1x256xbf16> to vector<4x1x256xf32>
    %33 = arith.mulf %29, %32 : vector<4x1x256xf32>
    %34 = arith.addf %28, %33 : vector<4x1x256xf32>
    %35 = vector.extract_strided_slice %23 {offsets = [0, 2, 0], sizes = [4, 1, 256], strides = [1, 1, 1]} : vector<4x16x256xf32> to vector<4x1x256xf32>
    %c0_21 = arith.constant 0 : index
    %c0_22 = arith.constant 0 : index
    %c0_23 = arith.constant 0 : index
    %c2 = arith.constant 2 : index
    %c0_24 = arith.constant 0 : index
    %36 = vector.load %arg5[%c0_21, %c0_22, %c0_23, %c2, %c0_24] : memref<1x4x4x16x256xbf16, #tpu.memory_space<vmem>>, vector<1x1x4x1x256xbf16>
    %37 = vector.shape_cast %36 : vector<1x1x4x1x256xbf16> to vector<4x1x256xbf16>
    %38 = arith.extf %37 : vector<4x1x256xbf16> to vector<4x1x256xf32>
    %39 = arith.mulf %35, %38 : vector<4x1x256xf32>
    %40 = arith.addf %34, %39 : vector<4x1x256xf32>
    %41 = vector.extract_strided_slice %23 {offsets = [0, 3, 0], sizes = [4, 1, 256], strides = [1, 1, 1]} : vector<4x16x256xf32> to vector<4x1x256xf32>
    %c0_25 = arith.constant 0 : index
    %c0_26 = arith.constant 0 : index
    %c0_27 = arith.constant 0 : index
    %c3 = arith.constant 3 : index
    %c0_28 = arith.constant 0 : index
    %42 = vector.load %arg5[%c0_25, %c0_26, %c0_27, %c3, %c0_28] : memref<1x4x4x16x256xbf16, #tpu.memory_space<vmem>>, vector<1x1x4x1x256xbf16>
    %43 = vector.shape_cast %42 : vector<1x1x4x1x256xbf16> to vector<4x1x256xbf16>
    %44 = arith.extf %43 : vector<4x1x256xbf16> to vector<4x1x256xf32>
    %45 = arith.mulf %41, %44 : vector<4x1x256xf32>
    %46 = arith.addf %40, %45 : vector<4x1x256xf32>
    %47 = vector.extract_strided_slice %23 {offsets = [0, 4, 0], sizes = [4, 1, 256], strides = [1, 1, 1]} : vector<4x16x256xf32> to vector<4x1x256xf32>
    %c0_29 = arith.constant 0 : index
    %c0_30 = arith.constant 0 : index
    %c0_31 = arith.constant 0 : index
    %c4 = arith.constant 4 : index
    %c0_32 = arith.constant 0 : index
    %48 = vector.load %arg5[%c0_29, %c0_30, %c0_31, %c4, %c0_32] : memref<1x4x4x16x256xbf16, #tpu.memory_space<vmem>>, vector<1x1x4x1x256xbf16>
    %49 = vector.shape_cast %48 : vector<1x1x4x1x256xbf16> to vector<4x1x256xbf16>
    %50 = arith.extf %49 : vector<4x1x256xbf16> to vector<4x1x256xf32>
    %51 = arith.mulf %47, %50 : vector<4x1x256xf32>
    %52 = arith.addf %46, %51 : vector<4x1x256xf32>
    %53 = vector.extract_strided_slice %23 {offsets = [0, 5, 0], sizes = [4, 1, 256], strides = [1, 1, 1]} : vector<4x16x256xf32> to vector<4x1x256xf32>
    %c0_33 = arith.constant 0 : index
    %c0_34 = arith.constant 0 : index
    %c0_35 = arith.constant 0 : index
    %c5 = arith.constant 5 : index
    %c0_36 = arith.constant 0 : index
    %54 = vector.load %arg5[%c0_33, %c0_34, %c0_35, %c5, %c0_36] : memref<1x4x4x16x256xbf16, #tpu.memory_space<vmem>>, vector<1x1x4x1x256xbf16>
    %55 = vector.shape_cast %54 : vector<1x1x4x1x256xbf16> to vector<4x1x256xbf16>
    %56 = arith.extf %55 : vector<4x1x256xbf16> to vector<4x1x256xf32>
    %57 = arith.mulf %53, %56 : vector<4x1x256xf32>
    %58 = arith.addf %52, %57 : vector<4x1x256xf32>
    %59 = vector.extract_strided_slice %23 {offsets = [0, 6, 0], sizes = [4, 1, 256], strides = [1, 1, 1]} : vector<4x16x256xf32> to vector<4x1x256xf32>
    %c0_37 = arith.constant 0 : index
    %c0_38 = arith.constant 0 : index
    %c0_39 = arith.constant 0 : index
    %c6 = arith.constant 6 : index
    %c0_40 = arith.constant 0 : index
    %60 = vector.load %arg5[%c0_37, %c0_38, %c0_39, %c6, %c0_40] : memref<1x4x4x16x256xbf16, #tpu.memory_space<vmem>>, vector<1x1x4x1x256xbf16>
    %61 = vector.shape_cast %60 : vector<1x1x4x1x256xbf16> to vector<4x1x256xbf16>
    %62 = arith.extf %61 : vector<4x1x256xbf16> to vector<4x1x256xf32>
    %63 = arith.mulf %59, %62 : vector<4x1x256xf32>
    %64 = arith.addf %58, %63 : vector<4x1x256xf32>
    %65 = vector.extract_strided_slice %23 {offsets = [0, 7, 0], sizes = [4, 1, 256], strides = [1, 1, 1]} : vector<4x16x256xf32> to vector<4x1x256xf32>
    %c0_41 = arith.constant 0 : index
    %c0_42 = arith.constant 0 : index
    %c0_43 = arith.constant 0 : index
    %c7 = arith.constant 7 : index
    %c0_44 = arith.constant 0 : index
    %66 = vector.load %arg5[%c0_41, %c0_42, %c0_43, %c7, %c0_44] : memref<1x4x4x16x256xbf16, #tpu.memory_space<vmem>>, vector<1x1x4x1x256xbf16>
    %67 = vector.shape_cast %66 : vector<1x1x4x1x256xbf16> to vector<4x1x256xbf16>
    %68 = arith.extf %67 : vector<4x1x256xbf16> to vector<4x1x256xf32>
    %69 = arith.mulf %65, %68 : vector<4x1x256xf32>
    %70 = arith.addf %64, %69 : vector<4x1x256xf32>
    %71 = vector.extract_strided_slice %23 {offsets = [0, 8, 0], sizes = [4, 1, 256], strides = [1, 1, 1]} : vector<4x16x256xf32> to vector<4x1x256xf32>
    %c0_45 = arith.constant 0 : index
    %c0_46 = arith.constant 0 : index
    %c0_47 = arith.constant 0 : index
    %c8 = arith.constant 8 : index
    %c0_48 = arith.constant 0 : index
    %72 = vector.load %arg5[%c0_45, %c0_46, %c0_47, %c8, %c0_48] : memref<1x4x4x16x256xbf16, #tpu.memory_space<vmem>>, vector<1x1x4x1x256xbf16>
    %73 = vector.shape_cast %72 : vector<1x1x4x1x256xbf16> to vector<4x1x256xbf16>
    %74 = arith.extf %73 : vector<4x1x256xbf16> to vector<4x1x256xf32>
    %75 = arith.mulf %71, %74 : vector<4x1x256xf32>
    %76 = arith.addf %70, %75 : vector<4x1x256xf32>
    %77 = vector.extract_strided_slice %23 {offsets = [0, 9, 0], sizes = [4, 1, 256], strides = [1, 1, 1]} : vector<4x16x256xf32> to vector<4x1x256xf32>
    %c0_49 = arith.constant 0 : index
    %c0_50 = arith.constant 0 : index
    %c0_51 = arith.constant 0 : index
    %c9 = arith.constant 9 : index
    %c0_52 = arith.constant 0 : index
    %78 = vector.load %arg5[%c0_49, %c0_50, %c0_51, %c9, %c0_52] : memref<1x4x4x16x256xbf16, #tpu.memory_space<vmem>>, vector<1x1x4x1x256xbf16>
    %79 = vector.shape_cast %78 : vector<1x1x4x1x256xbf16> to vector<4x1x256xbf16>
    %80 = arith.extf %79 : vector<4x1x256xbf16> to vector<4x1x256xf32>
    %81 = arith.mulf %77, %80 : vector<4x1x256xf32>
    %82 = arith.addf %76, %81 : vector<4x1x256xf32>
    %83 = vector.extract_strided_slice %23 {offsets = [0, 10, 0], sizes = [4, 1, 256], strides = [1, 1, 1]} : vector<4x16x256xf32> to vector<4x1x256xf32>
    %c0_53 = arith.constant 0 : index
    %c0_54 = arith.constant 0 : index
    %c0_55 = arith.constant 0 : index
    %c10 = arith.constant 10 : index
    %c0_56 = arith.constant 0 : index
    %84 = vector.load %arg5[%c0_53, %c0_54, %c0_55, %c10, %c0_56] : memref<1x4x4x16x256xbf16, #tpu.memory_space<vmem>>, vector<1x1x4x1x256xbf16>
    %85 = vector.shape_cast %84 : vector<1x1x4x1x256xbf16> to vector<4x1x256xbf16>
    %86 = arith.extf %85 : vector<4x1x256xbf16> to vector<4x1x256xf32>
    %87 = arith.mulf %83, %86 : vector<4x1x256xf32>
    %88 = arith.addf %82, %87 : vector<4x1x256xf32>
    %89 = vector.extract_strided_slice %23 {offsets = [0, 11, 0], sizes = [4, 1, 256], strides = [1, 1, 1]} : vector<4x16x256xf32> to vector<4x1x256xf32>
    %c0_57 = arith.constant 0 : index
    %c0_58 = arith.constant 0 : index
    %c0_59 = arith.constant 0 : index
    %c11 = arith.constant 11 : index
    %c0_60 = arith.constant 0 : index
    %90 = vector.load %arg5[%c0_57, %c0_58, %c0_59, %c11, %c0_60] : memref<1x4x4x16x256xbf16, #tpu.memory_space<vmem>>, vector<1x1x4x1x256xbf16>
    %91 = vector.shape_cast %90 : vector<1x1x4x1x256xbf16> to vector<4x1x256xbf16>
    %92 = arith.extf %91 : vector<4x1x256xbf16> to vector<4x1x256xf32>
    %93 = arith.mulf %89, %92 : vector<4x1x256xf32>
    %94 = arith.addf %88, %93 : vector<4x1x256xf32>
    %95 = vector.extract_strided_slice %23 {offsets = [0, 12, 0], sizes = [4, 1, 256], strides = [1, 1, 1]} : vector<4x16x256xf32> to vector<4x1x256xf32>
    %c0_61 = arith.constant 0 : index
    %c0_62 = arith.constant 0 : index
    %c0_63 = arith.constant 0 : index
    %c12 = arith.constant 12 : index
    %c0_64 = arith.constant 0 : index
    %96 = vector.load %arg5[%c0_61, %c0_62, %c0_63, %c12, %c0_64] : memref<1x4x4x16x256xbf16, #tpu.memory_space<vmem>>, vector<1x1x4x1x256xbf16>
    %97 = vector.shape_cast %96 : vector<1x1x4x1x256xbf16> to vector<4x1x256xbf16>
    %98 = arith.extf %97 : vector<4x1x256xbf16> to vector<4x1x256xf32>
    %99 = arith.mulf %95, %98 : vector<4x1x256xf32>
    %100 = arith.addf %94, %99 : vector<4x1x256xf32>
    %101 = vector.extract_strided_slice %23 {offsets = [0, 13, 0], sizes = [4, 1, 256], strides = [1, 1, 1]} : vector<4x16x256xf32> to vector<4x1x256xf32>
    %c0_65 = arith.constant 0 : index
    %c0_66 = arith.constant 0 : index
    %c0_67 = arith.constant 0 : index
    %c13 = arith.constant 13 : index
    %c0_68 = arith.constant 0 : index
    %102 = vector.load %arg5[%c0_65, %c0_66, %c0_67, %c13, %c0_68] : memref<1x4x4x16x256xbf16, #tpu.memory_space<vmem>>, vector<1x1x4x1x256xbf16>
    %103 = vector.shape_cast %102 : vector<1x1x4x1x256xbf16> to vector<4x1x256xbf16>
    %104 = arith.extf %103 : vector<4x1x256xbf16> to vector<4x1x256xf32>
    %105 = arith.mulf %101, %104 : vector<4x1x256xf32>
    %106 = arith.addf %100, %105 : vector<4x1x256xf32>
    %107 = vector.extract_strided_slice %23 {offsets = [0, 14, 0], sizes = [4, 1, 256], strides = [1, 1, 1]} : vector<4x16x256xf32> to vector<4x1x256xf32>
    %c0_69 = arith.constant 0 : index
    %c0_70 = arith.constant 0 : index
    %c0_71 = arith.constant 0 : index
    %c14 = arith.constant 14 : index
    %c0_72 = arith.constant 0 : index
    %108 = vector.load %arg5[%c0_69, %c0_70, %c0_71, %c14, %c0_72] : memref<1x4x4x16x256xbf16, #tpu.memory_space<vmem>>, vector<1x1x4x1x256xbf16>
    %109 = vector.shape_cast %108 : vector<1x1x4x1x256xbf16> to vector<4x1x256xbf16>
    %110 = arith.extf %109 : vector<4x1x256xbf16> to vector<4x1x256xf32>
    %111 = arith.mulf %107, %110 : vector<4x1x256xf32>
    %112 = arith.addf %106, %111 : vector<4x1x256xf32>
    %113 = vector.extract_strided_slice %23 {offsets = [0, 15, 0], sizes = [4, 1, 256], strides = [1, 1, 1]} : vector<4x16x256xf32> to vector<4x1x256xf32>
    %c0_73 = arith.constant 0 : index
    %c0_74 = arith.constant 0 : index
    %c0_75 = arith.constant 0 : index
    %c15 = arith.constant 15 : index
    %c0_76 = arith.constant 0 : index
    %114 = vector.load %arg5[%c0_73, %c0_74, %c0_75, %c15, %c0_76] : memref<1x4x4x16x256xbf16, #tpu.memory_space<vmem>>, vector<1x1x4x1x256xbf16>
    %115 = vector.shape_cast %114 : vector<1x1x4x1x256xbf16> to vector<4x1x256xbf16>
    %116 = arith.extf %115 : vector<4x1x256xbf16> to vector<4x1x256xf32>
    %117 = arith.mulf %113, %116 : vector<4x1x256xf32>
    %118 = arith.addf %112, %117 : vector<4x1x256xf32>
    %119 = vector.shape_cast %118 : vector<4x1x256xf32> to vector<4x256xf32>
    %c0_77 = arith.constant 0 : index
    %c0_78 = arith.constant 0 : index
    %120 = vector.load %arg9[%c0_77, %c0_78] : memref<16x256xf32, #tpu.memory_space<vmem>>, vector<4x256xf32>
    tpu.vector_store %arg9[%c0_77, %c0_78], %119 {strides = array<i32>} : memref<16x256xf32, #tpu.memory_space<vmem>>, vector<4x256xf32>,
    %121 = vector.extract_strided_slice %23 {offsets = [0, 0, 0], sizes = [4, 1, 256], strides = [1, 1, 1]} : vector<4x16x256xf32> to vector<4x1x256xf32>
    %c0_79 = arith.constant 0 : index
    %c1_80 = arith.constant 1 : index
    %c0_81 = arith.constant 0 : index
    %c0_82 = arith.constant 0 : index
    %c0_83 = arith.constant 0 : index
    %122 = vector.load %arg5[%c0_79, %c1_80, %c0_81, %c0_82, %c0_83] : memref<1x4x4x16x256xbf16, #tpu.memory_space<vmem>>, vector<1x1x4x1x256xbf16>
    %123 = vector.shape_cast %122 : vector<1x1x4x1x256xbf16> to vector<4x1x256xbf16>
    %124 = arith.extf %123 : vector<4x1x256xbf16> to vector<4x1x256xf32>
    %125 = arith.mulf %121, %124 : vector<4x1x256xf32>
    %126 = vector.extract_strided_slice %23 {offsets = [0, 1, 0], sizes = [4, 1, 256], strides = [1, 1, 1]} : vector<4x16x256xf32> to vector<4x1x256xf32>
    %c0_84 = arith.constant 0 : index
    %c1_85 = arith.constant 1 : index
    %c0_86 = arith.constant 0 : index
    %c1_87 = arith.constant 1 : index
    %c0_88 = arith.constant 0 : index
    %127 = vector.load %arg5[%c0_84, %c1_85, %c0_86, %c1_87, %c0_88] : memref<1x4x4x16x256xbf16, #tpu.memory_space<vmem>>, vector<1x1x4x1x256xbf16>
    %128 = vector.shape_cast %127 : vector<1x1x4x1x256xbf16> to vector<4x1x256xbf16>
    %129 = arith.extf %128 : vector<4x1x256xbf16> to vector<4x1x256xf32>
    %130 = arith.mulf %126, %129 : vector<4x1x256xf32>
    %131 = arith.addf %125, %130 : vector<4x1x256xf32>
    %132 = vector.extract_strided_slice %23 {offsets = [0, 2, 0], sizes = [4, 1, 256], strides = [1, 1, 1]} : vector<4x16x256xf32> to vector<4x1x256xf32>
    %c0_89 = arith.constant 0 : index
    %c1_90 = arith.constant 1 : index
    %c0_91 = arith.constant 0 : index
    %c2_92 = arith.constant 2 : index
    %c0_93 = arith.constant 0 : index
    %133 = vector.load %arg5[%c0_89, %c1_90, %c0_91, %c2_92, %c0_93] : memref<1x4x4x16x256xbf16, #tpu.memory_space<vmem>>, vector<1x1x4x1x256xbf16>
    %134 = vector.shape_cast %133 : vector<1x1x4x1x256xbf16> to vector<4x1x256xbf16>
    %135 = arith.extf %134 : vector<4x1x256xbf16> to vector<4x1x256xf32>
    %136 = arith.mulf %132, %135 : vector<4x1x256xf32>
    %137 = arith.addf %131, %136 : vector<4x1x256xf32>
    %138 = vector.extract_strided_slice %23 {offsets = [0, 3, 0], sizes = [4, 1, 256], strides = [1, 1, 1]} : vector<4x16x256xf32> to vector<4x1x256xf32>
    %c0_94 = arith.constant 0 : index
    %c1_95 = arith.constant 1 : index
    %c0_96 = arith.constant 0 : index
    %c3_97 = arith.constant 3 : index
    %c0_98 = arith.constant 0 : index
    %139 = vector.load %arg5[%c0_94, %c1_95, %c0_96, %c3_97, %c0_98] : memref<1x4x4x16x256xbf16, #tpu.memory_space<vmem>>, vector<1x1x4x1x256xbf16>
    %140 = vector.shape_cast %139 : vector<1x1x4x1x256xbf16> to vector<4x1x256xbf16>
    %141 = arith.extf %140 : vector<4x1x256xbf16> to vector<4x1x256xf32>
    %142 = arith.mulf %138, %141 : vector<4x1x256xf32>
    %143 = arith.addf %137, %142 : vector<4x1x256xf32>
    %144 = vector.extract_strided_slice %23 {offsets = [0, 4, 0], sizes = [4, 1, 256], strides = [1, 1, 1]} : vector<4x16x256xf32> to vector<4x1x256xf32>
    %c0_99 = arith.constant 0 : index
    %c1_100 = arith.constant 1 : index
    %c0_101 = arith.constant 0 : index
    %c4_102 = arith.constant 4 : index
    %c0_103 = arith.constant 0 : index
    %145 = vector.load %arg5[%c0_99, %c1_100, %c0_101, %c4_102, %c0_103] : memref<1x4x4x16x256xbf16, #tpu.memory_space<vmem>>, vector<1x1x4x1x256xbf16>
    %146 = vector.shape_cast %145 : vector<1x1x4x1x256xbf16> to vector<4x1x256xbf16>
    %147 = arith.extf %146 : vector<4x1x256xbf16> to vector<4x1x256xf32>
    %148 = arith.mulf %144, %147 : vector<4x1x256xf32>
    %149 = arith.addf %143, %148 : vector<4x1x256xf32>
    %150 = vector.extract_strided_slice %23 {offsets = [0, 5, 0], sizes = [4, 1, 256], strides = [1, 1, 1]} : vector<4x16x256xf32> to vector<4x1x256xf32>
    %c0_104 = arith.constant 0 : index
    %c1_105 = arith.constant 1 : index
    %c0_106 = arith.constant 0 : index
    %c5_107 = arith.constant 5 : index
    %c0_108 = arith.constant 0 : index
    %151 = vector.load %arg5[%c0_104, %c1_105, %c0_106, %c5_107, %c0_108] : memref<1x4x4x16x256xbf16, #tpu.memory_space<vmem>>, vector<1x1x4x1x256xbf16>
    %152 = vector.shape_cast %151 : vector<1x1x4x1x256xbf16> to vector<4x1x256xbf16>
    %153 = arith.extf %152 : vector<4x1x256xbf16> to vector<4x1x256xf32>
    %154 = arith.mulf %150, %153 : vector<4x1x256xf32>
    %155 = arith.addf %149, %154 : vector<4x1x256xf32>
    %156 = vector.extract_strided_slice %23 {offsets = [0, 6, 0], sizes = [4, 1, 256], strides = [1, 1, 1]} : vector<4x16x256xf32> to vector<4x1x256xf32>
    %c0_109 = arith.constant 0 : index
    %c1_110 = arith.constant 1 : index
    %c0_111 = arith.constant 0 : index
    %c6_112 = arith.constant 6 : index
    %c0_113 = arith.constant 0 : index
    %157 = vector.load %arg5[%c0_109, %c1_110, %c0_111, %c6_112, %c0_113] : memref<1x4x4x16x256xbf16, #tpu.memory_space<vmem>>, vector<1x1x4x1x256xbf16>
    %158 = vector.shape_cast %157 : vector<1x1x4x1x256xbf16> to vector<4x1x256xbf16>
    %159 = arith.extf %158 : vector<4x1x256xbf16> to vector<4x1x256xf32>
    %160 = arith.mulf %156, %159 : vector<4x1x256xf32>
    %161 = arith.addf %155, %160 : vector<4x1x256xf32>
    %162 = vector.extract_strided_slice %23 {offsets = [0, 7, 0], sizes = [4, 1, 256], strides = [1, 1, 1]} : vector<4x16x256xf32> to vector<4x1x256xf32>
    %c0_114 = arith.constant 0 : index
    %c1_115 = arith.constant 1 : index
    %c0_116 = arith.constant 0 : index
    %c7_117 = arith.constant 7 : index
    %c0_118 = arith.constant 0 : index
    %163 = vector.load %arg5[%c0_114, %c1_115, %c0_116, %c7_117, %c0_118] : memref<1x4x4x16x256xbf16, #tpu.memory_space<vmem>>, vector<1x1x4x1x256xbf16>
    %164 = vector.shape_cast %163 : vector<1x1x4x1x256xbf16> to vector<4x1x256xbf16>
    %165 = arith.extf %164 : vector<4x1x256xbf16> to vector<4x1x256xf32>
    %166 = arith.mulf %162, %165 : vector<4x1x256xf32>
    %167 = arith.addf %161, %166 : vector<4x1x256xf32>
    %168 = vector.extract_strided_slice %23 {offsets = [0, 8, 0], sizes = [4, 1, 256], strides = [1, 1, 1]} : vector<4x16x256xf32> to vector<4x1x256xf32>
    %c0_119 = arith.constant 0 : index
    %c1_120 = arith.constant 1 : index
    %c0_121 = arith.constant 0 : index
    %c8_122 = arith.constant 8 : index
    %c0_123 = arith.constant 0 : index
    %169 = vector.load %arg5[%c0_119, %c1_120, %c0_121, %c8_122, %c0_123] : memref<1x4x4x16x256xbf16, #tpu.memory_space<vmem>>, vector<1x1x4x1x256xbf16>
    %170 = vector.shape_cast %169 : vector<1x1x4x1x256xbf16> to vector<4x1x256xbf16>
    %171 = arith.extf %170 : vector<4x1x256xbf16> to vector<4x1x256xf32>
    %172 = arith.mulf %168, %171 : vector<4x1x256xf32>
    %173 = arith.addf %167, %172 : vector<4x1x256xf32>
    %174 = vector.extract_strided_slice %23 {offsets = [0, 9, 0], sizes = [4, 1, 256], strides = [1, 1, 1]} : vector<4x16x256xf32> to vector<4x1x256xf32>
    %c0_124 = arith.constant 0 : index
    %c1_125 = arith.constant 1 : index
    %c0_126 = arith.constant 0 : index
    %c9_127 = arith.constant 9 : index
    %c0_128 = arith.constant 0 : index
    %175 = vector.load %arg5[%c0_124, %c1_125, %c0_126, %c9_127, %c0_128] : memref<1x4x4x16x256xbf16, #tpu.memory_space<vmem>>, vector<1x1x4x1x256xbf16>
    %176 = vector.shape_cast %175 : vector<1x1x4x1x256xbf16> to vector<4x1x256xbf16>
    %177 = arith.extf %176 : vector<4x1x256xbf16> to vector<4x1x256xf32>
    %178 = arith.mulf %174, %177 : vector<4x1x256xf32>
    %179 = arith.addf %173, %178 : vector<4x1x256xf32>
    %180 = vector.extract_strided_slice %23 {offsets = [0, 10, 0], sizes = [4, 1, 256], strides = [1, 1, 1]} : vector<4x16x256xf32> to vector<4x1x256xf32>
    %c0_129 = arith.constant 0 : index
    %c1_130 = arith.constant 1 : index
    %c0_131 = arith.constant 0 : index
    %c10_132 = arith.constant 10 : index
    %c0_133 = arith.constant 0 : index
    %181 = vector.load %arg5[%c0_129, %c1_130, %c0_131, %c10_132, %c0_133] : memref<1x4x4x16x256xbf16, #tpu.memory_space<vmem>>, vector<1x1x4x1x256xbf16>
    %182 = vector.shape_cast %181 : vector<1x1x4x1x256xbf16> to vector<4x1x256xbf16>
    %183 = arith.extf %182 : vector<4x1x256xbf16> to vector<4x1x256xf32>
    %184 = arith.mulf %180, %183 : vector<4x1x256xf32>
    %185 = arith.addf %179, %184 : vector<4x1x256xf32>
    %186 = vector.extract_strided_slice %23 {offsets = [0, 11, 0], sizes = [4, 1, 256], strides = [1, 1, 1]} : vector<4x16x256xf32> to vector<4x1x256xf32>
    %c0_134 = arith.constant 0 : index
    %c1_135 = arith.constant 1 : index
    %c0_136 = arith.constant 0 : index
    %c11_137 = arith.constant 11 : index
    %c0_138 = arith.constant 0 : index
    %187 = vector.load %arg5[%c0_134, %c1_135, %c0_136, %c11_137, %c0_138] : memref<1x4x4x16x256xbf16, #tpu.memory_space<vmem>>, vector<1x1x4x1x256xbf16>
    %188 = vector.shape_cast %187 : vector<1x1x4x1x256xbf16> to vector<4x1x256xbf16>
    %189 = arith.extf %188 : vector<4x1x256xbf16> to vector<4x1x256xf32>
    %190 = arith.mulf %186, %189 : vector<4x1x256xf32>
    %191 = arith.addf %185, %190 : vector<4x1x256xf32>
    %192 = vector.extract_strided_slice %23 {offsets = [0, 12, 0], sizes = [4, 1, 256], strides = [1, 1, 1]} : vector<4x16x256xf32> to vector<4x1x256xf32>
    %c0_139 = arith.constant 0 : index
    %c1_140 = arith.constant 1 : index
    %c0_141 = arith.constant 0 : index
    %c12_142 = arith.constant 12 : index
    %c0_143 = arith.constant 0 : index
    %193 = vector.load %arg5[%c0_139, %c1_140, %c0_141, %c12_142, %c0_143] : memref<1x4x4x16x256xbf16, #tpu.memory_space<vmem>>, vector<1x1x4x1x256xbf16>
    %194 = vector.shape_cast %193 : vector<1x1x4x1x256xbf16> to vector<4x1x256xbf16>
    %195 = arith.extf %194 : vector<4x1x256xbf16> to vector<4x1x256xf32>
    %196 = arith.mulf %192, %195 : vector<4x1x256xf32>
    %197 = arith.addf %191, %196 : vector<4x1x256xf32>
    %198 = vector.extract_strided_slice %23 {offsets = [0, 13, 0], sizes = [4, 1, 256], strides = [1, 1, 1]} : vector<4x16x256xf32> to vector<4x1x256xf32>
    %c0_144 = arith.constant 0 : index
    %c1_145 = arith.constant 1 : index
    %c0_146 = arith.constant 0 : index
    %c13_147 = arith.constant 13 : index
    %c0_148 = arith.constant 0 : index
    %199 = vector.load %arg5[%c0_144, %c1_145, %c0_146, %c13_147, %c0_148] : memref<1x4x4x16x256xbf16, #tpu.memory_space<vmem>>, vector<1x1x4x1x256xbf16>
    %200 = vector.shape_cast %199 : vector<1x1x4x1x256xbf16> to vector<4x1x256xbf16>
    %201 = arith.extf %200 : vector<4x1x256xbf16> to vector<4x1x256xf32>
    %202 = arith.mulf %198, %201 : vector<4x1x256xf32>
    %203 = arith.addf %197, %202 : vector<4x1x256xf32>
    %204 = vector.extract_strided_slice %23 {offsets = [0, 14, 0], sizes = [4, 1, 256], strides = [1, 1, 1]} : vector<4x16x256xf32> to vector<4x1x256xf32>
    %c0_149 = arith.constant 0 : index
    %c1_150 = arith.constant 1 : index
    %c0_151 = arith.constant 0 : index
    %c14_152 = arith.constant 14 : index
    %c0_153 = arith.constant 0 : index
    %205 = vector.load %arg5[%c0_149, %c1_150, %c0_151, %c14_152, %c0_153] : memref<1x4x4x16x256xbf16, #tpu.memory_space<vmem>>, vector<1x1x4x1x256xbf16>
    %206 = vector.shape_cast %205 : vector<1x1x4x1x256xbf16> to vector<4x1x256xbf16>
    %207 = arith.extf %206 : vector<4x1x256xbf16> to vector<4x1x256xf32>
    %208 = arith.mulf %204, %207 : vector<4x1x256xf32>
    %209 = arith.addf %203, %208 : vector<4x1x256xf32>
    %210 = vector.extract_strided_slice %23 {offsets = [0, 15, 0], sizes = [4, 1, 256], strides = [1, 1, 1]} : vector<4x16x256xf32> to vector<4x1x256xf32>
    %c0_154 = arith.constant 0 : index
    %c1_155 = arith.constant 1 : index
    %c0_156 = arith.constant 0 : index
    %c15_157 = arith.constant 15 : index
    %c0_158 = arith.constant 0 : index
    %211 = vector.load %arg5[%c0_154, %c1_155, %c0_156, %c15_157, %c0_158] : memref<1x4x4x16x256xbf16, #tpu.memory_space<vmem>>, vector<1x1x4x1x256xbf16>
    %212 = vector.shape_cast %211 : vector<1x1x4x1x256xbf16> to vector<4x1x256xbf16>
    %213 = arith.extf %212 : vector<4x1x256xbf16> to vector<4x1x256xf32>
    %214 = arith.mulf %210, %213 : vector<4x1x256xf32>
    %215 = arith.addf %209, %214 : vector<4x1x256xf32>
    %216 = vector.shape_cast %215 : vector<4x1x256xf32> to vector<4x256xf32>
    %c4_159 = arith.constant 4 : index
    %c0_160 = arith.constant 0 : index
    %217 = vector.load %arg9[%c4_159, %c0_160] : memref<16x256xf32, #tpu.memory_space<vmem>>, vector<4x256xf32>
    tpu.vector_store %arg9[%c4_159, %c0_160], %216 {strides = array<i32>} : memref<16x256xf32, #tpu.memory_space<vmem>>, vector<4x256xf32>,
    %218 = vector.extract_strided_slice %23 {offsets = [0, 0, 0], sizes = [4, 1, 256], strides = [1, 1, 1]} : vector<4x16x256xf32> to vector<4x1x256xf32>
    %c0_161 = arith.constant 0 : index
    %c2_162 = arith.constant 2 : index
    %c0_163 = arith.constant 0 : index
    %c0_164 = arith.constant 0 : index
    %c0_165 = arith.constant 0 : index
    %219 = vector.load %arg5[%c0_161, %c2_162, %c0_163, %c0_164, %c0_165] : memref<1x4x4x16x256xbf16, #tpu.memory_space<vmem>>, vector<1x1x4x1x256xbf16>
    %220 = vector.shape_cast %219 : vector<1x1x4x1x256xbf16> to vector<4x1x256xbf16>
    %221 = arith.extf %220 : vector<4x1x256xbf16> to vector<4x1x256xf32>
    %222 = arith.mulf %218, %221 : vector<4x1x256xf32>
    %223 = vector.extract_strided_slice %23 {offsets = [0, 1, 0], sizes = [4, 1, 256], strides = [1, 1, 1]} : vector<4x16x256xf32> to vector<4x1x256xf32>
    %c0_166 = arith.constant 0 : index
    %c2_167 = arith.constant 2 : index
    %c0_168 = arith.constant 0 : index
    %c1_169 = arith.constant 1 : index
    %c0_170 = arith.constant 0 : index
    %224 = vector.load %arg5[%c0_166, %c2_167, %c0_168, %c1_169, %c0_170] : memref<1x4x4x16x256xbf16, #tpu.memory_space<vmem>>, vector<1x1x4x1x256xbf16>
    %225 = vector.shape_cast %224 : vector<1x1x4x1x256xbf16> to vector<4x1x256xbf16>
    %226 = arith.extf %225 : vector<4x1x256xbf16> to vector<4x1x256xf32>
    %227 = arith.mulf %223, %226 : vector<4x1x256xf32>
    %228 = arith.addf %222, %227 : vector<4x1x256xf32>
    %229 = vector.extract_strided_slice %23 {offsets = [0, 2, 0], sizes = [4, 1, 256], strides = [1, 1, 1]} : vector<4x16x256xf32> to vector<4x1x256xf32>
    %c0_171 = arith.constant 0 : index
    %c2_172 = arith.constant 2 : index
    %c0_173 = arith.constant 0 : index
    %c2_174 = arith.constant 2 : index
    %c0_175 = arith.constant 0 : index
    %230 = vector.load %arg5[%c0_171, %c2_172, %c0_173, %c2_174, %c0_175] : memref<1x4x4x16x256xbf16, #tpu.memory_space<vmem>>, vector<1x1x4x1x256xbf16>
    %231 = vector.shape_cast %230 : vector<1x1x4x1x256xbf16> to vector<4x1x256xbf16>
    %232 = arith.extf %231 : vector<4x1x256xbf16> to vector<4x1x256xf32>
    %233 = arith.mulf %229, %232 : vector<4x1x256xf32>
    %234 = arith.addf %228, %233 : vector<4x1x256xf32>
    %235 = vector.extract_strided_slice %23 {offsets = [0, 3, 0], sizes = [4, 1, 256], strides = [1, 1, 1]} : vector<4x16x256xf32> to vector<4x1x256xf32>
    %c0_176 = arith.constant 0 : index
    %c2_177 = arith.constant 2 : index
    %c0_178 = arith.constant 0 : index
    %c3_179 = arith.constant 3 : index
    %c0_180 = arith.constant 0 : index
    %236 = vector.load %arg5[%c0_176, %c2_177, %c0_178, %c3_179, %c0_180] : memref<1x4x4x16x256xbf16, #tpu.memory_space<vmem>>, vector<1x1x4x1x256xbf16>
    %237 = vector.shape_cast %236 : vector<1x1x4x1x256xbf16> to vector<4x1x256xbf16>
    %238 = arith.extf %237 : vector<4x1x256xbf16> to vector<4x1x256xf32>
    %239 = arith.mulf %235, %238 : vector<4x1x256xf32>
    %240 = arith.addf %234, %239 : vector<4x1x256xf32>
    %241 = vector.extract_strided_slice %23 {offsets = [0, 4, 0], sizes = [4, 1, 256], strides = [1, 1, 1]} : vector<4x16x256xf32> to vector<4x1x256xf32>
    %c0_181 = arith.constant 0 : index
    %c2_182 = arith.constant 2 : index
    %c0_183 = arith.constant 0 : index
    %c4_184 = arith.constant 4 : index
    %c0_185 = arith.constant 0 : index
    %242 = vector.load %arg5[%c0_181, %c2_182, %c0_183, %c4_184, %c0_185] : memref<1x4x4x16x256xbf16, #tpu.memory_space<vmem>>, vector<1x1x4x1x256xbf16>
    %243 = vector.shape_cast %242 : vector<1x1x4x1x256xbf16> to vector<4x1x256xbf16>
    %244 = arith.extf %243 : vector<4x1x256xbf16> to vector<4x1x256xf32>
    %245 = arith.mulf %241, %244 : vector<4x1x256xf32>
    %246 = arith.addf %240, %245 : vector<4x1x256xf32>
    %247 = vector.extract_strided_slice %23 {offsets = [0, 5, 0], sizes = [4, 1, 256], strides = [1, 1, 1]} : vector<4x16x256xf32> to vector<4x1x256xf32>
    %c0_186 = arith.constant 0 : index
    %c2_187 = arith.constant 2 : index
    %c0_188 = arith.constant 0 : index
    %c5_189 = arith.constant 5 : index
    %c0_190 = arith.constant 0 : index
    %248 = vector.load %arg5[%c0_186, %c2_187, %c0_188, %c5_189, %c0_190] : memref<1x4x4x16x256xbf16, #tpu.memory_space<vmem>>, vector<1x1x4x1x256xbf16>
    %249 = vector.shape_cast %248 : vector<1x1x4x1x256xbf16> to vector<4x1x256xbf16>
    %250 = arith.extf %249 : vector<4x1x256xbf16> to vector<4x1x256xf32>
    %251 = arith.mulf %247, %250 : vector<4x1x256xf32>
    %252 = arith.addf %246, %251 : vector<4x1x256xf32>
    %253 = vector.extract_strided_slice %23 {offsets = [0, 6, 0], sizes = [4, 1, 256], strides = [1, 1, 1]} : vector<4x16x256xf32> to vector<4x1x256xf32>
    %c0_191 = arith.constant 0 : index
    %c2_192 = arith.constant 2 : index
    %c0_193 = arith.constant 0 : index
    %c6_194 = arith.constant 6 : index
    %c0_195 = arith.constant 0 : index
    %254 = vector.load %arg5[%c0_191, %c2_192, %c0_193, %c6_194, %c0_195] : memref<1x4x4x16x256xbf16, #tpu.memory_space<vmem>>, vector<1x1x4x1x256xbf16>
    %255 = vector.shape_cast %254 : vector<1x1x4x1x256xbf16> to vector<4x1x256xbf16>
    %256 = arith.extf %255 : vector<4x1x256xbf16> to vector<4x1x256xf32>
    %257 = arith.mulf %253, %256 : vector<4x1x256xf32>
    %258 = arith.addf %252, %257 : vector<4x1x256xf32>
    %259 = vector.extract_strided_slice %23 {offsets = [0, 7, 0], sizes = [4, 1, 256], strides = [1, 1, 1]} : vector<4x16x256xf32> to vector<4x1x256xf32>
    %c0_196 = arith.constant 0 : index
    %c2_197 = arith.constant 2 : index
    %c0_198 = arith.constant 0 : index
    %c7_199 = arith.constant 7 : index
    %c0_200 = arith.constant 0 : index
    %260 = vector.load %arg5[%c0_196, %c2_197, %c0_198, %c7_199, %c0_200] : memref<1x4x4x16x256xbf16, #tpu.memory_space<vmem>>, vector<1x1x4x1x256xbf16>
    %261 = vector.shape_cast %260 : vector<1x1x4x1x256xbf16> to vector<4x1x256xbf16>
    %262 = arith.extf %261 : vector<4x1x256xbf16> to vector<4x1x256xf32>
    %263 = arith.mulf %259, %262 : vector<4x1x256xf32>
    %264 = arith.addf %258, %263 : vector<4x1x256xf32>
    %265 = vector.extract_strided_slice %23 {offsets = [0, 8, 0], sizes = [4, 1, 256], strides = [1, 1, 1]} : vector<4x16x256xf32> to vector<4x1x256xf32>
    %c0_201 = arith.constant 0 : index
    %c2_202 = arith.constant 2 : index
    %c0_203 = arith.constant 0 : index
    %c8_204 = arith.constant 8 : index
    %c0_205 = arith.constant 0 : index
    %266 = vector.load %arg5[%c0_201, %c2_202, %c0_203, %c8_204, %c0_205] : memref<1x4x4x16x256xbf16, #tpu.memory_space<vmem>>, vector<1x1x4x1x256xbf16>
    %267 = vector.shape_cast %266 : vector<1x1x4x1x256xbf16> to vector<4x1x256xbf16>
    %268 = arith.extf %267 : vector<4x1x256xbf16> to vector<4x1x256xf32>
    %269 = arith.mulf %265, %268 : vector<4x1x256xf32>
    %270 = arith.addf %264, %269 : vector<4x1x256xf32>
    %271 = vector.extract_strided_slice %23 {offsets = [0, 9, 0], sizes = [4, 1, 256], strides = [1, 1, 1]} : vector<4x16x256xf32> to vector<4x1x256xf32>
    %c0_206 = arith.constant 0 : index
    %c2_207 = arith.constant 2 : index
    %c0_208 = arith.constant 0 : index
    %c9_209 = arith.constant 9 : index
    %c0_210 = arith.constant 0 : index
    %272 = vector.load %arg5[%c0_206, %c2_207, %c0_208, %c9_209, %c0_210] : memref<1x4x4x16x256xbf16, #tpu.memory_space<vmem>>, vector<1x1x4x1x256xbf16>
    %273 = vector.shape_cast %272 : vector<1x1x4x1x256xbf16> to vector<4x1x256xbf16>
    %274 = arith.extf %273 : vector<4x1x256xbf16> to vector<4x1x256xf32>
    %275 = arith.mulf %271, %274 : vector<4x1x256xf32>
    %276 = arith.addf %270, %275 : vector<4x1x256xf32>
    %277 = vector.extract_strided_slice %23 {offsets = [0, 10, 0], sizes = [4, 1, 256], strides = [1, 1, 1]} : vector<4x16x256xf32> to vector<4x1x256xf32>
    %c0_211 = arith.constant 0 : index
    %c2_212 = arith.constant 2 : index
    %c0_213 = arith.constant 0 : index
    %c10_214 = arith.constant 10 : index
    %c0_215 = arith.constant 0 : index
    %278 = vector.load %arg5[%c0_211, %c2_212, %c0_213, %c10_214, %c0_215] : memref<1x4x4x16x256xbf16, #tpu.memory_space<vmem>>, vector<1x1x4x1x256xbf16>
    %279 = vector.shape_cast %278 : vector<1x1x4x1x256xbf16> to vector<4x1x256xbf16>
    %280 = arith.extf %279 : vector<4x1x256xbf16> to vector<4x1x256xf32>
    %281 = arith.mulf %277, %280 : vector<4x1x256xf32>
    %282 = arith.addf %276, %281 : vector<4x1x256xf32>
    %283 = vector.extract_strided_slice %23 {offsets = [0, 11, 0], sizes = [4, 1, 256], strides = [1, 1, 1]} : vector<4x16x256xf32> to vector<4x1x256xf32>
    %c0_216 = arith.constant 0 : index
    %c2_217 = arith.constant 2 : index
    %c0_218 = arith.constant 0 : index
    %c11_219 = arith.constant 11 : index
    %c0_220 = arith.constant 0 : index
    %284 = vector.load %arg5[%c0_216, %c2_217, %c0_218, %c11_219, %c0_220] : memref<1x4x4x16x256xbf16, #tpu.memory_space<vmem>>, vector<1x1x4x1x256xbf16>
    %285 = vector.shape_cast %284 : vector<1x1x4x1x256xbf16> to vector<4x1x256xbf16>
    %286 = arith.extf %285 : vector<4x1x256xbf16> to vector<4x1x256xf32>
    %287 = arith.mulf %283, %286 : vector<4x1x256xf32>
    %288 = arith.addf %282, %287 : vector<4x1x256xf32>
    %289 = vector.extract_strided_slice %23 {offsets = [0, 12, 0], sizes = [4, 1, 256], strides = [1, 1, 1]} : vector<4x16x256xf32> to vector<4x1x256xf32>
    %c0_221 = arith.constant 0 : index
    %c2_222 = arith.constant 2 : index
    %c0_223 = arith.constant 0 : index
    %c12_224 = arith.constant 12 : index
    %c0_225 = arith.constant 0 : index
    %290 = vector.load %arg5[%c0_221, %c2_222, %c0_223, %c12_224, %c0_225] : memref<1x4x4x16x256xbf16, #tpu.memory_space<vmem>>, vector<1x1x4x1x256xbf16>
    %291 = vector.shape_cast %290 : vector<1x1x4x1x256xbf16> to vector<4x1x256xbf16>
    %292 = arith.extf %291 : vector<4x1x256xbf16> to vector<4x1x256xf32>
    %293 = arith.mulf %289, %292 : vector<4x1x256xf32>
    %294 = arith.addf %288, %293 : vector<4x1x256xf32>
    %295 = vector.extract_strided_slice %23 {offsets = [0, 13, 0], sizes = [4, 1, 256], strides = [1, 1, 1]} : vector<4x16x256xf32> to vector<4x1x256xf32>
    %c0_226 = arith.constant 0 : index
    %c2_227 = arith.constant 2 : index
    %c0_228 = arith.constant 0 : index
    %c13_229 = arith.constant 13 : index
    %c0_230 = arith.constant 0 : index
    %296 = vector.load %arg5[%c0_226, %c2_227, %c0_228, %c13_229, %c0_230] : memref<1x4x4x16x256xbf16, #tpu.memory_space<vmem>>, vector<1x1x4x1x256xbf16>
    %297 = vector.shape_cast %296 : vector<1x1x4x1x256xbf16> to vector<4x1x256xbf16>
    %298 = arith.extf %297 : vector<4x1x256xbf16> to vector<4x1x256xf32>
    %299 = arith.mulf %295, %298 : vector<4x1x256xf32>
    %300 = arith.addf %294, %299 : vector<4x1x256xf32>
    %301 = vector.extract_strided_slice %23 {offsets = [0, 14, 0], sizes = [4, 1, 256], strides = [1, 1, 1]} : vector<4x16x256xf32> to vector<4x1x256xf32>
    %c0_231 = arith.constant 0 : index
    %c2_232 = arith.constant 2 : index
    %c0_233 = arith.constant 0 : index
    %c14_234 = arith.constant 14 : index
    %c0_235 = arith.constant 0 : index
    %302 = vector.load %arg5[%c0_231, %c2_232, %c0_233, %c14_234, %c0_235] : memref<1x4x4x16x256xbf16, #tpu.memory_space<vmem>>, vector<1x1x4x1x256xbf16>
    %303 = vector.shape_cast %302 : vector<1x1x4x1x256xbf16> to vector<4x1x256xbf16>
    %304 = arith.extf %303 : vector<4x1x256xbf16> to vector<4x1x256xf32>
    %305 = arith.mulf %301, %304 : vector<4x1x256xf32>
    %306 = arith.addf %300, %305 : vector<4x1x256xf32>
    %307 = vector.extract_strided_slice %23 {offsets = [0, 15, 0], sizes = [4, 1, 256], strides = [1, 1, 1]} : vector<4x16x256xf32> to vector<4x1x256xf32>
    %c0_236 = arith.constant 0 : index
    %c2_237 = arith.constant 2 : index
    %c0_238 = arith.constant 0 : index
    %c15_239 = arith.constant 15 : index
    %c0_240 = arith.constant 0 : index
    %308 = vector.load %arg5[%c0_236, %c2_237, %c0_238, %c15_239, %c0_240] : memref<1x4x4x16x256xbf16, #tpu.memory_space<vmem>>, vector<1x1x4x1x256xbf16>
    %309 = vector.shape_cast %308 : vector<1x1x4x1x256xbf16> to vector<4x1x256xbf16>
    %310 = arith.extf %309 : vector<4x1x256xbf16> to vector<4x1x256xf32>
    %311 = arith.mulf %307, %310 : vector<4x1x256xf32>
    %312 = arith.addf %306, %311 : vector<4x1x256xf32>
    %313 = vector.shape_cast %312 : vector<4x1x256xf32> to vector<4x256xf32>
    %c8_241 = arith.constant 8 : index
    %c0_242 = arith.constant 0 : index
    %314 = vector.load %arg9[%c8_241, %c0_242] : memref<16x256xf32, #tpu.memory_space<vmem>>, vector<4x256xf32>
    tpu.vector_store %arg9[%c8_241, %c0_242], %313 {strides = array<i32>} : memref<16x256xf32, #tpu.memory_space<vmem>>, vector<4x256xf32>,
    %315 = vector.extract_strided_slice %23 {offsets = [0, 0, 0], sizes = [4, 1, 256], strides = [1, 1, 1]} : vector<4x16x256xf32> to vector<4x1x256xf32>
    %c0_243 = arith.constant 0 : index
    %c3_244 = arith.constant 3 : index
    %c0_245 = arith.constant 0 : index
    %c0_246 = arith.constant 0 : index
    %c0_247 = arith.constant 0 : index
    %316 = vector.load %arg5[%c0_243, %c3_244, %c0_245, %c0_246, %c0_247] : memref<1x4x4x16x256xbf16, #tpu.memory_space<vmem>>, vector<1x1x4x1x256xbf16>
    %317 = vector.shape_cast %316 : vector<1x1x4x1x256xbf16> to vector<4x1x256xbf16>
    %318 = arith.extf %317 : vector<4x1x256xbf16> to vector<4x1x256xf32>
    %319 = arith.mulf %315, %318 : vector<4x1x256xf32>
    %320 = vector.extract_strided_slice %23 {offsets = [0, 1, 0], sizes = [4, 1, 256], strides = [1, 1, 1]} : vector<4x16x256xf32> to vector<4x1x256xf32>
    %c0_248 = arith.constant 0 : index
    %c3_249 = arith.constant 3 : index
    %c0_250 = arith.constant 0 : index
    %c1_251 = arith.constant 1 : index
    %c0_252 = arith.constant 0 : index
    %321 = vector.load %arg5[%c0_248, %c3_249, %c0_250, %c1_251, %c0_252] : memref<1x4x4x16x256xbf16, #tpu.memory_space<vmem>>, vector<1x1x4x1x256xbf16>
    %322 = vector.shape_cast %321 : vector<1x1x4x1x256xbf16> to vector<4x1x256xbf16>
    %323 = arith.extf %322 : vector<4x1x256xbf16> to vector<4x1x256xf32>
    %324 = arith.mulf %320, %323 : vector<4x1x256xf32>
    %325 = arith.addf %319, %324 : vector<4x1x256xf32>
    %326 = vector.extract_strided_slice %23 {offsets = [0, 2, 0], sizes = [4, 1, 256], strides = [1, 1, 1]} : vector<4x16x256xf32> to vector<4x1x256xf32>
    %c0_253 = arith.constant 0 : index
    %c3_254 = arith.constant 3 : index
    %c0_255 = arith.constant 0 : index
    %c2_256 = arith.constant 2 : index
    %c0_257 = arith.constant 0 : index
    %327 = vector.load %arg5[%c0_253, %c3_254, %c0_255, %c2_256, %c0_257] : memref<1x4x4x16x256xbf16, #tpu.memory_space<vmem>>, vector<1x1x4x1x256xbf16>
    %328 = vector.shape_cast %327 : vector<1x1x4x1x256xbf16> to vector<4x1x256xbf16>
    %329 = arith.extf %328 : vector<4x1x256xbf16> to vector<4x1x256xf32>
    %330 = arith.mulf %326, %329 : vector<4x1x256xf32>
    %331 = arith.addf %325, %330 : vector<4x1x256xf32>
    %332 = vector.extract_strided_slice %23 {offsets = [0, 3, 0], sizes = [4, 1, 256], strides = [1, 1, 1]} : vector<4x16x256xf32> to vector<4x1x256xf32>
    %c0_258 = arith.constant 0 : index
    %c3_259 = arith.constant 3 : index
    %c0_260 = arith.constant 0 : index
    %c3_261 = arith.constant 3 : index
    %c0_262 = arith.constant 0 : index
    %333 = vector.load %arg5[%c0_258, %c3_259, %c0_260, %c3_261, %c0_262] : memref<1x4x4x16x256xbf16, #tpu.memory_space<vmem>>, vector<1x1x4x1x256xbf16>
    %334 = vector.shape_cast %333 : vector<1x1x4x1x256xbf16> to vector<4x1x256xbf16>
    %335 = arith.extf %334 : vector<4x1x256xbf16> to vector<4x1x256xf32>
    %336 = arith.mulf %332, %335 : vector<4x1x256xf32>
    %337 = arith.addf %331, %336 : vector<4x1x256xf32>
    %338 = vector.extract_strided_slice %23 {offsets = [0, 4, 0], sizes = [4, 1, 256], strides = [1, 1, 1]} : vector<4x16x256xf32> to vector<4x1x256xf32>
    %c0_263 = arith.constant 0 : index
    %c3_264 = arith.constant 3 : index
    %c0_265 = arith.constant 0 : index
    %c4_266 = arith.constant 4 : index
    %c0_267 = arith.constant 0 : index
    %339 = vector.load %arg5[%c0_263, %c3_264, %c0_265, %c4_266, %c0_267] : memref<1x4x4x16x256xbf16, #tpu.memory_space<vmem>>, vector<1x1x4x1x256xbf16>
    %340 = vector.shape_cast %339 : vector<1x1x4x1x256xbf16> to vector<4x1x256xbf16>
    %341 = arith.extf %340 : vector<4x1x256xbf16> to vector<4x1x256xf32>
    %342 = arith.mulf %338, %341 : vector<4x1x256xf32>
    %343 = arith.addf %337, %342 : vector<4x1x256xf32>
    %344 = vector.extract_strided_slice %23 {offsets = [0, 5, 0], sizes = [4, 1, 256], strides = [1, 1, 1]} : vector<4x16x256xf32> to vector<4x1x256xf32>
    %c0_268 = arith.constant 0 : index
    %c3_269 = arith.constant 3 : index
    %c0_270 = arith.constant 0 : index
    %c5_271 = arith.constant 5 : index
    %c0_272 = arith.constant 0 : index
    %345 = vector.load %arg5[%c0_268, %c3_269, %c0_270, %c5_271, %c0_272] : memref<1x4x4x16x256xbf16, #tpu.memory_space<vmem>>, vector<1x1x4x1x256xbf16>
    %346 = vector.shape_cast %345 : vector<1x1x4x1x256xbf16> to vector<4x1x256xbf16>
    %347 = arith.extf %346 : vector<4x1x256xbf16> to vector<4x1x256xf32>
    %348 = arith.mulf %344, %347 : vector<4x1x256xf32>
    %349 = arith.addf %343, %348 : vector<4x1x256xf32>
    %350 = vector.extract_strided_slice %23 {offsets = [0, 6, 0], sizes = [4, 1, 256], strides = [1, 1, 1]} : vector<4x16x256xf32> to vector<4x1x256xf32>
    %c0_273 = arith.constant 0 : index
    %c3_274 = arith.constant 3 : index
    %c0_275 = arith.constant 0 : index
    %c6_276 = arith.constant 6 : index
    %c0_277 = arith.constant 0 : index
    %351 = vector.load %arg5[%c0_273, %c3_274, %c0_275, %c6_276, %c0_277] : memref<1x4x4x16x256xbf16, #tpu.memory_space<vmem>>, vector<1x1x4x1x256xbf16>
    %352 = vector.shape_cast %351 : vector<1x1x4x1x256xbf16> to vector<4x1x256xbf16>
    %353 = arith.extf %352 : vector<4x1x256xbf16> to vector<4x1x256xf32>
    %354 = arith.mulf %350, %353 : vector<4x1x256xf32>
    %355 = arith.addf %349, %354 : vector<4x1x256xf32>
    %356 = vector.extract_strided_slice %23 {offsets = [0, 7, 0], sizes = [4, 1, 256], strides = [1, 1, 1]} : vector<4x16x256xf32> to vector<4x1x256xf32>
    %c0_278 = arith.constant 0 : index
    %c3_279 = arith.constant 3 : index
    %c0_280 = arith.constant 0 : index
    %c7_281 = arith.constant 7 : index
    %c0_282 = arith.constant 0 : index
    %357 = vector.load %arg5[%c0_278, %c3_279, %c0_280, %c7_281, %c0_282] : memref<1x4x4x16x256xbf16, #tpu.memory_space<vmem>>, vector<1x1x4x1x256xbf16>
    %358 = vector.shape_cast %357 : vector<1x1x4x1x256xbf16> to vector<4x1x256xbf16>
    %359 = arith.extf %358 : vector<4x1x256xbf16> to vector<4x1x256xf32>
    %360 = arith.mulf %356, %359 : vector<4x1x256xf32>
    %361 = arith.addf %355, %360 : vector<4x1x256xf32>
    %362 = vector.extract_strided_slice %23 {offsets = [0, 8, 0], sizes = [4, 1, 256], strides = [1, 1, 1]} : vector<4x16x256xf32> to vector<4x1x256xf32>
    %c0_283 = arith.constant 0 : index
    %c3_284 = arith.constant 3 : index
    %c0_285 = arith.constant 0 : index
    %c8_286 = arith.constant 8 : index
    %c0_287 = arith.constant 0 : index
    %363 = vector.load %arg5[%c0_283, %c3_284, %c0_285, %c8_286, %c0_287] : memref<1x4x4x16x256xbf16, #tpu.memory_space<vmem>>, vector<1x1x4x1x256xbf16>
    %364 = vector.shape_cast %363 : vector<1x1x4x1x256xbf16> to vector<4x1x256xbf16>
    %365 = arith.extf %364 : vector<4x1x256xbf16> to vector<4x1x256xf32>
    %366 = arith.mulf %362, %365 : vector<4x1x256xf32>
    %367 = arith.addf %361, %366 : vector<4x1x256xf32>
    %368 = vector.extract_strided_slice %23 {offsets = [0, 9, 0], sizes = [4, 1, 256], strides = [1, 1, 1]} : vector<4x16x256xf32> to vector<4x1x256xf32>
    %c0_288 = arith.constant 0 : index
    %c3_289 = arith.constant 3 : index
    %c0_290 = arith.constant 0 : index
    %c9_291 = arith.constant 9 : index
    %c0_292 = arith.constant 0 : index
    %369 = vector.load %arg5[%c0_288, %c3_289, %c0_290, %c9_291, %c0_292] : memref<1x4x4x16x256xbf16, #tpu.memory_space<vmem>>, vector<1x1x4x1x256xbf16>
    %370 = vector.shape_cast %369 : vector<1x1x4x1x256xbf16> to vector<4x1x256xbf16>
    %371 = arith.extf %370 : vector<4x1x256xbf16> to vector<4x1x256xf32>
    %372 = arith.mulf %368, %371 : vector<4x1x256xf32>
    %373 = arith.addf %367, %372 : vector<4x1x256xf32>
    %374 = vector.extract_strided_slice %23 {offsets = [0, 10, 0], sizes = [4, 1, 256], strides = [1, 1, 1]} : vector<4x16x256xf32> to vector<4x1x256xf32>
    %c0_293 = arith.constant 0 : index
    %c3_294 = arith.constant 3 : index
    %c0_295 = arith.constant 0 : index
    %c10_296 = arith.constant 10 : index
    %c0_297 = arith.constant 0 : index
    %375 = vector.load %arg5[%c0_293, %c3_294, %c0_295, %c10_296, %c0_297] : memref<1x4x4x16x256xbf16, #tpu.memory_space<vmem>>, vector<1x1x4x1x256xbf16>
    %376 = vector.shape_cast %375 : vector<1x1x4x1x256xbf16> to vector<4x1x256xbf16>
    %377 = arith.extf %376 : vector<4x1x256xbf16> to vector<4x1x256xf32>
    %378 = arith.mulf %374, %377 : vector<4x1x256xf32>
    %379 = arith.addf %373, %378 : vector<4x1x256xf32>
    %380 = vector.extract_strided_slice %23 {offsets = [0, 11, 0], sizes = [4, 1, 256], strides = [1, 1, 1]} : vector<4x16x256xf32> to vector<4x1x256xf32>
    %c0_298 = arith.constant 0 : index
    %c3_299 = arith.constant 3 : index
    %c0_300 = arith.constant 0 : index
    %c11_301 = arith.constant 11 : index
    %c0_302 = arith.constant 0 : index
    %381 = vector.load %arg5[%c0_298, %c3_299, %c0_300, %c11_301, %c0_302] : memref<1x4x4x16x256xbf16, #tpu.memory_space<vmem>>, vector<1x1x4x1x256xbf16>
    %382 = vector.shape_cast %381 : vector<1x1x4x1x256xbf16> to vector<4x1x256xbf16>
    %383 = arith.extf %382 : vector<4x1x256xbf16> to vector<4x1x256xf32>
    %384 = arith.mulf %380, %383 : vector<4x1x256xf32>
    %385 = arith.addf %379, %384 : vector<4x1x256xf32>
    %386 = vector.extract_strided_slice %23 {offsets = [0, 12, 0], sizes = [4, 1, 256], strides = [1, 1, 1]} : vector<4x16x256xf32> to vector<4x1x256xf32>
    %c0_303 = arith.constant 0 : index
    %c3_304 = arith.constant 3 : index
    %c0_305 = arith.constant 0 : index
    %c12_306 = arith.constant 12 : index
    %c0_307 = arith.constant 0 : index
    %387 = vector.load %arg5[%c0_303, %c3_304, %c0_305, %c12_306, %c0_307] : memref<1x4x4x16x256xbf16, #tpu.memory_space<vmem>>, vector<1x1x4x1x256xbf16>
    %388 = vector.shape_cast %387 : vector<1x1x4x1x256xbf16> to vector<4x1x256xbf16>
    %389 = arith.extf %388 : vector<4x1x256xbf16> to vector<4x1x256xf32>
    %390 = arith.mulf %386, %389 : vector<4x1x256xf32>
    %391 = arith.addf %385, %390 : vector<4x1x256xf32>
    %392 = vector.extract_strided_slice %23 {offsets = [0, 13, 0], sizes = [4, 1, 256], strides = [1, 1, 1]} : vector<4x16x256xf32> to vector<4x1x256xf32>
    %c0_308 = arith.constant 0 : index
    %c3_309 = arith.constant 3 : index
    %c0_310 = arith.constant 0 : index
    %c13_311 = arith.constant 13 : index
    %c0_312 = arith.constant 0 : index
    %393 = vector.load %arg5[%c0_308, %c3_309, %c0_310, %c13_311, %c0_312] : memref<1x4x4x16x256xbf16, #tpu.memory_space<vmem>>, vector<1x1x4x1x256xbf16>
    %394 = vector.shape_cast %393 : vector<1x1x4x1x256xbf16> to vector<4x1x256xbf16>
    %395 = arith.extf %394 : vector<4x1x256xbf16> to vector<4x1x256xf32>
    %396 = arith.mulf %392, %395 : vector<4x1x256xf32>
    %397 = arith.addf %391, %396 : vector<4x1x256xf32>
    %398 = vector.extract_strided_slice %23 {offsets = [0, 14, 0], sizes = [4, 1, 256], strides = [1, 1, 1]} : vector<4x16x256xf32> to vector<4x1x256xf32>
    %c0_313 = arith.constant 0 : index
    %c3_314 = arith.constant 3 : index
    %c0_315 = arith.constant 0 : index
    %c14_316 = arith.constant 14 : index
    %c0_317 = arith.constant 0 : index
    %399 = vector.load %arg5[%c0_313, %c3_314, %c0_315, %c14_316, %c0_317] : memref<1x4x4x16x256xbf16, #tpu.memory_space<vmem>>, vector<1x1x4x1x256xbf16>
    %400 = vector.shape_cast %399 : vector<1x1x4x1x256xbf16> to vector<4x1x256xbf16>
    %401 = arith.extf %400 : vector<4x1x256xbf16> to vector<4x1x256xf32>
    %402 = arith.mulf %398, %401 : vector<4x1x256xf32>
    %403 = arith.addf %397, %402 : vector<4x1x256xf32>
    %404 = vector.extract_strided_slice %23 {offsets = [0, 15, 0], sizes = [4, 1, 256], strides = [1, 1, 1]} : vector<4x16x256xf32> to vector<4x1x256xf32>
    %c0_318 = arith.constant 0 : index
    %c3_319 = arith.constant 3 : index
    %c0_320 = arith.constant 0 : index
    %c15_321 = arith.constant 15 : index
    %c0_322 = arith.constant 0 : index
    %405 = vector.load %arg5[%c0_318, %c3_319, %c0_320, %c15_321, %c0_322] : memref<1x4x4x16x256xbf16, #tpu.memory_space<vmem>>, vector<1x1x4x1x256xbf16>
    %406 = vector.shape_cast %405 : vector<1x1x4x1x256xbf16> to vector<4x1x256xbf16>
    %407 = arith.extf %406 : vector<4x1x256xbf16> to vector<4x1x256xf32>
    %408 = arith.mulf %404, %407 : vector<4x1x256xf32>
    %409 = arith.addf %403, %408 : vector<4x1x256xf32>
    %410 = vector.shape_cast %409 : vector<4x1x256xf32> to vector<4x256xf32>
    %c12_323 = arith.constant 12 : index
    %c0_324 = arith.constant 0 : index
    %411 = vector.load %arg9[%c12_323, %c0_324] : memref<16x256xf32, #tpu.memory_space<vmem>>, vector<4x256xf32>
    tpu.vector_store %arg9[%c12_323, %c0_324], %410 {strides = array<i32>} : memref<16x256xf32, #tpu.memory_space<vmem>>, vector<4x256xf32>,
    %c0_325 = arith.constant 0 : index
    %c0_326 = arith.constant 0 : index
    %412 = vector.load %arg9[%c0_325, %c0_326] : memref<16x256xf32, #tpu.memory_space<vmem>>, vector<16x256xf32>
    %413 = arith.truncf %412 : vector<16x256xf32> to vector<16x256xbf16>
    %c0_327 = arith.constant 0 : index
    %c0_328 = arith.constant 0 : index
    %414 = vector.load %arg6[%c0_327, %c0_328] : memref<16x16xbf16, #tpu.memory_space<vmem>>, vector<16x16xbf16>
    %cst_329 = arith.constant dense<0.000000e+00> : vector<16x256xf32>
    %415 = tpu.matmul %414, %413, %cst_329 {dimension_numbers = #tpu.dot_dimension_numbers<[1], [0], [0], [1], [0, 0, 1, 1], [], []>} : vector<16x16xbf16>, vector<16x256xbf16>, vector<16x256xf32> -> vector<16x256xf32>
    %c0_330 = arith.constant 0 : index
    %c0_331 = arith.constant 0 : index
    %416 = vector.load %arg7[%c0_330, %c0_331] : memref<16x1xf32, #tpu.memory_space<vmem>>, vector<16x1xf32>
    %417 = vector.broadcast %416 : vector<16x1xf32> to vector<16x256xf32>
    %418 = arith.addf %415, %417 : vector<16x256xf32>
    %c0_332 = arith.constant 0 : index
    %c0_333 = arith.constant 0 : index
    %c0_334 = arith.constant 0 : index
    %419 = vector.load %arg8[%c0_332, %c0_333, %c0_334] : memref<1x16x256xf32, #tpu.memory_space<vmem>>, vector<1x16x256xf32>
    %420 = vector.shape_cast %419 : vector<1x16x256xf32> to vector<16x256xf32>
    %421 = vector.shape_cast %418 : vector<16x256xf32> to vector<1x16x256xf32>
    tpu.vector_store %arg8[%c0_332, %c0_333, %c0_334], %421 {strides = array<i32>} : memref<1x16x256xf32, #tpu.memory_space<vmem>>, vector<1x16x256xf32>,
    return
  }
  func.func @transform_0(%arg0: i32, %arg1: i32) -> (i32, i32, i32, i32) {
    %c0_i32 = arith.constant 0 : i32
    %c0_i32_0 = arith.constant 0 : i32
    %c0_i32_1 = arith.constant 0 : i32
    return %arg0, %c0_i32, %c0_i32_0, %arg1 : i32, i32, i32, i32
  }
  func.func @transform_1(%arg0: i32, %arg1: i32) -> (i32, i32, i32, i32) {
    %c0_i32 = arith.constant 0 : i32
    %c0_i32_0 = arith.constant 0 : i32
    %c0_i32_1 = arith.constant 0 : i32
    return %arg0, %c0_i32, %c0_i32_0, %arg1 : i32, i32, i32, i32
  }
  func.func @transform_2(%arg0: i32, %arg1: i32) -> (i32, i32, i32) {
    %c0_i32 = arith.constant 0 : i32
    %c0_i32_0 = arith.constant 0 : i32
    %c0_i32_1 = arith.constant 0 : i32
    %c0_i32_2 = arith.constant 0 : i32
    return %c0_i32, %c0_i32_0, %c0_i32_1 : i32, i32, i32
  }
  func.func @transform_3(%arg0: i32, %arg1: i32) -> (i32, i32, i32, i32, i32) {
    %c0_i32 = arith.constant 0 : i32
    %c0_i32_0 = arith.constant 0 : i32
    %c0_i32_1 = arith.constant 0 : i32
    %c0_i32_2 = arith.constant 0 : i32
    return %arg0, %c0_i32, %c0_i32_0, %c0_i32_1, %arg1 : i32, i32, i32, i32, i32
  }
  func.func @transform_4(%arg0: i32, %arg1: i32) -> (i32, i32) {
    %c0_i32 = arith.constant 0 : i32
    %c0_i32_0 = arith.constant 0 : i32
    %c0_i32_1 = arith.constant 0 : i32
    return %c0_i32, %c0_i32_0 : i32, i32
  }
  func.func @transform_5(%arg0: i32, %arg1: i32) -> (i32, i32) {
    %c0_i32 = arith.constant 0 : i32
    %c0_i32_0 = arith.constant 0 : i32
    %c0_i32_1 = arith.constant 0 : i32
    return %c0_i32, %c0_i32_0 : i32, i32
  }
  func.func @transform_6(%arg0: i32, %arg1: i32) -> (i32, i32, i32) {
    %c0_i32 = arith.constant 0 : i32
    %c0_i32_0 = arith.constant 0 : i32
    return %arg0, %c0_i32, %arg1 : i32, i32, i32
  }
}

</mosaic_0001>

<llo_original>
// kernel: _lambda_.2
$region0: #{_lambda_.2}
  #allocation0 [shape = 'u32[]', space=smem, size = 0x4, offset = 0x4, fixed_abs, tag = 'smem constant byte address 0x4 - core index']
  #allocation1 [shape = 'u32[144,128]{1,0:T(1,128)}', space=vmem, size = 0x12000, scoped, tag = 'internal scratch']
  %s0 = inlined_call_operand.vmem [shape: bf16[2,16,361], index: 0, kind: input, shape index: {}]
  %s1 = inlined_call_operand.vmem [shape: bf16[8,16], index: 1, kind: input, shape index: {}]
  %s2 = inlined_call_operand.vmem [shape: f32[8,1], index: 2, kind: input, shape index: {}]
  %s3 = inlined_call_operand.vmem [shape: f32[2,8,361], index: 3, kind: output, shape index: {}]
  %s4 = sld [smem:[#allocation0]]
  $region45: #{_lambda_.2} parent=0
    _
  %s6 = ssub.s32 1, %s4
  %s7 = scalar_select 0, %s6, %s4
  loop: start=0, step=1, limit=4
  $region2: #{_lambda_.2} parent=0 // loop_pre_header
    _
  $region3: #{_lambda_.2} parent=0 // loop_header
    %s9 = sphi 0, %s13
    %p10 = scmp.ge.s32.totalorder %s9, 4
    %s16 = sphi 0, %s28
    %s17 = sphi 0, %s24
    %s18 = sphi 0, %s16
    %s19 = sphi 0, %s17
    %s20 = sphi 0, %s18
    %s21 = sphi 0, %s19
    %s33 = sphi 0, %s35
    %s36 = sphi 0, %s33
    %s37 = sphi 0, %s36
    %s53 = sphi 0, %s37
    %s57 = sphi 0, %s57
    %s59 = sphi 0, %s57
    %s60 = sphi 0, %s59
    %s74 = sphi 0, %s60
    %s78 = sphi 0, %s78
    %s80 = sphi 0, %s78
    %s81 = sphi 0, %s80
    %s95 = sphi 0, %s81
    %s103 = sphi 0, %s105
    %s106 = sphi 0, %s103
    %s107 = sphi 0, %s106
    %s123 = sphi 0, %s107
  $region4: #{_lambda_.2} parent=0 // loop_header_branch
    %12 = sbr.rel (%p10) target = $region8
  $region5: #{_lambda_.2} parent=0 // loop_body
    %s14 = ssub.s32 %s9, 1
    %s15 = ssub.s32 %s9, 2
    %s22 = sadd.s32 1, %s17
    %p23 = scmp.ge.s32.totalorder %s22, 1
    %s24 = scalar_select %p23, 0, %s22
    %s25 = sadd.s32 1, %s16
    %s26 = scalar_select %p23, %s25, %s16
    %p27 = scmp.ge.s32.totalorder %s26, 2
    %s28 = scalar_select %p27, 0, %s26
    %s29 = ssub.s32 %s16, %s28
    %s30 = ssub.s32 %s17, %s24
    %s31 = sor.u32 %s29, %s30
    %p32 = scmp.eq.s32.totalorder %s31, 0
    %s34 = sadd.s32 %s33, 1
    %s35 = scalar_select %p32, %s33, %s34
    %p38 = pneg %p32
    %p39 = scmp.eq.s32.totalorder %s9, 1
    %p40 = por %p38, %p39
    %p41 = scmp.ne.s32.totalorder %s33, %s36
    %p42 = scmp.eq.s32.totalorder %s9, 0
    %p43 = por %p41, %p42
    %p44 = scmp.ne.s32.totalorder %s33, %s36
    %p45 = scmp.eq.s32.totalorder %s14, 1
    %p46 = por %p44, %p45
    %p47 = scmp.ne.s32.totalorder %s36, %s37
    %p48 = scmp.eq.s32.totalorder %s14, 0
    %p49 = por %p47, %p48
    %p50 = scmp.ne.s32.totalorder %s36, %s37
    %p51 = scmp.eq.s32.totalorder %s15, 1
    %p52 = por %p50, %p51
    %p54 = scmp.ne.s32.totalorder %s37, %s53
    %p55 = scmp.eq.s32.totalorder %s15, 0
    %p56 = por %p54, %p55
    %s58 = sadd.s32 %s57, 1
    %p61 = scmp.eq.s32.totalorder %s9, 1
    %p62 = scmp.ne.s32.totalorder %s57, %s59
    %p63 = scmp.eq.s32.totalorder %s9, 0
    %p64 = por %p62, %p63
    %p65 = scmp.ne.s32.totalorder %s57, %s59
    %p66 = scmp.eq.s32.totalorder %s14, 1
    %p67 = por %p65, %p66
    %p68 = scmp.ne.s32.totalorder %s59, %s60
    %p69 = scmp.eq.s32.totalorder %s14, 0
    %p70 = por %p68, %p69
    %p71 = scmp.ne.s32.totalorder %s59, %s60
    %p72 = scmp.eq.s32.totalorder %s15, 1
    %p73 = por %p71, %p72
    %p75 = scmp.ne.s32.totalorder %s60, %s74
    %p76 = scmp.eq.s32.totalorder %s15, 0
    %p77 = por %p75, %p76
    %s79 = sadd.s32 %s78, 1
    %p82 = scmp.eq.s32.totalorder %s9, 1
    %p83 = scmp.ne.s32.totalorder %s78, %s80
    %p84 = scmp.eq.s32.totalorder %s9, 0
    %p85 = por %p83, %p84
    %p86 = scmp.ne.s32.totalorder %s78, %s80
    %p87 = scmp.eq.s32.totalorder %s14, 1
    %p88 = por %p86, %p87
    %p89 = scmp.ne.s32.totalorder %s80, %s81
    %p90 = scmp.eq.s32.totalorder %s14, 0
    %p91 = por %p89, %p90
    %p92 = scmp.ne.s32.totalorder %s80, %s81
    %p93 = scmp.eq.s32.totalorder %s15, 1
    %p94 = por %p92, %p93
    %p96 = scmp.ne.s32.totalorder %s81, %s95
    %p97 = scmp.eq.s32.totalorder %s15, 0
    %p98 = por %p96, %p97
    %s99 = ssub.s32 %s16, %s28
    %s100 = ssub.s32 %s17, %s24
    %s101 = sor.u32 %s99, %s100
    %p102 = scmp.eq.s32.totalorder %s101, 0
    %s104 = sadd.s32 %s103, 1
    %s105 = scalar_select %p102, %s103, %s104
    %p108 = pneg %p102
    %p109 = scmp.eq.s32.totalorder %s9, 1
    %p110 = por %p108, %p109
    %p111 = scmp.ne.s32.totalorder %s103, %s106
    %p112 = scmp.eq.s32.totalorder %s9, 0
    %p113 = por %p111, %p112
    %p114 = scmp.ne.s32.totalorder %s103, %s106
    %p115 = scmp.eq.s32.totalorder %s14, 1
    %p116 = por %p114, %p115
    %p117 = scmp.ne.s32.totalorder %s106, %s107
    %p118 = scmp.eq.s32.totalorder %s14, 0
    %p119 = por %p117, %p118
    %p120 = scmp.ne.s32.totalorder %s106, %s107
    %p121 = scmp.eq.s32.totalorder %s15, 1
    %p122 = por %p120, %p121
    %p124 = scmp.ne.s32.totalorder %s107, %s123
    %p125 = scmp.eq.s32.totalorder %s15, 0
    %p126 = por %p124, %p125
    %p127 = scmp.le.s32.totalorder 1, %s9
    %p128 = scmp.lt.s32.totalorder %s9, 3
    %p129 = pnand %p127, %p128
    %p130 = pneg %p129
    // Predicated region
    $region9: #{_lambda_.2} parent=5 // pred_check
      _
    $region10: #{_lambda_.2} parent=5 // pred_check_branch
      %132 = sbr.rel (%p129) target = $region12
    $region11: #{_lambda_.2} parent=5 // pred_region
      %s133 = ssub.s32 %s9, 1
      // Predicated region
      $region13: #{_lambda_.2} parent=11 // pred_check
        %p134 = pneg %p70
      $region14: #{_lambda_.2} parent=11 // pred_check_branch
        %136 = sbr.rel (%p134) target = $region16
      $region15: #{_lambda_.2} parent=11 // pred_region
        _
      $region16: #{_lambda_.2} parent=11 // pred_fallthru
        _
      // Predicated region
      $region17: #{_lambda_.2} parent=11 // pred_check
        %p137 = pneg %p91
      $region18: #{_lambda_.2} parent=11 // pred_check_branch
        %139 = sbr.rel (%p137) target = $region20
      $region19: #{_lambda_.2} parent=11 // pred_region
        _
      $region20: #{_lambda_.2} parent=11 // pred_fallthru
        _
    $region12: #{_lambda_.2} parent=5 // pred_fallthru
      _
    %p140 = scmp.lt.s32.totalorder %s9, 2
    // Predicated region
    $region21: #{_lambda_.2} parent=5 // pred_check
      %p141 = pneg %p140
    $region22: #{_lambda_.2} parent=5 // pred_check_branch
      %143 = sbr.rel (%p141) target = $region24
    $region23: #{_lambda_.2} parent=5 // pred_region
      // Predicated region
      $region25: #{_lambda_.2} parent=23 // pred_check
        %p144 = pneg %p43
      $region26: #{_lambda_.2} parent=23 // pred_check_branch
        %146 = sbr.rel (%p144) target = $region28
      $region27: #{_lambda_.2} parent=23 // pred_region
        %s147 = smul.u32 3, %s17
        %p148 = scmp.lt.s32.totalorder %s16, 1
        %s149 = scalar_select %p148, %s16, 1
        %p150 = scmp.lt.s32.totalorder %s147, 2
        %s151 = scalar_select %p150, %s147, 2
        %s152 = smul.addr %s149, 6
        %s153 = sadd.s32 %s151, %s152
        %s154 = smul.addr %s153, 4
        %s155 = scalar_lea.vmem %s0, %s154
        %s156 = smul.u32 3, %s17
      $region28: #{_lambda_.2} parent=23 // pred_fallthru
        _
    $region24: #{_lambda_.2} parent=5 // pred_fallthru
      _
    %p157 = scmp.le.s32.totalorder 1, %s9
    %p158 = scmp.lt.s32.totalorder %s9, 3
    %p159 = pnand %p157, %p158
    %p160 = pneg %p159
    // Predicated region
    $region29: #{_lambda_.2} parent=5 // pred_check
      _
    $region30: #{_lambda_.2} parent=5 // pred_check_branch
      %162 = sbr.rel (%p159) target = $region32
    $region31: #{_lambda_.2} parent=5 // pred_region
      %s163 = ssub.s32 %s9, 1
      %s164 = smul.u32 3, %s19
      %p165 = scmp.lt.s32.totalorder %s18, 1
      %s166 = scalar_select %p165, %s18, 1
      %p167 = scmp.lt.s32.totalorder %s164, 2
      %s168 = scalar_select %p167, %s164, 2
      %s169 = smul.addr %s166, 6
      %s170 = sadd.s32 %s168, %s169
      %s171 = smul.addr %s170, 4
      %s172 = scalar_lea.vmem %s0, %s171
      %p173 = pneg %p49
      %p174 = pneg %p46
      %p175 = pneg %p70
      %p176 = pneg %p67
      %p177 = pneg %p91
      %p178 = pneg %p88
      %p179 = pneg %p119
      %p180 = pneg %p116
      %s181 = smul.u32 3, %s19
      %p182 = scmp.lt.s32.totalorder %s18, 1
      %s183 = scalar_select %p182, %s18, 1
      %p184 = scmp.lt.s32.totalorder %s181, 2
      %s185 = scalar_select %p184, %s181, 2
      %s186 = smul.addr %s183, 3
      %s187 = sadd.s32 %s185, %s186
      %s188 = smul.addr %s187, 8
      %s189 = scalar_lea.vmem %s3, %s188
      %s190 = smul.u32 3, %s19
      %p191 = scmp.lt.s32.totalorder %s18, 1
      %s192 = scalar_select %p191, %s18, 1
      %p193 = scmp.lt.s32.totalorder %s190, 2
      %s194 = scalar_select %p193, %s190, 2
      %s195 = smul.addr %s192, 6
      %s196 = sadd.s32 %s194, %s195
      %s197 = smul.addr %s196, 4
      %s198 = scalar_lea.vmem %s0, %s197
      %s199 = smul.u32 3, %s19
      %s200 = smul.u32 3, %s19
      %p201 = scmp.lt.s32.totalorder %s18, 1
      %s202 = scalar_select %p201, %s18, 1
      %p203 = scmp.lt.s32.totalorder %s200, 2
      %s204 = scalar_select %p203, %s200, 2
      %s205 = smul.addr %s202, 3
      %s206 = sadd.s32 %s204, %s205
      %s207 = smul.addr %s206, 8
      %s208 = scalar_lea.vmem %s3, %s207
      %s209 = smul.u32 3, %s19
      %v211 = vld [vmem:[%s1] sm:$0xf]
      %v212 = vld [vmem:[%s198] sm:$0xff]
      %v213 = vld [vmem:[%s198 + $0x8] sm:$0xf]
      %v214 = vld [vmem:[%s198 + $0xc] sm:$0xff]
      %v215 = vld [vmem:[%s198 + $0x14] sm:$0xf]
      %v216 = vld [vmem:[%s2] sm:$0xff]
      %218 = vset.pattern.permute.xlu0 0
      %219 = vperm.xlu0 %218, %v216
      %v220 = vpop.permute.xlu0 %219
      %v226 = vunpack.c.l.b16 %v212
      %v227 = vunpack.c.h.b16 %v212
      %v228 = vunpack.c.l.b16 %v213
      %v229 = vunpack.c.l.b16 %v214
      %v230 = vunpack.c.h.b16 %v214
      %v231 = vunpack.c.l.b16 %v215
      %v232 = vpack.c.b16 %v229, %v226
      %v233 = vpack.c.b16 %v230, %v227
      %v234 = vpack.c.b16 %v231, %v228
      %vm238 = vcmask 130048
      %v240 = vsel %vm238, %v211, 0
      %242 = vmatprep.subr.bf16.mxu0 %v233
      %243 = vmatpush1.bf16.msra.mxu0 %v232
      %244 = vmatprep.subr.bf16.mxu0 0
      %245 = vmatpush1.bf16.msra.mxu0 0
      %246 = vmatprep.subr.bf16.mxu0 0
      %247 = vmatpush1.bf16.msra.mxu0 0
      %248 = vmatprep.subr.bf16.mxu0 0
      %249 = vmatpush1.bf16.msra.mxu0 0
      %250 = vmatprep.subr.bf16.mxu0 0
      %251 = vmatpush1.bf16.msra.mxu0 0
      %252 = vmatprep.subr.bf16.mxu0 0
      %253 = vmatpush1.bf16.msra.mxu0 0
      %254 = vmatprep.subr.bf16.mxu0 0
      %255 = vmatpush1.bf16.msra.mxu0 0
      %256 = vmatprep.subr.bf16.mxu0 0
      %257 = vmatpush1.bf16.msra.mxu0 0
      %258 = vmatprep.subr.bf16.mxu0 0
      %259 = vmatpush1.bf16.msra.mxu0 0
      %260 = vmatprep.subr.bf16.mxu0 0
      %261 = vmatpush1.bf16.msra.mxu0 0
      %262 = vmatprep.subr.bf16.mxu0 0
      %263 = vmatpush1.bf16.msra.mxu0 0
      %264 = vmatprep.subr.bf16.mxu0 0
      %265 = vmatpush1.bf16.msra.mxu0 0
      %266 = vmatprep.subr.bf16.mxu0 0
      %267 = vmatpush1.bf16.msra.mxu0 0
      %268 = vmatprep.subr.bf16.mxu0 0
      %269 = vmatpush1.bf16.msra.mxu0 0
      %270 = vmatprep.subr.bf16.mxu0 0
      %271 = vmatpush1.bf16.msra.mxu0 0
      %272 = vmatprep.subr.bf16.mxu0 0
      %273 = vmatpush1.bf16.msra.mxu0 0
      %274 = vmatprep.mubr.bf16.mxu0 0
      %275 = vmatmul.mubr.bf16.gmra.mrb[0].mxu0 %v240
      %v276 = vpop.f32.mrb[0].mxu0
      %v277 = vadd.f32 %v220, %v276
      %v278 = vpop.f32.mrb[0].mxu0
      %v279 = vadd.f32 %v220, %v278
      %v280 = vpop.f32.mrb[0].mxu0
      %v281 = vpop.f32.mrb[0].mxu0
      %282 = vdwg.mxu0
      %283 = vmatprep.subr.bf16.mxu0 0
      %284 = vmatpush1.bf16.msra.mxu0 %v234
      %285 = vmatprep.subr.bf16.mxu0 0
      %286 = vmatpush1.bf16.msra.mxu0 0
      %287 = vmatprep.subr.bf16.mxu0 0
      %288 = vmatpush1.bf16.msra.mxu0 0
      %289 = vmatprep.subr.bf16.mxu0 0
      %290 = vmatpush1.bf16.msra.mxu0 0
      %291 = vmatprep.subr.bf16.mxu0 0
      %292 = vmatpush1.bf16.msra.mxu0 0
      %293 = vmatprep.subr.bf16.mxu0 0
      %294 = vmatpush1.bf16.msra.mxu0 0
      %295 = vmatprep.subr.bf16.mxu0 0
      %296 = vmatpush1.bf16.msra.mxu0 0
      %297 = vmatprep.subr.bf16.mxu0 0
      %298 = vmatpush1.bf16.msra.mxu0 0
      %299 = vmatprep.subr.bf16.mxu0 0
      %300 = vmatpush1.bf16.msra.mxu0 0
      %301 = vmatprep.subr.bf16.mxu0 0
      %302 = vmatpush1.bf16.msra.mxu0 0
      %303 = vmatprep.subr.bf16.mxu0 0
      %304 = vmatpush1.bf16.msra.mxu0 0
      %305 = vmatprep.subr.bf16.mxu0 0
      %306 = vmatpush1.bf16.msra.mxu0 0
      %307 = vmatprep.subr.bf16.mxu0 0
      %308 = vmatpush1.bf16.msra.mxu0 0
      %309 = vmatprep.subr.bf16.mxu0 0
      %310 = vmatpush1.bf16.msra.mxu0 0
      %311 = vmatprep.subr.bf16.mxu0 0
      %312 = vmatpush1.bf16.msra.mxu0 0
      %313 = vmatprep.subr.bf16.mxu0 0
      %314 = vmatpush1.bf16.msra.mxu0 0
      %315 = vmatprep.mubr.bf16.mxu0 0
      %316 = vmatmul.mubr.bf16.gmra.mrb[0].mxu0 %v240
      %v317 = vpop.f32.mrb[0].mxu0
      %v318 = vadd.f32 %v220, %v317
      %v319 = vpop.f32.mrb[0].mxu0
      %v320 = vpop.f32.mrb[0].mxu0
      %v321 = vpop.f32.mrb[0].mxu0
      %322 = vdwg.mxu0
      %323 = vst [vmem:[%s208] sm:$0xff] %v277
      %324 = vst [vmem:[%s208 + $0x8] sm:$0xff] %v279
      %vm325 = vcmask 859136
      %326 = vst.msk [vmem:[%s208 + $0x10] sm:$0xff] %vm325, %v318
      %s327 = smul.u32 3, %s19
      %p328 = scmp.lt.s32.totalorder %s18, 1
      %s329 = scalar_select %p328, %s18, 1
      %p330 = scmp.lt.s32.totalorder %s327, 2
      %s331 = scalar_select %p330, %s327, 2
      %s332 = smul.addr %s329, 3
      %s333 = sadd.s32 %s331, %s332
      %s334 = smul.addr %s333, 8
      %s335 = scalar_lea.vmem %s3, %s334
      // Predicated region
      $region33: #{_lambda_.2} parent=31 // pred_check
        %p336 = pneg %p116
      $region34: #{_lambda_.2} parent=31 // pred_check_branch
        %338 = sbr.rel (%p336) target = $region36
      $region35: #{_lambda_.2} parent=31 // pred_region
        %s339 = smul.u32 3, %s19
      $region36: #{_lambda_.2} parent=31 // pred_fallthru
        _
    $region32: #{_lambda_.2} parent=5 // pred_fallthru
      _
    %p340 = scmp.le.s32.totalorder 2, %s9
    // Predicated region
    $region37: #{_lambda_.2} parent=5 // pred_check
      %p341 = pneg %p340
    $region38: #{_lambda_.2} parent=5 // pred_check_branch
      %343 = sbr.rel (%p341) target = $region40
    $region39: #{_lambda_.2} parent=5 // pred_region
      %s344 = ssub.s32 %s9, 2
      // Predicated region
      $region41: #{_lambda_.2} parent=39 // pred_check
        %p345 = pneg %p122
      $region42: #{_lambda_.2} parent=39 // pred_check_branch
        %347 = sbr.rel (%p345) target = $region44
      $region43: #{_lambda_.2} parent=39 // pred_region
        %s348 = smul.u32 3, %s21
        %p349 = scmp.lt.s32.totalorder %s20, 1
        %s350 = scalar_select %p349, %s20, 1
        %p351 = scmp.lt.s32.totalorder %s348, 2
        %s352 = scalar_select %p351, %s348, 2
        %s353 = smul.addr %s350, 3
        %s354 = sadd.s32 %s352, %s353
        %s355 = smul.addr %s354, 8
        %s356 = scalar_lea.vmem %s3, %s355
      $region44: #{_lambda_.2} parent=39 // pred_fallthru
        _
    $region40: #{_lambda_.2} parent=5 // pred_fallthru
      _
  $region6: #{_lambda_.2} parent=0 // loop_footer
    %s13 = sadd.s32 1, %s9
  $region7: #{_lambda_.2} parent=0 // loop_footer_branch
    %8 = sbr.rel target = $region3
  $region8: #{_lambda_.2} parent=0 // loop_exit
    _

// kernel: _lambda_.3
$region0: #{_lambda_.3}
  #allocation0 [shape = 'u32[]', space=smem, size = 0x4, offset = 0x4, fixed_abs, tag = 'smem constant byte address 0x4 - core index']
  #allocation1 [shape = 'u32[144,128]{1,0:T(1,128)}', space=vmem, size = 0x12000, scoped, tag = 'internal scratch']
  #allocation2 [shape = 'f32[16,256]{1,0:T(8,128)}', space=vmem, size = 0x4000, scoped, tag = 'scratch operand']
  %s0 = inlined_call_operand.vmem [shape: bf16[2,4,16,256], index: 0, kind: input, shape index: {}]
  %s1 = inlined_call_operand.vmem [shape: f32[2,4,1,256], index: 1, kind: input, shape index: {}]
  %s2 = inlined_call_operand.vmem [shape: f32[4,16,1], index: 2, kind: input, shape index: {}]
  %s3 = inlined_call_operand.vmem [shape: bf16[2,4,4,16,256], index: 3, kind: input, shape index: {}]
  %s4 = inlined_call_operand.vmem [shape: bf16[16,16], index: 4, kind: input, shape index: {}]
  %s5 = inlined_call_operand.vmem [shape: f32[16,1], index: 5, kind: input, shape index: {}]
  %s6 = inlined_call_operand.vmem [shape: f32[2,16,256], index: 6, kind: output, shape index: {}]
  %s7 = sld [smem:[#allocation0]]
  $region57: #{_lambda_.3} parent=0
    _
  %s9 = ssub.s32 1, %s7
  %s10 = scalar_select 0, %s9, %s7
  loop: start=0, step=1, limit=4
  $region2: #{_lambda_.3} parent=0 // loop_pre_header
    _
  $region3: #{_lambda_.3} parent=0 // loop_header
    %s12 = sphi 0, %s16
    %p13 = scmp.ge.s32.totalorder %s12, 4
    %s19 = sphi 0, %s31
    %s20 = sphi 0, %s27
    %s21 = sphi 0, %s19
    %s22 = sphi 0, %s20
    %s23 = sphi 0, %s21
    %s24 = sphi 0, %s22
    %s36 = sphi 0, %s38
    %s39 = sphi 0, %s36
    %s40 = sphi 0, %s39
    %s56 = sphi 0, %s40
    %s64 = sphi 0, %s66
    %s67 = sphi 0, %s64
    %s68 = sphi 0, %s67
    %s84 = sphi 0, %s68
    %s88 = sphi 0, %s88
    %s90 = sphi 0, %s88
    %s91 = sphi 0, %s90
    %s105 = sphi 0, %s91
    %s113 = sphi 0, %s115
    %s116 = sphi 0, %s113
    %s117 = sphi 0, %s116
    %s133 = sphi 0, %s117
    %s137 = sphi 0, %s137
    %s139 = sphi 0, %s137
    %s140 = sphi 0, %s139
    %s154 = sphi 0, %s140
    %s158 = sphi 0, %s158
    %s160 = sphi 0, %s158
    %s161 = sphi 0, %s160
    %s175 = sphi 0, %s161
    %s183 = sphi 0, %s185
    %s186 = sphi 0, %s183
    %s187 = sphi 0, %s186
    %s203 = sphi 0, %s187
  $region4: #{_lambda_.3} parent=0 // loop_header_branch
    %15 = sbr.rel (%p13) target = $region8
  $region5: #{_lambda_.3} parent=0 // loop_body
    %s17 = ssub.s32 %s12, 1
    %s18 = ssub.s32 %s12, 2
    %s25 = sadd.s32 1, %s20
    %p26 = scmp.ge.s32.totalorder %s25, 1
    %s27 = scalar_select %p26, 0, %s25
    %s28 = sadd.s32 1, %s19
    %s29 = scalar_select %p26, %s28, %s19
    %p30 = scmp.ge.s32.totalorder %s29, 2
    %s31 = scalar_select %p30, 0, %s29
    %s32 = ssub.s32 %s19, %s31
    %s33 = ssub.s32 %s20, %s27
    %s34 = sor.u32 %s32, %s33
    %p35 = scmp.eq.s32.totalorder %s34, 0
    %s37 = sadd.s32 %s36, 1
    %s38 = scalar_select %p35, %s36, %s37
    %p41 = pneg %p35
    %p42 = scmp.eq.s32.totalorder %s12, 1
    %p43 = por %p41, %p42
    %p44 = scmp.ne.s32.totalorder %s36, %s39
    %p45 = scmp.eq.s32.totalorder %s12, 0
    %p46 = por %p44, %p45
    %p47 = scmp.ne.s32.totalorder %s36, %s39
    %p48 = scmp.eq.s32.totalorder %s17, 1
    %p49 = por %p47, %p48
    %p50 = scmp.ne.s32.totalorder %s39, %s40
    %p51 = scmp.eq.s32.totalorder %s17, 0
    %p52 = por %p50, %p51
    %p53 = scmp.ne.s32.totalorder %s39, %s40
    %p54 = scmp.eq.s32.totalorder %s18, 1
    %p55 = por %p53, %p54
    %p57 = scmp.ne.s32.totalorder %s40, %s56
    %p58 = scmp.eq.s32.totalorder %s18, 0
    %p59 = por %p57, %p58
    %s60 = ssub.s32 %s19, %s31
    %s61 = ssub.s32 %s20, %s27
    %s62 = sor.u32 %s60, %s61
    %p63 = scmp.eq.s32.totalorder %s62, 0
    %s65 = sadd.s32 %s64, 1
    %s66 = scalar_select %p63, %s64, %s65
    %p69 = pneg %p63
    %p70 = scmp.eq.s32.totalorder %s12, 1
    %p71 = por %p69, %p70
    %p72 = scmp.ne.s32.totalorder %s64, %s67
    %p73 = scmp.eq.s32.totalorder %s12, 0
    %p74 = por %p72, %p73
    %p75 = scmp.ne.s32.totalorder %s64, %s67
    %p76 = scmp.eq.s32.totalorder %s17, 1
    %p77 = por %p75, %p76
    %p78 = scmp.ne.s32.totalorder %s67, %s68
    %p79 = scmp.eq.s32.totalorder %s17, 0
    %p80 = por %p78, %p79
    %p81 = scmp.ne.s32.totalorder %s67, %s68
    %p82 = scmp.eq.s32.totalorder %s18, 1
    %p83 = por %p81, %p82
    %p85 = scmp.ne.s32.totalorder %s68, %s84
    %p86 = scmp.eq.s32.totalorder %s18, 0
    %p87 = por %p85, %p86
    %s89 = sadd.s32 %s88, 1
    %p92 = scmp.eq.s32.totalorder %s12, 1
    %p93 = scmp.ne.s32.totalorder %s88, %s90
    %p94 = scmp.eq.s32.totalorder %s12, 0
    %p95 = por %p93, %p94
    %p96 = scmp.ne.s32.totalorder %s88, %s90
    %p97 = scmp.eq.s32.totalorder %s17, 1
    %p98 = por %p96, %p97
    %p99 = scmp.ne.s32.totalorder %s90, %s91
    %p100 = scmp.eq.s32.totalorder %s17, 0
    %p101 = por %p99, %p100
    %p102 = scmp.ne.s32.totalorder %s90, %s91
    %p103 = scmp.eq.s32.totalorder %s18, 1
    %p104 = por %p102, %p103
    %p106 = scmp.ne.s32.totalorder %s91, %s105
    %p107 = scmp.eq.s32.totalorder %s18, 0
    %p108 = por %p106, %p107
    %s109 = ssub.s32 %s19, %s31
    %s110 = ssub.s32 %s20, %s27
    %s111 = sor.u32 %s109, %s110
    %p112 = scmp.eq.s32.totalorder %s111, 0
    %s114 = sadd.s32 %s113, 1
    %s115 = scalar_select %p112, %s113, %s114
    %p118 = pneg %p112
    %p119 = scmp.eq.s32.totalorder %s12, 1
    %p120 = por %p118, %p119
    %p121 = scmp.ne.s32.totalorder %s113, %s116
    %p122 = scmp.eq.s32.totalorder %s12, 0
    %p123 = por %p121, %p122
    %p124 = scmp.ne.s32.totalorder %s113, %s116
    %p125 = scmp.eq.s32.totalorder %s17, 1
    %p126 = por %p124, %p125
    %p127 = scmp.ne.s32.totalorder %s116, %s117
    %p128 = scmp.eq.s32.totalorder %s17, 0
    %p129 = por %p127, %p128
    %p130 = scmp.ne.s32.totalorder %s116, %s117
    %p131 = scmp.eq.s32.totalorder %s18, 1
    %p132 = por %p130, %p131
    %p134 = scmp.ne.s32.totalorder %s117, %s133
    %p135 = scmp.eq.s32.totalorder %s18, 0
    %p136 = por %p134, %p135
    %s138 = sadd.s32 %s137, 1
    %p141 = scmp.eq.s32.totalorder %s12, 1
    %p142 = scmp.ne.s32.totalorder %s137, %s139
    %p143 = scmp.eq.s32.totalorder %s12, 0
    %p144 = por %p142, %p143
    %p145 = scmp.ne.s32.totalorder %s137, %s139
    %p146 = scmp.eq.s32.totalorder %s17, 1
    %p147 = por %p145, %p146
    %p148 = scmp.ne.s32.totalorder %s139, %s140
    %p149 = scmp.eq.s32.totalorder %s17, 0
    %p150 = por %p148, %p149
    %p151 = scmp.ne.s32.totalorder %s139, %s140
    %p152 = scmp.eq.s32.totalorder %s18, 1
    %p153 = por %p151, %p152
    %p155 = scmp.ne.s32.totalorder %s140, %s154
    %p156 = scmp.eq.s32.totalorder %s18, 0
    %p157 = por %p155, %p156
    %s159 = sadd.s32 %s158, 1
    %p162 = scmp.eq.s32.totalorder %s12, 1
    %p163 = scmp.ne.s32.totalorder %s158, %s160
    %p164 = scmp.eq.s32.totalorder %s12, 0
    %p165 = por %p163, %p164
    %p166 = scmp.ne.s32.totalorder %s158, %s160
    %p167 = scmp.eq.s32.totalorder %s17, 1
    %p168 = por %p166, %p167
    %p169 = scmp.ne.s32.totalorder %s160, %s161
    %p170 = scmp.eq.s32.totalorder %s17, 0
    %p171 = por %p169, %p170
    %p172 = scmp.ne.s32.totalorder %s160, %s161
    %p173 = scmp.eq.s32.totalorder %s18, 1
    %p174 = por %p172, %p173
    %p176 = scmp.ne.s32.totalorder %s161, %s175
    %p177 = scmp.eq.s32.totalorder %s18, 0
    %p178 = por %p176, %p177
    %s179 = ssub.s32 %s19, %s31
    %s180 = ssub.s32 %s20, %s27
    %s181 = sor.u32 %s179, %s180
    %p182 = scmp.eq.s32.totalorder %s181, 0
    %s184 = sadd.s32 %s183, 1
    %s185 = scalar_select %p182, %s183, %s184
    %p188 = pneg %p182
    %p189 = scmp.eq.s32.totalorder %s12, 1
    %p190 = por %p188, %p189
    %p191 = scmp.ne.s32.totalorder %s183, %s186
    %p192 = scmp.eq.s32.totalorder %s12, 0
    %p193 = por %p191, %p192
    %p194 = scmp.ne.s32.totalorder %s183, %s186
    %p195 = scmp.eq.s32.totalorder %s17, 1
    %p196 = por %p194, %p195
    %p197 = scmp.ne.s32.totalorder %s186, %s187
    %p198 = scmp.eq.s32.totalorder %s17, 0
    %p199 = por %p197, %p198
    %p200 = scmp.ne.s32.totalorder %s186, %s187
    %p201 = scmp.eq.s32.totalorder %s18, 1
    %p202 = por %p200, %p201
    %p204 = scmp.ne.s32.totalorder %s187, %s203
    %p205 = scmp.eq.s32.totalorder %s18, 0
    %p206 = por %p204, %p205
    %p207 = scmp.le.s32.totalorder 1, %s12
    %p208 = scmp.lt.s32.totalorder %s12, 3
    %p209 = pnand %p207, %p208
    %p210 = pneg %p209
    // Predicated region
    $region9: #{_lambda_.3} parent=5 // pred_check
      _
    $region10: #{_lambda_.3} parent=5 // pred_check_branch
      %212 = sbr.rel (%p209) target = $region12
    $region11: #{_lambda_.3} parent=5 // pred_region
      %s213 = ssub.s32 %s12, 1
      // Predicated region
      $region13: #{_lambda_.3} parent=11 // pred_check
        %p214 = pneg %p101
      $region14: #{_lambda_.3} parent=11 // pred_check_branch
        %216 = sbr.rel (%p214) target = $region16
      $region15: #{_lambda_.3} parent=11 // pred_region
        _
      $region16: #{_lambda_.3} parent=11 // pred_fallthru
        _
      // Predicated region
      $region17: #{_lambda_.3} parent=11 // pred_check
        %p217 = pneg %p150
      $region18: #{_lambda_.3} parent=11 // pred_check_branch
        %219 = sbr.rel (%p217) target = $region20
      $region19: #{_lambda_.3} parent=11 // pred_region
        _
      $region20: #{_lambda_.3} parent=11 // pred_fallthru
        _
      // Predicated region
      $region21: #{_lambda_.3} parent=11 // pred_check
        %p220 = pneg %p171
      $region22: #{_lambda_.3} parent=11 // pred_check_branch
        %222 = sbr.rel (%p220) target = $region24
      $region23: #{_lambda_.3} parent=11 // pred_region
        _
      $region24: #{_lambda_.3} parent=11 // pred_fallthru
        _
    $region12: #{_lambda_.3} parent=5 // pred_fallthru
      _
    %p223 = scmp.lt.s32.totalorder %s12, 2
    // Predicated region
    $region25: #{_lambda_.3} parent=5 // pred_check
      %p224 = pneg %p223
    $region26: #{_lambda_.3} parent=5 // pred_check_branch
      %226 = sbr.rel (%p224) target = $region28
    $region27: #{_lambda_.3} parent=5 // pred_region
      // Predicated region
      $region29: #{_lambda_.3} parent=27 // pred_check
        %p227 = pneg %p46
      $region30: #{_lambda_.3} parent=27 // pred_check_branch
        %229 = sbr.rel (%p227) target = $region32
      $region31: #{_lambda_.3} parent=27 // pred_region
        %s230 = smul.u32 2, %s20
        %p231 = scmp.lt.s32.totalorder %s19, 1
        %s232 = scalar_select %p231, %s19, 1
        %p233 = scmp.lt.s32.totalorder %s230, 1
        %s234 = scalar_select %p233, %s230, 1
        %s235 = smul.addr %s232, 16
        %s236 = sadd.s32 %s234, %s235
        %s237 = smul.addr %s236, 4
        %s238 = scalar_lea.vmem %s0, %s237
        %s239 = smul.u32 2, %s20
      $region32: #{_lambda_.3} parent=27 // pred_fallthru
        _
      // Predicated region
      $region33: #{_lambda_.3} parent=27 // pred_check
        %p240 = pneg %p74
      $region34: #{_lambda_.3} parent=27 // pred_check_branch
        %242 = sbr.rel (%p240) target = $region36
      $region35: #{_lambda_.3} parent=27 // pred_region
        %s243 = smul.u32 2, %s20
        %p244 = scmp.lt.s32.totalorder %s19, 1
        %s245 = scalar_select %p244, %s19, 1
        %p246 = scmp.lt.s32.totalorder %s243, 1
        %s247 = scalar_select %p246, %s243, 1
        %s248 = smul.addr %s245, 8
        %s249 = sadd.s32 %s247, %s248
        %s250 = scalar_lea.vmem %s1, %s249
        %s251 = smul.u32 2, %s20
      $region36: #{_lambda_.3} parent=27 // pred_fallthru
        _
      // Predicated region
      $region37: #{_lambda_.3} parent=27 // pred_check
        %p252 = pneg %p123
      $region38: #{_lambda_.3} parent=27 // pred_check_branch
        %254 = sbr.rel (%p252) target = $region40
      $region39: #{_lambda_.3} parent=27 // pred_region
        %s255 = smul.u32 2, %s20
        %p256 = scmp.lt.s32.totalorder %s19, 1
        %s257 = scalar_select %p256, %s19, 1
        %p258 = scmp.lt.s32.totalorder %s255, 1
        %s259 = scalar_select %p258, %s255, 1
        %s260 = smul.addr %s257, 64
        %s261 = sadd.s32 %s259, %s260
        %s262 = smul.addr %s261, 4
        %s263 = scalar_lea.vmem %s3, %s262
        %s264 = smul.u32 2, %s20
      $region40: #{_lambda_.3} parent=27 // pred_fallthru
        _
    $region28: #{_lambda_.3} parent=5 // pred_fallthru
      _
    %p265 = scmp.le.s32.totalorder 1, %s12
    %p266 = scmp.lt.s32.totalorder %s12, 3
    %p267 = pnand %p265, %p266
    %p268 = pneg %p267
    // Predicated region
    $region41: #{_lambda_.3} parent=5 // pred_check
      _
    $region42: #{_lambda_.3} parent=5 // pred_check_branch
      %270 = sbr.rel (%p267) target = $region44
    $region43: #{_lambda_.3} parent=5 // pred_region
      %s271 = ssub.s32 %s12, 1
      %s272 = smul.u32 2, %s22
      %p273 = scmp.lt.s32.totalorder %s21, 1
      %s274 = scalar_select %p273, %s21, 1
      %p275 = scmp.lt.s32.totalorder %s272, 1
      %s276 = scalar_select %p275, %s272, 1
      %s277 = smul.addr %s274, 16
      %s278 = sadd.s32 %s276, %s277
      %s279 = smul.addr %s278, 4
      %s280 = scalar_lea.vmem %s0, %s279
      %p281 = pneg %p52
      %p282 = pneg %p49
      %s283 = smul.u32 2, %s22
      %p284 = scmp.lt.s32.totalorder %s21, 1
      %s285 = scalar_select %p284, %s21, 1
      %p286 = scmp.lt.s32.totalorder %s283, 1
      %s287 = scalar_select %p286, %s283, 1
      %s288 = smul.addr %s285, 8
      %s289 = sadd.s32 %s287, %s288
      %s290 = scalar_lea.vmem %s1, %s289
      %p291 = pneg %p80
      %p292 = pneg %p77
      %p293 = pneg %p101
      %p294 = pneg %p98
      %s295 = smul.u32 2, %s22
      %p296 = scmp.lt.s32.totalorder %s21, 1
      %s297 = scalar_select %p296, %s21, 1
      %p298 = scmp.lt.s32.totalorder %s295, 1
      %s299 = scalar_select %p298, %s295, 1
      %s300 = smul.addr %s297, 64
      %s301 = sadd.s32 %s299, %s300
      %s302 = smul.addr %s301, 4
      %s303 = scalar_lea.vmem %s3, %s302
      %p304 = pneg %p129
      %p305 = pneg %p126
      %p306 = pneg %p150
      %p307 = pneg %p147
      %p308 = pneg %p171
      %p309 = pneg %p168
      %p310 = pneg %p199
      %p311 = pneg %p196
      %s312 = smul.u32 2, %s22
      %p313 = scmp.lt.s32.totalorder %s21, 1
      %s314 = scalar_select %p313, %s21, 1
      %p315 = scmp.lt.s32.totalorder %s312, 1
      %s316 = scalar_select %p315, %s312, 1
      %s317 = smul.addr %s314, 4
      %s318 = sadd.s32 %s316, %s317
      %s319 = smul.addr %s318, 8
      %s320 = scalar_lea.vmem %s6, %s319
      %s321 = smul.u32 2, %s22
      %p322 = scmp.lt.s32.totalorder %s21, 1
      %s323 = scalar_select %p322, %s21, 1
      %p324 = scmp.lt.s32.totalorder %s321, 1
      %s325 = scalar_select %p324, %s321, 1
      %s326 = smul.addr %s323, 16
      %s327 = sadd.s32 %s325, %s326
      %s328 = smul.addr %s327, 4
      %s329 = scalar_lea.vmem %s0, %s328
      %s330 = smul.u32 2, %s22
      %s331 = smul.u32 2, %s22
      %p332 = scmp.lt.s32.totalorder %s21, 1
      %s333 = scalar_select %p332, %s21, 1
      %p334 = scmp.lt.s32.totalorder %s331, 1
      %s335 = scalar_select %p334, %s331, 1
      %s336 = smul.addr %s333, 8
      %s337 = sadd.s32 %s335, %s336
      %s338 = scalar_lea.vmem %s1, %s337
      %s339 = smul.u32 2, %s22
      %s340 = smul.u32 2, %s22
      %p341 = scmp.lt.s32.totalorder %s21, 1
      %s342 = scalar_select %p341, %s21, 1
      %p343 = scmp.lt.s32.totalorder %s340, 1
      %s344 = scalar_select %p343, %s340, 1
      %s345 = smul.addr %s342, 64
      %s346 = sadd.s32 %s344, %s345
      %s347 = smul.addr %s346, 4
      %s348 = scalar_lea.vmem %s3, %s347
      %s349 = smul.u32 2, %s22
      %s350 = smul.u32 2, %s22
      %p351 = scmp.lt.s32.totalorder %s21, 1
      %s352 = scalar_select %p351, %s21, 1
      %p353 = scmp.lt.s32.totalorder %s350, 1
      %s354 = scalar_select %p353, %s350, 1
      %s355 = smul.addr %s352, 4
      %s356 = sadd.s32 %s354, %s355
      %s357 = smul.addr %s356, 8
      %s358 = scalar_lea.vmem %s6, %s357
      %s359 = smul.u32 2, %s22
      %v361 = vld [vmem:[%s329] sm:$0xff]
      %v362 = vld [vmem:[%s329 + $0x8] sm:$0xff]
      %v363 = vld [vmem:[%s329 + $0x10] sm:$0xff]
      %v364 = vld [vmem:[%s329 + $0x18] sm:$0xff]
      %v365 = vld [vmem:[%s329 + $0x20] sm:$0xff]
      %v366 = vld [vmem:[%s329 + $0x28] sm:$0xff]
      %v367 = vld [vmem:[%s329 + $0x30] sm:$0xff]
      %v368 = vld [vmem:[%s329 + $0x38] sm:$0xff]
      %v369 = vunpack.c.l.bf16 %v361
      %v370 = vunpack.c.h.bf16 %v361
      %v371 = vunpack.c.l.bf16 %v362
      %v372 = vunpack.c.h.bf16 %v362
      %v373 = vunpack.c.l.bf16 %v363
      %v374 = vunpack.c.h.bf16 %v363
      %v375 = vunpack.c.l.bf16 %v364
      %v376 = vunpack.c.h.bf16 %v364
      %v377 = vunpack.c.l.bf16 %v365
      %v378 = vunpack.c.h.bf16 %v365
      %v379 = vunpack.c.l.bf16 %v366
      %v380 = vunpack.c.h.bf16 %v366
      %v381 = vunpack.c.l.bf16 %v367
      %v382 = vunpack.c.h.bf16 %v367
      %v383 = vunpack.c.l.bf16 %v368
      %v384 = vunpack.c.h.bf16 %v368
      %v385 = vld [vmem:[%s338] sm:$0x3]
      %v386 = vld [vmem:[%s338 + $0x2] sm:$0x3]
      %v387 = vld [vmem:[%s338 + $0x4] sm:$0x3]
      %v388 = vld [vmem:[%s338 + $0x6] sm:$0x3]
      %v389 = vld [vmem:[%s2] sm:$0xff]
      %v390 = vld [vmem:[%s2 + $0x8] sm:$0xff]
      %v391 = vld [vmem:[%s2 + $0x10] sm:$0xff]
      %v392 = vld [vmem:[%s2 + $0x18] sm:$0xff]
      %v393 = vld [vmem:[%s2 + $0x20] sm:$0xff]
      %v394 = vld [vmem:[%s2 + $0x28] sm:$0xff]
      %v395 = vld [vmem:[%s2 + $0x30] sm:$0xff]
      %v396 = vld [vmem:[%s2 + $0x38] sm:$0xff]
      %v401 = vlaneseq
      %v402 = vshrl.u32 %v401, 7
      %v403 = vsub.s32 0, %v402
      %v404 = vrot.slane %v385, %v403
      %v405 = vlaneseq
      %v406 = vshrl.u32 %v405, 7
      %v407 = vsub.s32 1, %v406
      %v408 = vrot.slane %v385, %v407
      %v409 = vlaneseq
      %v410 = vshrl.u32 %v409, 7
      %v411 = vsub.s32 0, %v410
      %v412 = vrot.slane %v386, %v411
      %v413 = vlaneseq
      %v414 = vshrl.u32 %v413, 7
      %v415 = vsub.s32 1, %v414
      %v416 = vrot.slane %v386, %v415
      %v417 = vlaneseq
      %v418 = vshrl.u32 %v417, 7
      %v419 = vsub.s32 0, %v418
      %v420 = vrot.slane %v387, %v419
      %v421 = vlaneseq
      %v422 = vshrl.u32 %v421, 7
      %v423 = vsub.s32 1, %v422
      %v424 = vrot.slane %v387, %v423
      %v425 = vlaneseq
      %v426 = vshrl.u32 %v425, 7
      %v427 = vsub.s32 0, %v426
      %v428 = vrot.slane %v388, %v427
      %v429 = vlaneseq
      %v430 = vshrl.u32 %v429, 7
      %v431 = vsub.s32 1, %v430
      %v432 = vrot.slane %v388, %v431
      %v441 = vmul.f32 %v369, %v404
      %v442 = vmul.f32 %v370, %v408
      %v443 = vmul.f32 %v371, %v404
      %v444 = vmul.f32 %v372, %v408
      %v445 = vmul.f32 %v373, %v412
      %v446 = vmul.f32 %v374, %v416
      %v447 = vmul.f32 %v375, %v412
      %v448 = vmul.f32 %v376, %v416
      %v449 = vmul.f32 %v377, %v420
      %v450 = vmul.f32 %v378, %v424
      %v451 = vmul.f32 %v379, %v420
      %v452 = vmul.f32 %v380, %v424
      %v453 = vmul.f32 %v381, %v428
      %v454 = vmul.f32 %v382, %v432
      %v455 = vmul.f32 %v383, %v428
      %v456 = vmul.f32 %v384, %v432
      %458 = vset.pattern.permute.xlu0 0
      %459 = vperm.xlu0 %458, %v389
      %v460 = vpop.permute.xlu0 %459
      %463 = vset.pattern.permute.xlu0 0
      %464 = vperm.xlu0 %463, %v390
      %v465 = vpop.permute.xlu0 %464
      %468 = vset.pattern.permute.xlu0 0
      %469 = vperm.xlu0 %468, %v391
      %v470 = vpop.permute.xlu0 %469
      %473 = vset.pattern.permute.xlu0 0
      %474 = vperm.xlu0 %473, %v392
      %v475 = vpop.permute.xlu0 %474
      %478 = vset.pattern.permute.xlu0 0
      %479 = vperm.xlu0 %478, %v393
      %v480 = vpop.permute.xlu0 %479
      %483 = vset.pattern.permute.xlu0 0
      %484 = vperm.xlu0 %483, %v394
      %v485 = vpop.permute.xlu0 %484
      %488 = vset.pattern.permute.xlu0 0
      %489 = vperm.xlu0 %488, %v395
      %v490 = vpop.permute.xlu0 %489
      %493 = vset.pattern.permute.xlu0 0
      %494 = vperm.xlu0 %493, %v396
      %v495 = vpop.permute.xlu0 %494
      %v497 = vadd.f32 %v441, %v460
      %v498 = vadd.f32 %v442, %v460
      %v499 = vadd.f32 %v443, %v465
      %v500 = vadd.f32 %v444, %v465
      %v501 = vadd.f32 %v445, %v470
      %v502 = vadd.f32 %v446, %v470
      %v503 = vadd.f32 %v447, %v475
      %v504 = vadd.f32 %v448, %v475
      %v505 = vadd.f32 %v449, %v480
      %v506 = vadd.f32 %v450, %v480
      %v507 = vadd.f32 %v451, %v485
      %v508 = vadd.f32 %v452, %v485
      %v509 = vadd.f32 %v453, %v490
      %v510 = vadd.f32 %v454, %v490
      %v511 = vadd.f32 %v455, %v495
      %v512 = vadd.f32 %v456, %v495
      %v513 = vmax.f32 %v497, %v499
      %v514 = vrot.slane %v513, 4
      %v515 = vmax.f32 %v513, %v514
      %v516 = vrot.slane %v515, 2
      %v517 = vmax.f32 %v515, %v516
      %v518 = vrot.slane %v517, 1
      %v519 = vmax.f32 %v517, %v518
      %v520 = vmax.f32 %v498, %v500
      %v521 = vrot.slane %v520, 4
      %v522 = vmax.f32 %v520, %v521
      %v523 = vrot.slane %v522, 2
      %v524 = vmax.f32 %v522, %v523
      %v525 = vrot.slane %v524, 1
      %v526 = vmax.f32 %v524, %v525
      %v527 = vmax.f32 %v501, %v503
      %v528 = vrot.slane %v527, 4
      %v529 = vmax.f32 %v527, %v528
      %v530 = vrot.slane %v529, 2
      %v531 = vmax.f32 %v529, %v530
      %v532 = vrot.slane %v531, 1
      %v533 = vmax.f32 %v531, %v532
      %v534 = vmax.f32 %v502, %v504
      %v535 = vrot.slane %v534, 4
      %v536 = vmax.f32 %v534, %v535
      %v537 = vrot.slane %v536, 2
      %v538 = vmax.f32 %v536, %v537
      %v539 = vrot.slane %v538, 1
      %v540 = vmax.f32 %v538, %v539
      %v541 = vmax.f32 %v505, %v507
      %v542 = vrot.slane %v541, 4
      %v543 = vmax.f32 %v541, %v542
      %v544 = vrot.slane %v543, 2
      %v545 = vmax.f32 %v543, %v544
      %v546 = vrot.slane %v545, 1
      %v547 = vmax.f32 %v545, %v546
      %v548 = vmax.f32 %v506, %v508
      %v549 = vrot.slane %v548, 4
      %v550 = vmax.f32 %v548, %v549
      %v551 = vrot.slane %v550, 2
      %v552 = vmax.f32 %v550, %v551
      %v553 = vrot.slane %v552, 1
      %v554 = vmax.f32 %v552, %v553
      %v555 = vmax.f32 %v509, %v511
      %v556 = vrot.slane %v555, 4
      %v557 = vmax.f32 %v555, %v556
      %v558 = vrot.slane %v557, 2
      %v559 = vmax.f32 %v557, %v558
      %v560 = vrot.slane %v559, 1
      %v561 = vmax.f32 %v559, %v560
      %v562 = vmax.f32 %v510, %v512
      %v563 = vrot.slane %v562, 4
      %v564 = vmax.f32 %v562, %v563
      %v565 = vrot.slane %v564, 2
      %v566 = vmax.f32 %v564, %v565
      %v567 = vrot.slane %v566, 1
      %v568 = vmax.f32 %v566, %v567
      %v569 = vsub.f32 %v497, %v519
      %v570 = vsub.f32 %v498, %v526
      %v571 = vsub.f32 %v499, %v519
      %v572 = vsub.f32 %v500, %v526
      %v573 = vsub.f32 %v501, %v533
      %v574 = vsub.f32 %v502, %v540
      %v575 = vsub.f32 %v503, %v533
      %v576 = vsub.f32 %v504, %v540
      %v577 = vsub.f32 %v505, %v547
      %v578 = vsub.f32 %v506, %v554
      %v579 = vsub.f32 %v507, %v547
      %v580 = vsub.f32 %v508, %v554
      %v581 = vsub.f32 %v509, %v561
      %v582 = vsub.f32 %v510, %v568
      %v583 = vsub.f32 %v511, %v561
      %v584 = vsub.f32 %v512, %v568
      %v585 = vmul.f32 %v569, 1.442695
      %v586 = vpow.pop %v585
      %v587 = vmul.f32 %v570, 1.442695
      %v588 = vpow.pop %v587
      %v589 = vmul.f32 %v571, 1.442695
      %v590 = vpow.pop %v589
      %v591 = vmul.f32 %v572, 1.442695
      %v592 = vpow.pop %v591
      %v593 = vmul.f32 %v573, 1.442695
      %v594 = vpow.pop %v593
      %v595 = vmul.f32 %v574, 1.442695
      %v596 = vpow.pop %v595
      %v597 = vmul.f32 %v575, 1.442695
      %v598 = vpow.pop %v597
      %v599 = vmul.f32 %v576, 1.442695
      %v600 = vpow.pop %v599
      %v601 = vmul.f32 %v577, 1.442695
      %v602 = vpow.pop %v601
      %v603 = vmul.f32 %v578, 1.442695
      %v604 = vpow.pop %v603
      %v605 = vmul.f32 %v579, 1.442695
      %v606 = vpow.pop %v605
      %v607 = vmul.f32 %v580, 1.442695
      %v608 = vpow.pop %v607
      %v609 = vmul.f32 %v581, 1.442695
      %v610 = vpow.pop %v609
      %v611 = vmul.f32 %v582, 1.442695
      %v612 = vpow.pop %v611
      %v613 = vmul.f32 %v583, 1.442695
      %v614 = vpow.pop %v613
      %v615 = vmul.f32 %v584, 1.442695
      %v616 = vpow.pop %v615
      %v617 = vadd.f32 %v586, %v590
      %v618 = vrot.slane %v617, 4
      %v619 = vadd.f32 %v617, %v618
      %v620 = vrot.slane %v619, 2
      %v621 = vadd.f32 %v619, %v620
      %v622 = vrot.slane %v621, 1
      %v623 = vadd.f32 %v621, %v622
      %v624 = vadd.f32 %v588, %v592
      %v625 = vrot.slane %v624, 4
      %v626 = vadd.f32 %v624, %v625
      %v627 = vrot.slane %v626, 2
      %v628 = vadd.f32 %v626, %v627
      %v629 = vrot.slane %v628, 1
      %v630 = vadd.f32 %v628, %v629
      %v631 = vadd.f32 %v594, %v598
      %v632 = vrot.slane %v631, 4
      %v633 = vadd.f32 %v631, %v632
      %v634 = vrot.slane %v633, 2
      %v635 = vadd.f32 %v633, %v634
      %v636 = vrot.slane %v635, 1
      %v637 = vadd.f32 %v635, %v636
      %v638 = vadd.f32 %v596, %v600
      %v639 = vrot.slane %v638, 4
      %v640 = vadd.f32 %v638, %v639
      %v641 = vrot.slane %v640, 2
      %v642 = vadd.f32 %v640, %v641
      %v643 = vrot.slane %v642, 1
      %v644 = vadd.f32 %v642, %v643
      %v645 = vadd.f32 %v602, %v606
      %v646 = vrot.slane %v645, 4
      %v647 = vadd.f32 %v645, %v646
      %v648 = vrot.slane %v647, 2
      %v649 = vadd.f32 %v647, %v648
      %v650 = vrot.slane %v649, 1
      %v651 = vadd.f32 %v649, %v650
      %v652 = vadd.f32 %v604, %v608
      %v653 = vrot.slane %v652, 4
      %v654 = vadd.f32 %v652, %v653
      %v655 = vrot.slane %v654, 2
      %v656 = vadd.f32 %v654, %v655
      %v657 = vrot.slane %v656, 1
      %v658 = vadd.f32 %v656, %v657
      %v659 = vadd.f32 %v610, %v614
      %v660 = vrot.slane %v659, 4
      %v661 = vadd.f32 %v659, %v660
      %v662 = vrot.slane %v661, 2
      %v663 = vadd.f32 %v661, %v662
      %v664 = vrot.slane %v663, 1
      %v665 = vadd.f32 %v663, %v664
      %v666 = vadd.f32 %v612, %v616
      %v667 = vrot.slane %v666, 4
      %v668 = vadd.f32 %v666, %v667
      %v669 = vrot.slane %v668, 2
      %v670 = vadd.f32 %v668, %v669
      %v671 = vrot.slane %v670, 1
      %v672 = vadd.f32 %v670, %v671
      %v673 = vrcp.pop %v623
      %v674 = vrcp.pop %v630
      %v675 = vrcp.pop %v637
      %v676 = vrcp.pop %v644
      %v677 = vrcp.pop %v651
      %v678 = vrcp.pop %v658
      %v679 = vrcp.pop %v665
      %v680 = vrcp.pop %v672
      %v681 = vmul.f32 %v623, %v673
      %v682 = vmul.f32 %v630, %v674
      %v683 = vmul.f32 %v637, %v675
      %v684 = vmul.f32 %v644, %v676
      %v685 = vmul.f32 %v651, %v677
      %v686 = vmul.f32 %v658, %v678
      %v687 = vmul.f32 %v665, %v679
      %v688 = vmul.f32 %v672, %v680
      %v689 = vsub.f32 2.0, %v681
      %v690 = vsub.f32 2.0, %v682
      %v691 = vsub.f32 2.0, %v683
      %v692 = vsub.f32 2.0, %v684
      %v693 = vsub.f32 2.0, %v685
      %v694 = vsub.f32 2.0, %v686
      %v695 = vsub.f32 2.0, %v687
      %v696 = vsub.f32 2.0, %v688
      %v697 = vmul.f32 %v673, %v689
      %v698 = vmul.f32 %v674, %v690
      %v699 = vmul.f32 %v675, %v691
      %v700 = vmul.f32 %v676, %v692
      %v701 = vmul.f32 %v677, %v693
      %v702 = vmul.f32 %v678, %v694
      %v703 = vmul.f32 %v679, %v695
      %v704 = vmul.f32 %v680, %v696
      %v705 = vmul.f32 %v586, %v697
      %v706 = vmul.f32 %v588, %v698
      %v707 = vmul.f32 %v590, %v697
      %v708 = vmul.f32 %v592, %v698
      %v709 = vmul.f32 %v594, %v699
      %v710 = vmul.f32 %v596, %v700
      %v711 = vmul.f32 %v598, %v699
      %v712 = vmul.f32 %v600, %v700
      %v713 = vmul.f32 %v602, %v701
      %v714 = vmul.f32 %v604, %v702
      %v715 = vmul.f32 %v606, %v701
      %v716 = vmul.f32 %v608, %v702
      %v717 = vmul.f32 %v610, %v703
      %v718 = vmul.f32 %v612, %v704
      %v719 = vmul.f32 %v614, %v703
      %v720 = vmul.f32 %v616, %v704
      %v721 = vld [vmem:[%s348] sm:$0x11]
      %v722 = vld [vmem:[%s348 + $0x10] sm:$0x11]
      %v723 = vld [vmem:[%s348 + $0x20] sm:$0x11]
      %v724 = vld [vmem:[%s348 + $0x30] sm:$0x11]
      %v725 = vunpack.c.l.bf16 %v721
      %v726 = vunpack.c.h.bf16 %v721
      %v727 = vunpack.c.l.bf16 %v722
      %v728 = vunpack.c.h.bf16 %v722
      %v729 = vunpack.c.l.bf16 %v723
      %v730 = vunpack.c.h.bf16 %v723
      %v731 = vunpack.c.l.bf16 %v724
      %v732 = vunpack.c.h.bf16 %v724
      %v733 = vmul.f32 %v705, %v725
      %v734 = vmul.f32 %v706, %v726
      %v735 = vmul.f32 %v709, %v727
      %v736 = vmul.f32 %v710, %v728
      %v737 = vmul.f32 %v713, %v729
      %v738 = vmul.f32 %v714, %v730
      %v739 = vmul.f32 %v717, %v731
      %v740 = vmul.f32 %v718, %v732
      %v749 = vrot.slane %v733, 1
      %v750 = vrot.slane %v734, 1
      %v751 = vrot.slane %v735, 1
      %v752 = vrot.slane %v736, 1
      %v753 = vrot.slane %v737, 1
      %v754 = vrot.slane %v738, 1
      %v755 = vrot.slane %v739, 1
      %v756 = vrot.slane %v740, 1
      %v765 = vadd.f32 %v733, %v749
      %v766 = vadd.f32 %v734, %v750
      %v767 = vadd.f32 %v735, %v751
      %v768 = vadd.f32 %v736, %v752
      %v769 = vadd.f32 %v737, %v753
      %v770 = vadd.f32 %v738, %v754
      %v771 = vadd.f32 %v739, %v755
      %v772 = vadd.f32 %v740, %v756
      %v773 = vld [vmem:[%s348] sm:$0x22]
      %v774 = vld [vmem:[%s348 + $0x10] sm:$0x22]
      %v775 = vld [vmem:[%s348 + $0x20] sm:$0x22]
      %v776 = vld [vmem:[%s348 + $0x30] sm:$0x22]
      %v777 = vunpack.c.l.bf16 %v773
      %v778 = vunpack.c.h.bf16 %v773
      %v779 = vunpack.c.l.bf16 %v774
      %v780 = vunpack.c.h.bf16 %v774
      %v781 = vunpack.c.l.bf16 %v775
      %v782 = vunpack.c.h.bf16 %v775
      %v783 = vunpack.c.l.bf16 %v776
      %v784 = vunpack.c.h.bf16 %v776
      %v785 = vmul.f32 %v705, %v777
      %v786 = vmul.f32 %v706, %v778
      %v787 = vmul.f32 %v709, %v779
      %v788 = vmul.f32 %v710, %v780
      %v789 = vmul.f32 %v713, %v781
      %v790 = vmul.f32 %v714, %v782
      %v791 = vmul.f32 %v717, %v783
      %v792 = vmul.f32 %v718, %v784
      %v801 = vrot.slane %v785, 2
      %v802 = vrot.slane %v786, 2
      %v803 = vrot.slane %v787, 2
      %v804 = vrot.slane %v788, 2
      %v805 = vrot.slane %v789, 2
      %v806 = vrot.slane %v790, 2
      %v807 = vrot.slane %v791, 2
      %v808 = vrot.slane %v792, 2
      %v817 = vadd.f32 %v765, %v801
      %v818 = vadd.f32 %v766, %v802
      %v819 = vadd.f32 %v767, %v803
      %v820 = vadd.f32 %v768, %v804
      %v821 = vadd.f32 %v769, %v805
      %v822 = vadd.f32 %v770, %v806
      %v823 = vadd.f32 %v771, %v807
      %v824 = vadd.f32 %v772, %v808
      %v825 = vrot.slane %v785, 3
      %v826 = vrot.slane %v786, 3
      %v827 = vrot.slane %v787, 3
      %v828 = vrot.slane %v788, 3
      %v829 = vrot.slane %v789, 3
      %v830 = vrot.slane %v790, 3
      %v831 = vrot.slane %v791, 3
      %v832 = vrot.slane %v792, 3
      %v841 = vadd.f32 %v817, %v825
      %v842 = vadd.f32 %v818, %v826
      %v843 = vadd.f32 %v819, %v827
      %v844 = vadd.f32 %v820, %v828
      %v845 = vadd.f32 %v821, %v829
      %v846 = vadd.f32 %v822, %v830
      %v847 = vadd.f32 %v823, %v831
      %v848 = vadd.f32 %v824, %v832
      %v849 = vld [vmem:[%s348] sm:$0x44]
      %v850 = vld [vmem:[%s348 + $0x10] sm:$0x44]
      %v851 = vld [vmem:[%s348 + $0x20] sm:$0x44]
      %v852 = vld [vmem:[%s348 + $0x30] sm:$0x44]
      %v853 = vunpack.c.l.bf16 %v849
      %v854 = vunpack.c.h.bf16 %v849
      %v855 = vunpack.c.l.bf16 %v850
      %v856 = vunpack.c.h.bf16 %v850
      %v857 = vunpack.c.l.bf16 %v851
      %v858 = vunpack.c.h.bf16 %v851
      %v859 = vunpack.c.l.bf16 %v852
      %v860 = vunpack.c.h.bf16 %v852
      %v861 = vmul.f32 %v705, %v853
      %v862 = vmul.f32 %v706, %v854
      %v863 = vmul.f32 %v709, %v855
      %v864 = vmul.f32 %v710, %v856
      %v865 = vmul.f32 %v713, %v857
      %v866 = vmul.f32 %v714, %v858
      %v867 = vmul.f32 %v717, %v859
      %v868 = vmul.f32 %v718, %v860
      %v877 = vrot.slane %v861, 4
      %v878 = vrot.slane %v862, 4
      %v879 = vrot.slane %v863, 4
      %v880 = vrot.slane %v864, 4
      %v881 = vrot.slane %v865, 4
      %v882 = vrot.slane %v866, 4
      %v883 = vrot.slane %v867, 4
      %v884 = vrot.slane %v868, 4
      %v893 = vadd.f32 %v841, %v877
      %v894 = vadd.f32 %v842, %v878
      %v895 = vadd.f32 %v843, %v879
      %v896 = vadd.f32 %v844, %v880
      %v897 = vadd.f32 %v845, %v881
      %v898 = vadd.f32 %v846, %v882
      %v899 = vadd.f32 %v847, %v883
      %v900 = vadd.f32 %v848, %v884
      %v901 = vrot.slane %v861, 5
      %v902 = vrot.slane %v862, 5
      %v903 = vrot.slane %v863, 5
      %v904 = vrot.slane %v864, 5
      %v905 = vrot.slane %v865, 5
      %v906 = vrot.slane %v866, 5
      %v907 = vrot.slane %v867, 5
      %v908 = vrot.slane %v868, 5
      %v917 = vadd.f32 %v893, %v901
      %v918 = vadd.f32 %v894, %v902
      %v919 = vadd.f32 %v895, %v903
      %v920 = vadd.f32 %v896, %v904
      %v921 = vadd.f32 %v897, %v905
      %v922 = vadd.f32 %v898, %v906
      %v923 = vadd.f32 %v899, %v907
      %v924 = vadd.f32 %v900, %v908
      %v925 = vld [vmem:[%s348] sm:$0x88]
      %v926 = vld [vmem:[%s348 + $0x10] sm:$0x88]
      %v927 = vld [vmem:[%s348 + $0x20] sm:$0x88]
      %v928 = vld [vmem:[%s348 + $0x30] sm:$0x88]
      %v929 = vunpack.c.l.bf16 %v925
      %v930 = vunpack.c.h.bf16 %v925
      %v931 = vunpack.c.l.bf16 %v926
      %v932 = vunpack.c.h.bf16 %v926
      %v933 = vunpack.c.l.bf16 %v927
      %v934 = vunpack.c.h.bf16 %v927
      %v935 = vunpack.c.l.bf16 %v928
      %v936 = vunpack.c.h.bf16 %v928
      %v937 = vmul.f32 %v705, %v929
      %v938 = vmul.f32 %v706, %v930
      %v939 = vmul.f32 %v709, %v931
      %v940 = vmul.f32 %v710, %v932
      %v941 = vmul.f32 %v713, %v933
      %v942 = vmul.f32 %v714, %v934
      %v943 = vmul.f32 %v717, %v935
      %v944 = vmul.f32 %v718, %v936
      %v953 = vrot.slane %v937, 6
      %v954 = vrot.slane %v938, 6
      %v955 = vrot.slane %v939, 6
      %v956 = vrot.slane %v940, 6
      %v957 = vrot.slane %v941, 6
      %v958 = vrot.slane %v942, 6
      %v959 = vrot.slane %v943, 6
      %v960 = vrot.slane %v944, 6
      %v969 = vadd.f32 %v917, %v953
      %v970 = vadd.f32 %v918, %v954
      %v971 = vadd.f32 %v919, %v955
      %v972 = vadd.f32 %v920, %v956
      %v973 = vadd.f32 %v921, %v957
      %v974 = vadd.f32 %v922, %v958
      %v975 = vadd.f32 %v923, %v959
      %v976 = vadd.f32 %v924, %v960
      %v977 = vrot.slane %v937, 7
      %v978 = vrot.slane %v938, 7
      %v979 = vrot.slane %v939, 7
      %v980 = vrot.slane %v940, 7
      %v981 = vrot.slane %v941, 7
      %v982 = vrot.slane %v942, 7
      %v983 = vrot.slane %v943, 7
      %v984 = vrot.slane %v944, 7
      %v993 = vadd.f32 %v969, %v977
      %v994 = vadd.f32 %v970, %v978
      %v995 = vadd.f32 %v971, %v979
      %v996 = vadd.f32 %v972, %v980
      %v997 = vadd.f32 %v973, %v981
      %v998 = vadd.f32 %v974, %v982
      %v999 = vadd.f32 %v975, %v983
      %v1000 = vadd.f32 %v976, %v984
      %v1001 = vld [vmem:[%s348 + $0x8] sm:$0x11]
      %v1002 = vld [vmem:[%s348 + $0x18] sm:$0x11]
      %v1003 = vld [vmem:[%s348 + $0x28] sm:$0x11]
      %v1004 = vld [vmem:[%s348 + $0x38] sm:$0x11]
      %v1005 = vunpack.c.l.bf16 %v1001
      %v1006 = vunpack.c.h.bf16 %v1001
      %v1007 = vunpack.c.l.bf16 %v1002
      %v1008 = vunpack.c.h.bf16 %v1002
      %v1009 = vunpack.c.l.bf16 %v1003
      %v1010 = vunpack.c.h.bf16 %v1003
      %v1011 = vunpack.c.l.bf16 %v1004
      %v1012 = vunpack.c.h.bf16 %v1004
      %v1013 = vmul.f32 %v707, %v1005
      %v1014 = vmul.f32 %v708, %v1006
      %v1015 = vmul.f32 %v711, %v1007
      %v1016 = vmul.f32 %v712, %v1008
      %v1017 = vmul.f32 %v715, %v1009
      %v1018 = vmul.f32 %v716, %v1010
      %v1019 = vmul.f32 %v719, %v1011
      %v1020 = vmul.f32 %v720, %v1012
      %v1021 = vadd.f32 %v993, %v1013
      %v1022 = vadd.f32 %v994, %v1014
      %v1023 = vadd.f32 %v995, %v1015
      %v1024 = vadd.f32 %v996, %v1016
      %v1025 = vadd.f32 %v997, %v1017
      %v1026 = vadd.f32 %v998, %v1018
      %v1027 = vadd.f32 %v999, %v1019
      %v1028 = vadd.f32 %v1000, %v1020
      %v1037 = vrot.slane %v1013, 1
      %v1038 = vrot.slane %v1014, 1
      %v1039 = vrot.slane %v1015, 1
      %v1040 = vrot.slane %v1016, 1
      %v1041 = vrot.slane %v1017, 1
      %v1042 = vrot.slane %v1018, 1
      %v1043 = vrot.slane %v1019, 1
      %v1044 = vrot.slane %v1020, 1
      %v1053 = vadd.f32 %v1021, %v1037
      %v1054 = vadd.f32 %v1022, %v1038
      %v1055 = vadd.f32 %v1023, %v1039
      %v1056 = vadd.f32 %v1024, %v1040
      %v1057 = vadd.f32 %v1025, %v1041
      %v1058 = vadd.f32 %v1026, %v1042
      %v1059 = vadd.f32 %v1027, %v1043
      %v1060 = vadd.f32 %v1028, %v1044
      %v1061 = vld [vmem:[%s348 + $0x8] sm:$0x22]
      %v1062 = vld [vmem:[%s348 + $0x18] sm:$0x22]
      %v1063 = vld [vmem:[%s348 + $0x28] sm:$0x22]
      %v1064 = vld [vmem:[%s348 + $0x38] sm:$0x22]
      %v1065 = vunpack.c.l.bf16 %v1061
      %v1066 = vunpack.c.h.bf16 %v1061
      %v1067 = vunpack.c.l.bf16 %v1062
      %v1068 = vunpack.c.h.bf16 %v1062
      %v1069 = vunpack.c.l.bf16 %v1063
      %v1070 = vunpack.c.h.bf16 %v1063
      %v1071 = vunpack.c.l.bf16 %v1064
      %v1072 = vunpack.c.h.bf16 %v1064
      %v1073 = vmul.f32 %v707, %v1065
      %v1074 = vmul.f32 %v708, %v1066
      %v1075 = vmul.f32 %v711, %v1067
      %v1076 = vmul.f32 %v712, %v1068
      %v1077 = vmul.f32 %v715, %v1069
      %v1078 = vmul.f32 %v716, %v1070
      %v1079 = vmul.f32 %v719, %v1071
      %v1080 = vmul.f32 %v720, %v1072
      %v1089 = vrot.slane %v1073, 2
      %v1090 = vrot.slane %v1074, 2
      %v1091 = vrot.slane %v1075, 2
      %v1092 = vrot.slane %v1076, 2
      %v1093 = vrot.slane %v1077, 2
      %v1094 = vrot.slane %v1078, 2
      %v1095 = vrot.slane %v1079, 2
      %v1096 = vrot.slane %v1080, 2
      %v1105 = vadd.f32 %v1053, %v1089
      %v1106 = vadd.f32 %v1054, %v1090
      %v1107 = vadd.f32 %v1055, %v1091
      %v1108 = vadd.f32 %v1056, %v1092
      %v1109 = vadd.f32 %v1057, %v1093
      %v1110 = vadd.f32 %v1058, %v1094
      %v1111 = vadd.f32 %v1059, %v1095
      %v1112 = vadd.f32 %v1060, %v1096
      %v1113 = vrot.slane %v1073, 3
      %v1114 = vrot.slane %v1074, 3
      %v1115 = vrot.slane %v1075, 3
      %v1116 = vrot.slane %v1076, 3
      %v1117 = vrot.slane %v1077, 3
      %v1118 = vrot.slane %v1078, 3
      %v1119 = vrot.slane %v1079, 3
      %v1120 = vrot.slane %v1080, 3
      %v1129 = vadd.f32 %v1105, %v1113
      %v1130 = vadd.f32 %v1106, %v1114
      %v1131 = vadd.f32 %v1107, %v1115
      %v1132 = vadd.f32 %v1108, %v1116
      %v1133 = vadd.f32 %v1109, %v1117
      %v1134 = vadd.f32 %v1110, %v1118
      %v1135 = vadd.f32 %v1111, %v1119
      %v1136 = vadd.f32 %v1112, %v1120
      %v1137 = vld [vmem:[%s348 + $0x8] sm:$0x44]
      %v1138 = vld [vmem:[%s348 + $0x18] sm:$0x44]
      %v1139 = vld [vmem:[%s348 + $0x28] sm:$0x44]
      %v1140 = vld [vmem:[%s348 + $0x38] sm:$0x44]
      %v1141 = vunpack.c.l.bf16 %v1137
      %v1142 = vunpack.c.h.bf16 %v1137
      %v1143 = vunpack.c.l.bf16 %v1138
      %v1144 = vunpack.c.h.bf16 %v1138
      %v1145 = vunpack.c.l.bf16 %v1139
      %v1146 = vunpack.c.h.bf16 %v1139
      %v1147 = vunpack.c.l.bf16 %v1140
      %v1148 = vunpack.c.h.bf16 %v1140
      %v1149 = vmul.f32 %v707, %v1141
      %v1150 = vmul.f32 %v708, %v1142
      %v1151 = vmul.f32 %v711, %v1143
      %v1152 = vmul.f32 %v712, %v1144
      %v1153 = vmul.f32 %v715, %v1145
      %v1154 = vmul.f32 %v716, %v1146
      %v1155 = vmul.f32 %v719, %v1147
      %v1156 = vmul.f32 %v720, %v1148
      %v1165 = vrot.slane %v1149, 4
      %v1166 = vrot.slane %v1150, 4
      %v1167 = vrot.slane %v1151, 4
      %v1168 = vrot.slane %v1152, 4
      %v1169 = vrot.slane %v1153, 4
      %v1170 = vrot.slane %v1154, 4
      %v1171 = vrot.slane %v1155, 4
      %v1172 = vrot.slane %v1156, 4
      %v1181 = vadd.f32 %v1129, %v1165
      %v1182 = vadd.f32 %v1130, %v1166
      %v1183 = vadd.f32 %v1131, %v1167
      %v1184 = vadd.f32 %v1132, %v1168
      %v1185 = vadd.f32 %v1133, %v1169
      %v1186 = vadd.f32 %v1134, %v1170
      %v1187 = vadd.f32 %v1135, %v1171
      %v1188 = vadd.f32 %v1136, %v1172
      %v1189 = vrot.slane %v1149, 5
      %v1190 = vrot.slane %v1150, 5
      %v1191 = vrot.slane %v1151, 5
      %v1192 = vrot.slane %v1152, 5
      %v1193 = vrot.slane %v1153, 5
      %v1194 = vrot.slane %v1154, 5
      %v1195 = vrot.slane %v1155, 5
      %v1196 = vrot.slane %v1156, 5
      %v1205 = vadd.f32 %v1181, %v1189
      %v1206 = vadd.f32 %v1182, %v1190
      %v1207 = vadd.f32 %v1183, %v1191
      %v1208 = vadd.f32 %v1184, %v1192
      %v1209 = vadd.f32 %v1185, %v1193
      %v1210 = vadd.f32 %v1186, %v1194
      %v1211 = vadd.f32 %v1187, %v1195
      %v1212 = vadd.f32 %v1188, %v1196
      %v1213 = vld [vmem:[%s348 + $0x8] sm:$0x88]
      %v1214 = vld [vmem:[%s348 + $0x18] sm:$0x88]
      %v1215 = vld [vmem:[%s348 + $0x28] sm:$0x88]
      %v1216 = vld [vmem:[%s348 + $0x38] sm:$0x88]
      %v1217 = vunpack.c.l.bf16 %v1213
      %v1218 = vunpack.c.h.bf16 %v1213
      %v1219 = vunpack.c.l.bf16 %v1214
      %v1220 = vunpack.c.h.bf16 %v1214
      %v1221 = vunpack.c.l.bf16 %v1215
      %v1222 = vunpack.c.h.bf16 %v1215
      %v1223 = vunpack.c.l.bf16 %v1216
      %v1224 = vunpack.c.h.bf16 %v1216
      %v1225 = vmul.f32 %v707, %v1217
      %v1226 = vmul.f32 %v708, %v1218
      %v1227 = vmul.f32 %v711, %v1219
      %v1228 = vmul.f32 %v712, %v1220
      %v1229 = vmul.f32 %v715, %v1221
      %v1230 = vmul.f32 %v716, %v1222
      %v1231 = vmul.f32 %v719, %v1223
      %v1232 = vmul.f32 %v720, %v1224
      %v1241 = vrot.slane %v1225, 6
      %v1242 = vrot.slane %v1226, 6
      %v1243 = vrot.slane %v1227, 6
      %v1244 = vrot.slane %v1228, 6
      %v1245 = vrot.slane %v1229, 6
      %v1246 = vrot.slane %v1230, 6
      %v1247 = vrot.slane %v1231, 6
      %v1248 = vrot.slane %v1232, 6
      %v1257 = vadd.f32 %v1205, %v1241
      %v1258 = vadd.f32 %v1206, %v1242
      %v1259 = vadd.f32 %v1207, %v1243
      %v1260 = vadd.f32 %v1208, %v1244
      %v1261 = vadd.f32 %v1209, %v1245
      %v1262 = vadd.f32 %v1210, %v1246
      %v1263 = vadd.f32 %v1211, %v1247
      %v1264 = vadd.f32 %v1212, %v1248
      %v1265 = vrot.slane %v1225, 7
      %v1266 = vrot.slane %v1226, 7
      %v1267 = vrot.slane %v1227, 7
      %v1268 = vrot.slane %v1228, 7
      %v1269 = vrot.slane %v1229, 7
      %v1270 = vrot.slane %v1230, 7
      %v1271 = vrot.slane %v1231, 7
      %v1272 = vrot.slane %v1232, 7
      %v1281 = vadd.f32 %v1257, %v1265
      %v1282 = vadd.f32 %v1258, %v1266
      %v1283 = vadd.f32 %v1259, %v1267
      %v1284 = vadd.f32 %v1260, %v1268
      %v1285 = vadd.f32 %v1261, %v1269
      %v1286 = vadd.f32 %v1262, %v1270
      %v1287 = vadd.f32 %v1263, %v1271
      %v1288 = vadd.f32 %v1264, %v1272
      %v1297 = vrot.slane %v1283, 7
      %vm1298 = vcmask 1041409
      %v1299 = vsel %vm1298, %v1297, %v1281
      %v1300 = vrot.slane %v1285, 6
      %vm1301 = vcmask 1042434
      %v1302 = vsel %vm1301, %v1300, %v1299
      %v1303 = vrot.slane %v1287, 5
      %vm1304 = vcmask 1043459
      %v1305 = vsel %vm1304, %v1303, %v1302
      %v1306 = vrot.slane %v1284, 7
      %v1307 = vsel %vm1298, %v1306, %v1282
      %v1308 = vrot.slane %v1286, 6
      %v1309 = vsel %vm1301, %v1308, %v1307
      %v1310 = vrot.slane %v1288, 5
      %v1311 = vsel %vm1304, %v1310, %v1309
      %1314 = vst [vmem:[#allocation2] sm:$0xf] %v1305
      %1315 = vst [vmem:[#allocation2 + $0x8] sm:$0xf] %v1311
      %s1316 = scalar_lea.vmem %s348, 64
      %v1317 = vld [vmem:[%s1316] sm:$0x11]
      %v1318 = vld [vmem:[%s1316 + $0x10] sm:$0x11]
      %v1319 = vld [vmem:[%s1316 + $0x20] sm:$0x11]
      %v1320 = vld [vmem:[%s1316 + $0x30] sm:$0x11]
      %v1321 = vunpack.c.l.bf16 %v1317
      %v1322 = vunpack.c.h.bf16 %v1317
      %v1323 = vunpack.c.l.bf16 %v1318
      %v1324 = vunpack.c.h.bf16 %v1318
      %v1325 = vunpack.c.l.bf16 %v1319
      %v1326 = vunpack.c.h.bf16 %v1319
      %v1327 = vunpack.c.l.bf16 %v1320
      %v1328 = vunpack.c.h.bf16 %v1320
      %v1329 = vmul.f32 %v705, %v1321
      %v1330 = vmul.f32 %v706, %v1322
      %v1331 = vmul.f32 %v709, %v1323
      %v1332 = vmul.f32 %v710, %v1324
      %v1333 = vmul.f32 %v713, %v1325
      %v1334 = vmul.f32 %v714, %v1326
      %v1335 = vmul.f32 %v717, %v1327
      %v1336 = vmul.f32 %v718, %v1328
      %v1345 = vrot.slane %v1329, 1
      %v1346 = vrot.slane %v1330, 1
      %v1347 = vrot.slane %v1331, 1
      %v1348 = vrot.slane %v1332, 1
      %v1349 = vrot.slane %v1333, 1
      %v1350 = vrot.slane %v1334, 1
      %v1351 = vrot.slane %v1335, 1
      %v1352 = vrot.slane %v1336, 1
      %v1361 = vadd.f32 %v1329, %v1345
      %v1362 = vadd.f32 %v1330, %v1346
      %v1363 = vadd.f32 %v1331, %v1347
      %v1364 = vadd.f32 %v1332, %v1348
      %v1365 = vadd.f32 %v1333, %v1349
      %v1366 = vadd.f32 %v1334, %v1350
      %v1367 = vadd.f32 %v1335, %v1351
      %v1368 = vadd.f32 %v1336, %v1352
      %v1369 = vld [vmem:[%s1316] sm:$0x22]
      %v1370 = vld [vmem:[%s1316 + $0x10] sm:$0x22]
      %v1371 = vld [vmem:[%s1316 + $0x20] sm:$0x22]
      %v1372 = vld [vmem:[%s1316 + $0x30] sm:$0x22]
      %v1373 = vunpack.c.l.bf16 %v1369
      %v1374 = vunpack.c.h.bf16 %v1369
      %v1375 = vunpack.c.l.bf16 %v1370
      %v1376 = vunpack.c.h.bf16 %v1370
      %v1377 = vunpack.c.l.bf16 %v1371
      %v1378 = vunpack.c.h.bf16 %v1371
      %v1379 = vunpack.c.l.bf16 %v1372
      %v1380 = vunpack.c.h.bf16 %v1372
      %v1381 = vmul.f32 %v705, %v1373
      %v1382 = vmul.f32 %v706, %v1374
      %v1383 = vmul.f32 %v709, %v1375
      %v1384 = vmul.f32 %v710, %v1376
      %v1385 = vmul.f32 %v713, %v1377
      %v1386 = vmul.f32 %v714, %v1378
      %v1387 = vmul.f32 %v717, %v1379
      %v1388 = vmul.f32 %v718, %v1380
      %v1397 = vrot.slane %v1381, 2
      %v1398 = vrot.slane %v1382, 2
      %v1399 = vrot.slane %v1383, 2
      %v1400 = vrot.slane %v1384, 2
      %v1401 = vrot.slane %v1385, 2
      %v1402 = vrot.slane %v1386, 2
      %v1403 = vrot.slane %v1387, 2
      %v1404 = vrot.slane %v1388, 2
      %v1413 = vadd.f32 %v1361, %v1397
      %v1414 = vadd.f32 %v1362, %v1398
      %v1415 = vadd.f32 %v1363, %v1399
      %v1416 = vadd.f32 %v1364, %v1400
      %v1417 = vadd.f32 %v1365, %v1401
      %v1418 = vadd.f32 %v1366, %v1402
      %v1419 = vadd.f32 %v1367, %v1403
      %v1420 = vadd.f32 %v1368, %v1404
      %v1421 = vrot.slane %v1381, 3
      %v1422 = vrot.slane %v1382, 3
      %v1423 = vrot.slane %v1383, 3
      %v1424 = vrot.slane %v1384, 3
      %v1425 = vrot.slane %v1385, 3
      %v1426 = vrot.slane %v1386, 3
      %v1427 = vrot.slane %v1387, 3
      %v1428 = vrot.slane %v1388, 3
      %v1437 = vadd.f32 %v1413, %v1421
      %v1438 = vadd.f32 %v1414, %v1422
      %v1439 = vadd.f32 %v1415, %v1423
      %v1440 = vadd.f32 %v1416, %v1424
      %v1441 = vadd.f32 %v1417, %v1425
      %v1442 = vadd.f32 %v1418, %v1426
      %v1443 = vadd.f32 %v1419, %v1427
      %v1444 = vadd.f32 %v1420, %v1428
      %v1445 = vld [vmem:[%s1316] sm:$0x44]
      %v1446 = vld [vmem:[%s1316 + $0x10] sm:$0x44]
      %v1447 = vld [vmem:[%s1316 + $0x20] sm:$0x44]
      %v1448 = vld [vmem:[%s1316 + $0x30] sm:$0x44]
      %v1449 = vunpack.c.l.bf16 %v1445
      %v1450 = vunpack.c.h.bf16 %v1445
      %v1451 = vunpack.c.l.bf16 %v1446
      %v1452 = vunpack.c.h.bf16 %v1446
      %v1453 = vunpack.c.l.bf16 %v1447
      %v1454 = vunpack.c.h.bf16 %v1447
      %v1455 = vunpack.c.l.bf16 %v1448
      %v1456 = vunpack.c.h.bf16 %v1448
      %v1457 = vmul.f32 %v705, %v1449
      %v1458 = vmul.f32 %v706, %v1450
      %v1459 = vmul.f32 %v709, %v1451
      %v1460 = vmul.f32 %v710, %v1452
      %v1461 = vmul.f32 %v713, %v1453
      %v1462 = vmul.f32 %v714, %v1454
      %v1463 = vmul.f32 %v717, %v1455
      %v1464 = vmul.f32 %v718, %v1456
      %v1473 = vrot.slane %v1457, 4
      %v1474 = vrot.slane %v1458, 4
      %v1475 = vrot.slane %v1459, 4
      %v1476 = vrot.slane %v1460, 4
      %v1477 = vrot.slane %v1461, 4
      %v1478 = vrot.slane %v1462, 4
      %v1479 = vrot.slane %v1463, 4
      %v1480 = vrot.slane %v1464, 4
      %v1489 = vadd.f32 %v1437, %v1473
      %v1490 = vadd.f32 %v1438, %v1474
      %v1491 = vadd.f32 %v1439, %v1475
      %v1492 = vadd.f32 %v1440, %v1476
      %v1493 = vadd.f32 %v1441, %v1477
      %v1494 = vadd.f32 %v1442, %v1478
      %v1495 = vadd.f32 %v1443, %v1479
      %v1496 = vadd.f32 %v1444, %v1480
      %v1497 = vrot.slane %v1457, 5
      %v1498 = vrot.slane %v1458, 5
      %v1499 = vrot.slane %v1459, 5
      %v1500 = vrot.slane %v1460, 5
      %v1501 = vrot.slane %v1461, 5
      %v1502 = vrot.slane %v1462, 5
      %v1503 = vrot.slane %v1463, 5
      %v1504 = vrot.slane %v1464, 5
      %v1513 = vadd.f32 %v1489, %v1497
      %v1514 = vadd.f32 %v1490, %v1498
      %v1515 = vadd.f32 %v1491, %v1499
      %v1516 = vadd.f32 %v1492, %v1500
      %v1517 = vadd.f32 %v1493, %v1501
      %v1518 = vadd.f32 %v1494, %v1502
      %v1519 = vadd.f32 %v1495, %v1503
      %v1520 = vadd.f32 %v1496, %v1504
      %v1521 = vld [vmem:[%s1316] sm:$0x88]
      %v1522 = vld [vmem:[%s1316 + $0x10] sm:$0x88]
      %v1523 = vld [vmem:[%s1316 + $0x20] sm:$0x88]
      %v1524 = vld [vmem:[%s1316 + $0x30] sm:$0x88]
      %v1525 = vunpack.c.l.bf16 %v1521
      %v1526 = vunpack.c.h.bf16 %v1521
      %v1527 = vunpack.c.l.bf16 %v1522
      %v1528 = vunpack.c.h.bf16 %v1522
      %v1529 = vunpack.c.l.bf16 %v1523
      %v1530 = vunpack.c.h.bf16 %v1523
      %v1531 = vunpack.c.l.bf16 %v1524
      %v1532 = vunpack.c.h.bf16 %v1524
      %v1533 = vmul.f32 %v705, %v1525
      %v1534 = vmul.f32 %v706, %v1526
      %v1535 = vmul.f32 %v709, %v1527
      %v1536 = vmul.f32 %v710, %v1528
      %v1537 = vmul.f32 %v713, %v1529
      %v1538 = vmul.f32 %v714, %v1530
      %v1539 = vmul.f32 %v717, %v1531
      %v1540 = vmul.f32 %v718, %v1532
      %v1549 = vrot.slane %v1533, 6
      %v1550 = vrot.slane %v1534, 6
      %v1551 = vrot.slane %v1535, 6
      %v1552 = vrot.slane %v1536, 6
      %v1553 = vrot.slane %v1537, 6
      %v1554 = vrot.slane %v1538, 6
      %v1555 = vrot.slane %v1539, 6
      %v1556 = vrot.slane %v1540, 6
      %v1565 = vadd.f32 %v1513, %v1549
      %v1566 = vadd.f32 %v1514, %v1550
      %v1567 = vadd.f32 %v1515, %v1551
      %v1568 = vadd.f32 %v1516, %v1552
      %v1569 = vadd.f32 %v1517, %v1553
      %v1570 = vadd.f32 %v1518, %v1554
      %v1571 = vadd.f32 %v1519, %v1555
      %v1572 = vadd.f32 %v1520, %v1556
      %v1573 = vrot.slane %v1533, 7
      %v1574 = vrot.slane %v1534, 7
      %v1575 = vrot.slane %v1535, 7
      %v1576 = vrot.slane %v1536, 7
      %v1577 = vrot.slane %v1537, 7
      %v1578 = vrot.slane %v1538, 7
      %v1579 = vrot.slane %v1539, 7
      %v1580 = vrot.slane %v1540, 7
      %v1589 = vadd.f32 %v1565, %v1573
      %v1590 = vadd.f32 %v1566, %v1574
      %v1591 = vadd.f32 %v1567, %v1575
      %v1592 = vadd.f32 %v1568, %v1576
      %v1593 = vadd.f32 %v1569, %v1577
      %v1594 = vadd.f32 %v1570, %v1578
      %v1595 = vadd.f32 %v1571, %v1579
      %v1596 = vadd.f32 %v1572, %v1580
      %v1597 = vld [vmem:[%s1316 + $0x8] sm:$0x11]
      %v1598 = vld [vmem:[%s1316 + $0x18] sm:$0x11]
      %v1599 = vld [vmem:[%s1316 + $0x28] sm:$0x11]
      %v1600 = vld [vmem:[%s1316 + $0x38] sm:$0x11]
      %v1601 = vunpack.c.l.bf16 %v1597
      %v1602 = vunpack.c.h.bf16 %v1597
      %v1603 = vunpack.c.l.bf16 %v1598
      %v1604 = vunpack.c.h.bf16 %v1598
      %v1605 = vunpack.c.l.bf16 %v1599
      %v1606 = vunpack.c.h.bf16 %v1599
      %v1607 = vunpack.c.l.bf16 %v1600
      %v1608 = vunpack.c.h.bf16 %v1600
      %v1609 = vmul.f32 %v707, %v1601
      %v1610 = vmul.f32 %v708, %v1602
      %v1611 = vmul.f32 %v711, %v1603
      %v1612 = vmul.f32 %v712, %v1604
      %v1613 = vmul.f32 %v715, %v1605
      %v1614 = vmul.f32 %v716, %v1606
      %v1615 = vmul.f32 %v719, %v1607
      %v1616 = vmul.f32 %v720, %v1608
      %v1617 = vadd.f32 %v1589, %v1609
      %v1618 = vadd.f32 %v1590, %v1610
      %v1619 = vadd.f32 %v1591, %v1611
      %v1620 = vadd.f32 %v1592, %v1612
      %v1621 = vadd.f32 %v1593, %v1613
      %v1622 = vadd.f32 %v1594, %v1614
      %v1623 = vadd.f32 %v1595, %v1615
      %v1624 = vadd.f32 %v1596, %v1616
      %v1633 = vrot.slane %v1609, 1
      %v1634 = vrot.slane %v1610, 1
      %v1635 = vrot.slane %v1611, 1
      %v1636 = vrot.slane %v1612, 1
      %v1637 = vrot.slane %v1613, 1
      %v1638 = vrot.slane %v1614, 1
      %v1639 = vrot.slane %v1615, 1
      %v1640 = vrot.slane %v1616, 1
      %v1649 = vadd.f32 %v1617, %v1633
      %v1650 = vadd.f32 %v1618, %v1634
      %v1651 = vadd.f32 %v1619, %v1635
      %v1652 = vadd.f32 %v1620, %v1636
      %v1653 = vadd.f32 %v1621, %v1637
      %v1654 = vadd.f32 %v1622, %v1638
      %v1655 = vadd.f32 %v1623, %v1639
      %v1656 = vadd.f32 %v1624, %v1640
      %v1657 = vld [vmem:[%s1316 + $0x8] sm:$0x22]
      %v1658 = vld [vmem:[%s1316 + $0x18] sm:$0x22]
      %v1659 = vld [vmem:[%s1316 + $0x28] sm:$0x22]
      %v1660 = vld [vmem:[%s1316 + $0x38] sm:$0x22]
      %v1661 = vunpack.c.l.bf16 %v1657
      %v1662 = vunpack.c.h.bf16 %v1657
      %v1663 = vunpack.c.l.bf16 %v1658
      %v1664 = vunpack.c.h.bf16 %v1658
      %v1665 = vunpack.c.l.bf16 %v1659
      %v1666 = vunpack.c.h.bf16 %v1659
      %v1667 = vunpack.c.l.bf16 %v1660
      %v1668 = vunpack.c.h.bf16 %v1660
      %v1669 = vmul.f32 %v707, %v1661
      %v1670 = vmul.f32 %v708, %v1662
      %v1671 = vmul.f32 %v711, %v1663
      %v1672 = vmul.f32 %v712, %v1664
      %v1673 = vmul.f32 %v715, %v1665
      %v1674 = vmul.f32 %v716, %v1666
      %v1675 = vmul.f32 %v719, %v1667
      %v1676 = vmul.f32 %v720, %v1668
      %v1685 = vrot.slane %v1669, 2
      %v1686 = vrot.slane %v1670, 2
      %v1687 = vrot.slane %v1671, 2
      %v1688 = vrot.slane %v1672, 2
      %v1689 = vrot.slane %v1673, 2
      %v1690 = vrot.slane %v1674, 2
      %v1691 = vrot.slane %v1675, 2
      %v1692 = vrot.slane %v1676, 2
      %v1701 = vadd.f32 %v1649, %v1685
      %v1702 = vadd.f32 %v1650, %v1686
      %v1703 = vadd.f32 %v1651, %v1687
      %v1704 = vadd.f32 %v1652, %v1688
      %v1705 = vadd.f32 %v1653, %v1689
      %v1706 = vadd.f32 %v1654, %v1690
      %v1707 = vadd.f32 %v1655, %v1691
      %v1708 = vadd.f32 %v1656, %v1692
      %v1709 = vrot.slane %v1669, 3
      %v1710 = vrot.slane %v1670, 3
      %v1711 = vrot.slane %v1671, 3
      %v1712 = vrot.slane %v1672, 3
      %v1713 = vrot.slane %v1673, 3
      %v1714 = vrot.slane %v1674, 3
      %v1715 = vrot.slane %v1675, 3
      %v1716 = vrot.slane %v1676, 3
      %v1725 = vadd.f32 %v1701, %v1709
      %v1726 = vadd.f32 %v1702, %v1710
      %v1727 = vadd.f32 %v1703, %v1711
      %v1728 = vadd.f32 %v1704, %v1712
      %v1729 = vadd.f32 %v1705, %v1713
      %v1730 = vadd.f32 %v1706, %v1714
      %v1731 = vadd.f32 %v1707, %v1715
      %v1732 = vadd.f32 %v1708, %v1716
      %v1733 = vld [vmem:[%s1316 + $0x8] sm:$0x44]
      %v1734 = vld [vmem:[%s1316 + $0x18] sm:$0x44]
      %v1735 = vld [vmem:[%s1316 + $0x28] sm:$0x44]
      %v1736 = vld [vmem:[%s1316 + $0x38] sm:$0x44]
      %v1737 = vunpack.c.l.bf16 %v1733
      %v1738 = vunpack.c.h.bf16 %v1733
      %v1739 = vunpack.c.l.bf16 %v1734
      %v1740 = vunpack.c.h.bf16 %v1734
      %v1741 = vunpack.c.l.bf16 %v1735
      %v1742 = vunpack.c.h.bf16 %v1735
      %v1743 = vunpack.c.l.bf16 %v1736
      %v1744 = vunpack.c.h.bf16 %v1736
      %v1745 = vmul.f32 %v707, %v1737
      %v1746 = vmul.f32 %v708, %v1738
      %v1747 = vmul.f32 %v711, %v1739
      %v1748 = vmul.f32 %v712, %v1740
      %v1749 = vmul.f32 %v715, %v1741
      %v1750 = vmul.f32 %v716, %v1742
      %v1751 = vmul.f32 %v719, %v1743
      %v1752 = vmul.f32 %v720, %v1744
      %v1761 = vrot.slane %v1745, 4
      %v1762 = vrot.slane %v1746, 4
      %v1763 = vrot.slane %v1747, 4
      %v1764 = vrot.slane %v1748, 4
      %v1765 = vrot.slane %v1749, 4
      %v1766 = vrot.slane %v1750, 4
      %v1767 = vrot.slane %v1751, 4
      %v1768 = vrot.slane %v1752, 4
      %v1777 = vadd.f32 %v1725, %v1761
      %v1778 = vadd.f32 %v1726, %v1762
      %v1779 = vadd.f32 %v1727, %v1763
      %v1780 = vadd.f32 %v1728, %v1764
      %v1781 = vadd.f32 %v1729, %v1765
      %v1782 = vadd.f32 %v1730, %v1766
      %v1783 = vadd.f32 %v1731, %v1767
      %v1784 = vadd.f32 %v1732, %v1768
      %v1785 = vrot.slane %v1745, 5
      %v1786 = vrot.slane %v1746, 5
      %v1787 = vrot.slane %v1747, 5
      %v1788 = vrot.slane %v1748, 5
      %v1789 = vrot.slane %v1749, 5
      %v1790 = vrot.slane %v1750, 5
      %v1791 = vrot.slane %v1751, 5
      %v1792 = vrot.slane %v1752, 5
      %v1801 = vadd.f32 %v1777, %v1785
      %v1802 = vadd.f32 %v1778, %v1786
      %v1803 = vadd.f32 %v1779, %v1787
      %v1804 = vadd.f32 %v1780, %v1788
      %v1805 = vadd.f32 %v1781, %v1789
      %v1806 = vadd.f32 %v1782, %v1790
      %v1807 = vadd.f32 %v1783, %v1791
      %v1808 = vadd.f32 %v1784, %v1792
      %v1809 = vld [vmem:[%s1316 + $0x8] sm:$0x88]
      %v1810 = vld [vmem:[%s1316 + $0x18] sm:$0x88]
      %v1811 = vld [vmem:[%s1316 + $0x28] sm:$0x88]
      %v1812 = vld [vmem:[%s1316 + $0x38] sm:$0x88]
      %v1813 = vunpack.c.l.bf16 %v1809
      %v1814 = vunpack.c.h.bf16 %v1809
      %v1815 = vunpack.c.l.bf16 %v1810
      %v1816 = vunpack.c.h.bf16 %v1810
      %v1817 = vunpack.c.l.bf16 %v1811
      %v1818 = vunpack.c.h.bf16 %v1811
      %v1819 = vunpack.c.l.bf16 %v1812
      %v1820 = vunpack.c.h.bf16 %v1812
      %v1821 = vmul.f32 %v707, %v1813
      %v1822 = vmul.f32 %v708, %v1814
      %v1823 = vmul.f32 %v711, %v1815
      %v1824 = vmul.f32 %v712, %v1816
      %v1825 = vmul.f32 %v715, %v1817
      %v1826 = vmul.f32 %v716, %v1818
      %v1827 = vmul.f32 %v719, %v1819
      %v1828 = vmul.f32 %v720, %v1820
      %v1837 = vrot.slane %v1821, 6
      %v1838 = vrot.slane %v1822, 6
      %v1839 = vrot.slane %v1823, 6
      %v1840 = vrot.slane %v1824, 6
      %v1841 = vrot.slane %v1825, 6
      %v1842 = vrot.slane %v1826, 6
      %v1843 = vrot.slane %v1827, 6
      %v1844 = vrot.slane %v1828, 6
      %v1853 = vadd.f32 %v1801, %v1837
      %v1854 = vadd.f32 %v1802, %v1838
      %v1855 = vadd.f32 %v1803, %v1839
      %v1856 = vadd.f32 %v1804, %v1840
      %v1857 = vadd.f32 %v1805, %v1841
      %v1858 = vadd.f32 %v1806, %v1842
      %v1859 = vadd.f32 %v1807, %v1843
      %v1860 = vadd.f32 %v1808, %v1844
      %v1861 = vrot.slane %v1821, 7
      %v1862 = vrot.slane %v1822, 7
      %v1863 = vrot.slane %v1823, 7
      %v1864 = vrot.slane %v1824, 7
      %v1865 = vrot.slane %v1825, 7
      %v1866 = vrot.slane %v1826, 7
      %v1867 = vrot.slane %v1827, 7
      %v1868 = vrot.slane %v1828, 7
      %v1877 = vadd.f32 %v1853, %v1861
      %v1878 = vadd.f32 %v1854, %v1862
      %v1879 = vadd.f32 %v1855, %v1863
      %v1880 = vadd.f32 %v1856, %v1864
      %v1881 = vadd.f32 %v1857, %v1865
      %v1882 = vadd.f32 %v1858, %v1866
      %v1883 = vadd.f32 %v1859, %v1867
      %v1884 = vadd.f32 %v1860, %v1868
      %v1893 = vrot.slane %v1877, 4
      %v1894 = vrot.slane %v1879, 3
      %vm1895 = vcmask 1045509
      %v1896 = vsel %vm1895, %v1894, %v1893
      %v1897 = vrot.slane %v1881, 2
      %vm1898 = vcmask 1046534
      %v1899 = vsel %vm1898, %v1897, %v1896
      %v1900 = vrot.slane %v1883, 1
      %vm1901 = vcmask 1047559
      %v1902 = vsel %vm1901, %v1900, %v1899
      %v1903 = vrot.slane %v1878, 4
      %v1904 = vrot.slane %v1880, 3
      %v1905 = vsel %vm1895, %v1904, %v1903
      %v1906 = vrot.slane %v1882, 2
      %v1907 = vsel %vm1898, %v1906, %v1905
      %v1908 = vrot.slane %v1884, 1
      %v1909 = vsel %vm1901, %v1908, %v1907
      %1912 = vst [vmem:[#allocation2] sm:$0xf0] %v1902
      %1913 = vst [vmem:[#allocation2 + $0x8] sm:$0xf0] %v1909
      %s1914 = scalar_lea.vmem %s348, 128
      %v1915 = vld [vmem:[%s1914] sm:$0x11]
      %v1916 = vld [vmem:[%s1914 + $0x10] sm:$0x11]
      %v1917 = vld [vmem:[%s1914 + $0x20] sm:$0x11]
      %v1918 = vld [vmem:[%s1914 + $0x30] sm:$0x11]
      %v1919 = vunpack.c.l.bf16 %v1915
      %v1920 = vunpack.c.h.bf16 %v1915
      %v1921 = vunpack.c.l.bf16 %v1916
      %v1922 = vunpack.c.h.bf16 %v1916
      %v1923 = vunpack.c.l.bf16 %v1917
      %v1924 = vunpack.c.h.bf16 %v1917
      %v1925 = vunpack.c.l.bf16 %v1918
      %v1926 = vunpack.c.h.bf16 %v1918
      %v1927 = vmul.f32 %v705, %v1919
      %v1928 = vmul.f32 %v706, %v1920
      %v1929 = vmul.f32 %v709, %v1921
      %v1930 = vmul.f32 %v710, %v1922
      %v1931 = vmul.f32 %v713, %v1923
      %v1932 = vmul.f32 %v714, %v1924
      %v1933 = vmul.f32 %v717, %v1925
      %v1934 = vmul.f32 %v718, %v1926
      %v1943 = vrot.slane %v1927, 1
      %v1944 = vrot.slane %v1928, 1
      %v1945 = vrot.slane %v1929, 1
      %v1946 = vrot.slane %v1930, 1
      %v1947 = vrot.slane %v1931, 1
      %v1948 = vrot.slane %v1932, 1
      %v1949 = vrot.slane %v1933, 1
      %v1950 = vrot.slane %v1934, 1
      %v1959 = vadd.f32 %v1927, %v1943
      %v1960 = vadd.f32 %v1928, %v1944
      %v1961 = vadd.f32 %v1929, %v1945
      %v1962 = vadd.f32 %v1930, %v1946
      %v1963 = vadd.f32 %v1931, %v1947
      %v1964 = vadd.f32 %v1932, %v1948
      %v1965 = vadd.f32 %v1933, %v1949
      %v1966 = vadd.f32 %v1934, %v1950
      %v1967 = vld [vmem:[%s1914] sm:$0x22]
      %v1968 = vld [vmem:[%s1914 + $0x10] sm:$0x22]
      %v1969 = vld [vmem:[%s1914 + $0x20] sm:$0x22]
      %v1970 = vld [vmem:[%s1914 + $0x30] sm:$0x22]
      %v1971 = vunpack.c.l.bf16 %v1967
      %v1972 = vunpack.c.h.bf16 %v1967
      %v1973 = vunpack.c.l.bf16 %v1968
      %v1974 = vunpack.c.h.bf16 %v1968
      %v1975 = vunpack.c.l.bf16 %v1969
      %v1976 = vunpack.c.h.bf16 %v1969
      %v1977 = vunpack.c.l.bf16 %v1970
      %v1978 = vunpack.c.h.bf16 %v1970
      %v1979 = vmul.f32 %v705, %v1971
      %v1980 = vmul.f32 %v706, %v1972
      %v1981 = vmul.f32 %v709, %v1973
      %v1982 = vmul.f32 %v710, %v1974
      %v1983 = vmul.f32 %v713, %v1975
      %v1984 = vmul.f32 %v714, %v1976
      %v1985 = vmul.f32 %v717, %v1977
      %v1986 = vmul.f32 %v718, %v1978
      %v1995 = vrot.slane %v1979, 2
      %v1996 = vrot.slane %v1980, 2
      %v1997 = vrot.slane %v1981, 2
      %v1998 = vrot.slane %v1982, 2
      %v1999 = vrot.slane %v1983, 2
      %v2000 = vrot.slane %v1984, 2
      %v2001 = vrot.slane %v1985, 2
      %v2002 = vrot.slane %v1986, 2
      %v2011 = vadd.f32 %v1959, %v1995
      %v2012 = vadd.f32 %v1960, %v1996
      %v2013 = vadd.f32 %v1961, %v1997
      %v2014 = vadd.f32 %v1962, %v1998
      %v2015 = vadd.f32 %v1963, %v1999
      %v2016 = vadd.f32 %v1964, %v2000
      %v2017 = vadd.f32 %v1965, %v2001
      %v2018 = vadd.f32 %v1966, %v2002
      %v2019 = vrot.slane %v1979, 3
      %v2020 = vrot.slane %v1980, 3
      %v2021 = vrot.slane %v1981, 3
      %v2022 = vrot.slane %v1982, 3
      %v2023 = vrot.slane %v1983, 3
      %v2024 = vrot.slane %v1984, 3
      %v2025 = vrot.slane %v1985, 3
      %v2026 = vrot.slane %v1986, 3
      %v2035 = vadd.f32 %v2011, %v2019
      %v2036 = vadd.f32 %v2012, %v2020
      %v2037 = vadd.f32 %v2013, %v2021
      %v2038 = vadd.f32 %v2014, %v2022
      %v2039 = vadd.f32 %v2015, %v2023
      %v2040 = vadd.f32 %v2016, %v2024
      %v2041 = vadd.f32 %v2017, %v2025
      %v2042 = vadd.f32 %v2018, %v2026
      %v2043 = vld [vmem:[%s1914] sm:$0x44]
      %v2044 = vld [vmem:[%s1914 + $0x10] sm:$0x44]
      %v2045 = vld [vmem:[%s1914 + $0x20] sm:$0x44]
      %v2046 = vld [vmem:[%s1914 + $0x30] sm:$0x44]
      %v2047 = vunpack.c.l.bf16 %v2043
      %v2048 = vunpack.c.h.bf16 %v2043
      %v2049 = vunpack.c.l.bf16 %v2044
      %v2050 = vunpack.c.h.bf16 %v2044
      %v2051 = vunpack.c.l.bf16 %v2045
      %v2052 = vunpack.c.h.bf16 %v2045
      %v2053 = vunpack.c.l.bf16 %v2046
      %v2054 = vunpack.c.h.bf16 %v2046
      %v2055 = vmul.f32 %v705, %v2047
      %v2056 = vmul.f32 %v706, %v2048
      %v2057 = vmul.f32 %v709, %v2049
      %v2058 = vmul.f32 %v710, %v2050
      %v2059 = vmul.f32 %v713, %v2051
      %v2060 = vmul.f32 %v714, %v2052
      %v2061 = vmul.f32 %v717, %v2053
      %v2062 = vmul.f32 %v718, %v2054
      %v2071 = vrot.slane %v2055, 4
      %v2072 = vrot.slane %v2056, 4
      %v2073 = vrot.slane %v2057, 4
      %v2074 = vrot.slane %v2058, 4
      %v2075 = vrot.slane %v2059, 4
      %v2076 = vrot.slane %v2060, 4
      %v2077 = vrot.slane %v2061, 4
      %v2078 = vrot.slane %v2062, 4
      %v2087 = vadd.f32 %v2035, %v2071
      %v2088 = vadd.f32 %v2036, %v2072
      %v2089 = vadd.f32 %v2037, %v2073
      %v2090 = vadd.f32 %v2038, %v2074
      %v2091 = vadd.f32 %v2039, %v2075
      %v2092 = vadd.f32 %v2040, %v2076
      %v2093 = vadd.f32 %v2041, %v2077
      %v2094 = vadd.f32 %v2042, %v2078
      %v2095 = vrot.slane %v2055, 5
      %v2096 = vrot.slane %v2056, 5
      %v2097 = vrot.slane %v2057, 5
      %v2098 = vrot.slane %v2058, 5
      %v2099 = vrot.slane %v2059, 5
      %v2100 = vrot.slane %v2060, 5
      %v2101 = vrot.slane %v2061, 5
      %v2102 = vrot.slane %v2062, 5
      %v2111 = vadd.f32 %v2087, %v2095
      %v2112 = vadd.f32 %v2088, %v2096
      %v2113 = vadd.f32 %v2089, %v2097
      %v2114 = vadd.f32 %v2090, %v2098
      %v2115 = vadd.f32 %v2091, %v2099
      %v2116 = vadd.f32 %v2092, %v2100
      %v2117 = vadd.f32 %v2093, %v2101
      %v2118 = vadd.f32 %v2094, %v2102
      %v2119 = vld [vmem:[%s1914] sm:$0x88]
      %v2120 = vld [vmem:[%s1914 + $0x10] sm:$0x88]
      %v2121 = vld [vmem:[%s1914 + $0x20] sm:$0x88]
      %v2122 = vld [vmem:[%s1914 + $0x30] sm:$0x88]
      %v2123 = vunpack.c.l.bf16 %v2119
      %v2124 = vunpack.c.h.bf16 %v2119
      %v2125 = vunpack.c.l.bf16 %v2120
      %v2126 = vunpack.c.h.bf16 %v2120
      %v2127 = vunpack.c.l.bf16 %v2121
      %v2128 = vunpack.c.h.bf16 %v2121
      %v2129 = vunpack.c.l.bf16 %v2122
      %v2130 = vunpack.c.h.bf16 %v2122
      %v2131 = vmul.f32 %v705, %v2123
      %v2132 = vmul.f32 %v706, %v2124
      %v2133 = vmul.f32 %v709, %v2125
      %v2134 = vmul.f32 %v710, %v2126
      %v2135 = vmul.f32 %v713, %v2127
      %v2136 = vmul.f32 %v714, %v2128
      %v2137 = vmul.f32 %v717, %v2129
      %v2138 = vmul.f32 %v718, %v2130
      %v2147 = vrot.slane %v2131, 6
      %v2148 = vrot.slane %v2132, 6
      %v2149 = vrot.slane %v2133, 6
      %v2150 = vrot.slane %v2134, 6
      %v2151 = vrot.slane %v2135, 6
      %v2152 = vrot.slane %v2136, 6
      %v2153 = vrot.slane %v2137, 6
      %v2154 = vrot.slane %v2138, 6
      %v2163 = vadd.f32 %v2111, %v2147
      %v2164 = vadd.f32 %v2112, %v2148
      %v2165 = vadd.f32 %v2113, %v2149
      %v2166 = vadd.f32 %v2114, %v2150
      %v2167 = vadd.f32 %v2115, %v2151
      %v2168 = vadd.f32 %v2116, %v2152
      %v2169 = vadd.f32 %v2117, %v2153
      %v2170 = vadd.f32 %v2118, %v2154
      %v2171 = vrot.slane %v2131, 7
      %v2172 = vrot.slane %v2132, 7
      %v2173 = vrot.slane %v2133, 7
      %v2174 = vrot.slane %v2134, 7
      %v2175 = vrot.slane %v2135, 7
      %v2176 = vrot.slane %v2136, 7
      %v2177 = vrot.slane %v2137, 7
      %v2178 = vrot.slane %v2138, 7
      %v2187 = vadd.f32 %v2163, %v2171
      %v2188 = vadd.f32 %v2164, %v2172
      %v2189 = vadd.f32 %v2165, %v2173
      %v2190 = vadd.f32 %v2166, %v2174
      %v2191 = vadd.f32 %v2167, %v2175
      %v2192 = vadd.f32 %v2168, %v2176
      %v2193 = vadd.f32 %v2169, %v2177
      %v2194 = vadd.f32 %v2170, %v2178
      %v2195 = vld [vmem:[%s1914 + $0x8] sm:$0x11]
      %v2196 = vld [vmem:[%s1914 + $0x18] sm:$0x11]
      %v2197 = vld [vmem:[%s1914 + $0x28] sm:$0x11]
      %v2198 = vld [vmem:[%s1914 + $0x38] sm:$0x11]
      %v2199 = vunpack.c.l.bf16 %v2195
      %v2200 = vunpack.c.h.bf16 %v2195
      %v2201 = vunpack.c.l.bf16 %v2196
      %v2202 = vunpack.c.h.bf16 %v2196
      %v2203 = vunpack.c.l.bf16 %v2197
      %v2204 = vunpack.c.h.bf16 %v2197
      %v2205 = vunpack.c.l.bf16 %v2198
      %v2206 = vunpack.c.h.bf16 %v2198
      %v2207 = vmul.f32 %v707, %v2199
      %v2208 = vmul.f32 %v708, %v2200
      %v2209 = vmul.f32 %v711, %v2201
      %v2210 = vmul.f32 %v712, %v2202
      %v2211 = vmul.f32 %v715, %v2203
      %v2212 = vmul.f32 %v716, %v2204
      %v2213 = vmul.f32 %v719, %v2205
      %v2214 = vmul.f32 %v720, %v2206
      %v2215 = vadd.f32 %v2187, %v2207
      %v2216 = vadd.f32 %v2188, %v2208
      %v2217 = vadd.f32 %v2189, %v2209
      %v2218 = vadd.f32 %v2190, %v2210
      %v2219 = vadd.f32 %v2191, %v2211
      %v2220 = vadd.f32 %v2192, %v2212
      %v2221 = vadd.f32 %v2193, %v2213
      %v2222 = vadd.f32 %v2194, %v2214
      %v2231 = vrot.slane %v2207, 1
      %v2232 = vrot.slane %v2208, 1
      %v2233 = vrot.slane %v2209, 1
      %v2234 = vrot.slane %v2210, 1
      %v2235 = vrot.slane %v2211, 1
      %v2236 = vrot.slane %v2212, 1
      %v2237 = vrot.slane %v2213, 1
      %v2238 = vrot.slane %v2214, 1
      %v2247 = vadd.f32 %v2215, %v2231
      %v2248 = vadd.f32 %v2216, %v2232
      %v2249 = vadd.f32 %v2217, %v2233
      %v2250 = vadd.f32 %v2218, %v2234
      %v2251 = vadd.f32 %v2219, %v2235
      %v2252 = vadd.f32 %v2220, %v2236
      %v2253 = vadd.f32 %v2221, %v2237
      %v2254 = vadd.f32 %v2222, %v2238
      %v2255 = vld [vmem:[%s1914 + $0x8] sm:$0x22]
      %v2256 = vld [vmem:[%s1914 + $0x18] sm:$0x22]
      %v2257 = vld [vmem:[%s1914 + $0x28] sm:$0x22]
      %v2258 = vld [vmem:[%s1914 + $0x38] sm:$0x22]
      %v2259 = vunpack.c.l.bf16 %v2255
      %v2260 = vunpack.c.h.bf16 %v2255
      %v2261 = vunpack.c.l.bf16 %v2256
      %v2262 = vunpack.c.h.bf16 %v2256
      %v2263 = vunpack.c.l.bf16 %v2257
      %v2264 = vunpack.c.h.bf16 %v2257
      %v2265 = vunpack.c.l.bf16 %v2258
      %v2266 = vunpack.c.h.bf16 %v2258
      %v2267 = vmul.f32 %v707, %v2259
      %v2268 = vmul.f32 %v708, %v2260
      %v2269 = vmul.f32 %v711, %v2261
      %v2270 = vmul.f32 %v712, %v2262
      %v2271 = vmul.f32 %v715, %v2263
      %v2272 = vmul.f32 %v716, %v2264
      %v2273 = vmul.f32 %v719, %v2265
      %v2274 = vmul.f32 %v720, %v2266
      %v2283 = vrot.slane %v2267, 2
      %v2284 = vrot.slane %v2268, 2
      %v2285 = vrot.slane %v2269, 2
      %v2286 = vrot.slane %v2270, 2
      %v2287 = vrot.slane %v2271, 2
      %v2288 = vrot.slane %v2272, 2
      %v2289 = vrot.slane %v2273, 2
      %v2290 = vrot.slane %v2274, 2
      %v2299 = vadd.f32 %v2247, %v2283
      %v2300 = vadd.f32 %v2248, %v2284
      %v2301 = vadd.f32 %v2249, %v2285
      %v2302 = vadd.f32 %v2250, %v2286
      %v2303 = vadd.f32 %v2251, %v2287
      %v2304 = vadd.f32 %v2252, %v2288
      %v2305 = vadd.f32 %v2253, %v2289
      %v2306 = vadd.f32 %v2254, %v2290
      %v2307 = vrot.slane %v2267, 3
      %v2308 = vrot.slane %v2268, 3
      %v2309 = vrot.slane %v2269, 3
      %v2310 = vrot.slane %v2270, 3
      %v2311 = vrot.slane %v2271, 3
      %v2312 = vrot.slane %v2272, 3
      %v2313 = vrot.slane %v2273, 3
      %v2314 = vrot.slane %v2274, 3
      %v2323 = vadd.f32 %v2299, %v2307
      %v2324 = vadd.f32 %v2300, %v2308
      %v2325 = vadd.f32 %v2301, %v2309
      %v2326 = vadd.f32 %v2302, %v2310
      %v2327 = vadd.f32 %v2303, %v2311
      %v2328 = vadd.f32 %v2304, %v2312
      %v2329 = vadd.f32 %v2305, %v2313
      %v2330 = vadd.f32 %v2306, %v2314
      %v2331 = vld [vmem:[%s1914 + $0x8] sm:$0x44]
      %v2332 = vld [vmem:[%s1914 + $0x18] sm:$0x44]
      %v2333 = vld [vmem:[%s1914 + $0x28] sm:$0x44]
      %v2334 = vld [vmem:[%s1914 + $0x38] sm:$0x44]
      %v2335 = vunpack.c.l.bf16 %v2331
      %v2336 = vunpack.c.h.bf16 %v2331
      %v2337 = vunpack.c.l.bf16 %v2332
      %v2338 = vunpack.c.h.bf16 %v2332
      %v2339 = vunpack.c.l.bf16 %v2333
      %v2340 = vunpack.c.h.bf16 %v2333
      %v2341 = vunpack.c.l.bf16 %v2334
      %v2342 = vunpack.c.h.bf16 %v2334
      %v2343 = vmul.f32 %v707, %v2335
      %v2344 = vmul.f32 %v708, %v2336
      %v2345 = vmul.f32 %v711, %v2337
      %v2346 = vmul.f32 %v712, %v2338
      %v2347 = vmul.f32 %v715, %v2339
      %v2348 = vmul.f32 %v716, %v2340
      %v2349 = vmul.f32 %v719, %v2341
      %v2350 = vmul.f32 %v720, %v2342
      %v2359 = vrot.slane %v2343, 4
      %v2360 = vrot.slane %v2344, 4
      %v2361 = vrot.slane %v2345, 4
      %v2362 = vrot.slane %v2346, 4
      %v2363 = vrot.slane %v2347, 4
      %v2364 = vrot.slane %v2348, 4
      %v2365 = vrot.slane %v2349, 4
      %v2366 = vrot.slane %v2350, 4
      %v2375 = vadd.f32 %v2323, %v2359
      %v2376 = vadd.f32 %v2324, %v2360
      %v2377 = vadd.f32 %v2325, %v2361
      %v2378 = vadd.f32 %v2326, %v2362
      %v2379 = vadd.f32 %v2327, %v2363
      %v2380 = vadd.f32 %v2328, %v2364
      %v2381 = vadd.f32 %v2329, %v2365
      %v2382 = vadd.f32 %v2330, %v2366
      %v2383 = vrot.slane %v2343, 5
      %v2384 = vrot.slane %v2344, 5
      %v2385 = vrot.slane %v2345, 5
      %v2386 = vrot.slane %v2346, 5
      %v2387 = vrot.slane %v2347, 5
      %v2388 = vrot.slane %v2348, 5
      %v2389 = vrot.slane %v2349, 5
      %v2390 = vrot.slane %v2350, 5
      %v2399 = vadd.f32 %v2375, %v2383
      %v2400 = vadd.f32 %v2376, %v2384
      %v2401 = vadd.f32 %v2377, %v2385
      %v2402 = vadd.f32 %v2378, %v2386
      %v2403 = vadd.f32 %v2379, %v2387
      %v2404 = vadd.f32 %v2380, %v2388
      %v2405 = vadd.f32 %v2381, %v2389
      %v2406 = vadd.f32 %v2382, %v2390
      %v2407 = vld [vmem:[%s1914 + $0x8] sm:$0x88]
      %v2408 = vld [vmem:[%s1914 + $0x18] sm:$0x88]
      %v2409 = vld [vmem:[%s1914 + $0x28] sm:$0x88]
      %v2410 = vld [vmem:[%s1914 + $0x38] sm:$0x88]
      %v2411 = vunpack.c.l.bf16 %v2407
      %v2412 = vunpack.c.h.bf16 %v2407
      %v2413 = vunpack.c.l.bf16 %v2408
      %v2414 = vunpack.c.h.bf16 %v2408
      %v2415 = vunpack.c.l.bf16 %v2409
      %v2416 = vunpack.c.h.bf16 %v2409
      %v2417 = vunpack.c.l.bf16 %v2410
      %v2418 = vunpack.c.h.bf16 %v2410
      %v2419 = vmul.f32 %v707, %v2411
      %v2420 = vmul.f32 %v708, %v2412
      %v2421 = vmul.f32 %v711, %v2413
      %v2422 = vmul.f32 %v712, %v2414
      %v2423 = vmul.f32 %v715, %v2415
      %v2424 = vmul.f32 %v716, %v2416
      %v2425 = vmul.f32 %v719, %v2417
      %v2426 = vmul.f32 %v720, %v2418
      %v2435 = vrot.slane %v2419, 6
      %v2436 = vrot.slane %v2420, 6
      %v2437 = vrot.slane %v2421, 6
      %v2438 = vrot.slane %v2422, 6
      %v2439 = vrot.slane %v2423, 6
      %v2440 = vrot.slane %v2424, 6
      %v2441 = vrot.slane %v2425, 6
      %v2442 = vrot.slane %v2426, 6
      %v2451 = vadd.f32 %v2399, %v2435
      %v2452 = vadd.f32 %v2400, %v2436
      %v2453 = vadd.f32 %v2401, %v2437
      %v2454 = vadd.f32 %v2402, %v2438
      %v2455 = vadd.f32 %v2403, %v2439
      %v2456 = vadd.f32 %v2404, %v2440
      %v2457 = vadd.f32 %v2405, %v2441
      %v2458 = vadd.f32 %v2406, %v2442
      %v2459 = vrot.slane %v2419, 7
      %v2460 = vrot.slane %v2420, 7
      %v2461 = vrot.slane %v2421, 7
      %v2462 = vrot.slane %v2422, 7
      %v2463 = vrot.slane %v2423, 7
      %v2464 = vrot.slane %v2424, 7
      %v2465 = vrot.slane %v2425, 7
      %v2466 = vrot.slane %v2426, 7
      %v2475 = vadd.f32 %v2451, %v2459
      %v2476 = vadd.f32 %v2452, %v2460
      %v2477 = vadd.f32 %v2453, %v2461
      %v2478 = vadd.f32 %v2454, %v2462
      %v2479 = vadd.f32 %v2455, %v2463
      %v2480 = vadd.f32 %v2456, %v2464
      %v2481 = vadd.f32 %v2457, %v2465
      %v2482 = vadd.f32 %v2458, %v2466
      %v2491 = vrot.slane %v2477, 7
      %v2492 = vsel %vm1298, %v2491, %v2475
      %v2493 = vrot.slane %v2479, 6
      %v2494 = vsel %vm1301, %v2493, %v2492
      %v2495 = vrot.slane %v2481, 5
      %v2496 = vsel %vm1304, %v2495, %v2494
      %v2497 = vrot.slane %v2478, 7
      %v2498 = vsel %vm1298, %v2497, %v2476
      %v2499 = vrot.slane %v2480, 6
      %v2500 = vsel %vm1301, %v2499, %v2498
      %v2501 = vrot.slane %v2482, 5
      %v2502 = vsel %vm1304, %v2501, %v2500
      %2505 = vst [vmem:[#allocation2 + $0x10] sm:$0xf] %v2496
      %2506 = vst [vmem:[#allocation2 + $0x18] sm:$0xf] %v2502
      %s2507 = scalar_lea.vmem %s348, 192
      %v2508 = vld [vmem:[%s2507] sm:$0x11]
      %v2509 = vld [vmem:[%s2507 + $0x10] sm:$0x11]
      %v2510 = vld [vmem:[%s2507 + $0x20] sm:$0x11]
      %v2511 = vld [vmem:[%s2507 + $0x30] sm:$0x11]
      %v2512 = vunpack.c.l.bf16 %v2508
      %v2513 = vunpack.c.h.bf16 %v2508
      %v2514 = vunpack.c.l.bf16 %v2509
      %v2515 = vunpack.c.h.bf16 %v2509
      %v2516 = vunpack.c.l.bf16 %v2510
      %v2517 = vunpack.c.h.bf16 %v2510
      %v2518 = vunpack.c.l.bf16 %v2511
      %v2519 = vunpack.c.h.bf16 %v2511
      %v2520 = vmul.f32 %v705, %v2512
      %v2521 = vmul.f32 %v706, %v2513
      %v2522 = vmul.f32 %v709, %v2514
      %v2523 = vmul.f32 %v710, %v2515
      %v2524 = vmul.f32 %v713, %v2516
      %v2525 = vmul.f32 %v714, %v2517
      %v2526 = vmul.f32 %v717, %v2518
      %v2527 = vmul.f32 %v718, %v2519
      %v2536 = vrot.slane %v2520, 1
      %v2537 = vrot.slane %v2521, 1
      %v2538 = vrot.slane %v2522, 1
      %v2539 = vrot.slane %v2523, 1
      %v2540 = vrot.slane %v2524, 1
      %v2541 = vrot.slane %v2525, 1
      %v2542 = vrot.slane %v2526, 1
      %v2543 = vrot.slane %v2527, 1
      %v2552 = vadd.f32 %v2520, %v2536
      %v2553 = vadd.f32 %v2521, %v2537
      %v2554 = vadd.f32 %v2522, %v2538
      %v2555 = vadd.f32 %v2523, %v2539
      %v2556 = vadd.f32 %v2524, %v2540
      %v2557 = vadd.f32 %v2525, %v2541
      %v2558 = vadd.f32 %v2526, %v2542
      %v2559 = vadd.f32 %v2527, %v2543
      %v2560 = vld [vmem:[%s2507] sm:$0x22]
      %v2561 = vld [vmem:[%s2507 + $0x10] sm:$0x22]
      %v2562 = vld [vmem:[%s2507 + $0x20] sm:$0x22]
      %v2563 = vld [vmem:[%s2507 + $0x30] sm:$0x22]
      %v2564 = vunpack.c.l.bf16 %v2560
      %v2565 = vunpack.c.h.bf16 %v2560
      %v2566 = vunpack.c.l.bf16 %v2561
      %v2567 = vunpack.c.h.bf16 %v2561
      %v2568 = vunpack.c.l.bf16 %v2562
      %v2569 = vunpack.c.h.bf16 %v2562
      %v2570 = vunpack.c.l.bf16 %v2563
      %v2571 = vunpack.c.h.bf16 %v2563
      %v2572 = vmul.f32 %v705, %v2564
      %v2573 = vmul.f32 %v706, %v2565
      %v2574 = vmul.f32 %v709, %v2566
      %v2575 = vmul.f32 %v710, %v2567
      %v2576 = vmul.f32 %v713, %v2568
      %v2577 = vmul.f32 %v714, %v2569
      %v2578 = vmul.f32 %v717, %v2570
      %v2579 = vmul.f32 %v718, %v2571
      %v2588 = vrot.slane %v2572, 2
      %v2589 = vrot.slane %v2573, 2
      %v2590 = vrot.slane %v2574, 2
      %v2591 = vrot.slane %v2575, 2
      %v2592 = vrot.slane %v2576, 2
      %v2593 = vrot.slane %v2577, 2
      %v2594 = vrot.slane %v2578, 2
      %v2595 = vrot.slane %v2579, 2
      %v2604 = vadd.f32 %v2552, %v2588
      %v2605 = vadd.f32 %v2553, %v2589
      %v2606 = vadd.f32 %v2554, %v2590
      %v2607 = vadd.f32 %v2555, %v2591
      %v2608 = vadd.f32 %v2556, %v2592
      %v2609 = vadd.f32 %v2557, %v2593
      %v2610 = vadd.f32 %v2558, %v2594
      %v2611 = vadd.f32 %v2559, %v2595
      %v2612 = vrot.slane %v2572, 3
      %v2613 = vrot.slane %v2573, 3
      %v2614 = vrot.slane %v2574, 3
      %v2615 = vrot.slane %v2575, 3
      %v2616 = vrot.slane %v2576, 3
      %v2617 = vrot.slane %v2577, 3
      %v2618 = vrot.slane %v2578, 3
      %v2619 = vrot.slane %v2579, 3
      %v2628 = vadd.f32 %v2604, %v2612
      %v2629 = vadd.f32 %v2605, %v2613
      %v2630 = vadd.f32 %v2606, %v2614
      %v2631 = vadd.f32 %v2607, %v2615
      %v2632 = vadd.f32 %v2608, %v2616
      %v2633 = vadd.f32 %v2609, %v2617
      %v2634 = vadd.f32 %v2610, %v2618
      %v2635 = vadd.f32 %v2611, %v2619
      %v2636 = vld [vmem:[%s2507] sm:$0x44]
      %v2637 = vld [vmem:[%s2507 + $0x10] sm:$0x44]
      %v2638 = vld [vmem:[%s2507 + $0x20] sm:$0x44]
      %v2639 = vld [vmem:[%s2507 + $0x30] sm:$0x44]
      %v2640 = vunpack.c.l.bf16 %v2636
      %v2641 = vunpack.c.h.bf16 %v2636
      %v2642 = vunpack.c.l.bf16 %v2637
      %v2643 = vunpack.c.h.bf16 %v2637
      %v2644 = vunpack.c.l.bf16 %v2638
      %v2645 = vunpack.c.h.bf16 %v2638
      %v2646 = vunpack.c.l.bf16 %v2639
      %v2647 = vunpack.c.h.bf16 %v2639
      %v2648 = vmul.f32 %v705, %v2640
      %v2649 = vmul.f32 %v706, %v2641
      %v2650 = vmul.f32 %v709, %v2642
      %v2651 = vmul.f32 %v710, %v2643
      %v2652 = vmul.f32 %v713, %v2644
      %v2653 = vmul.f32 %v714, %v2645
      %v2654 = vmul.f32 %v717, %v2646
      %v2655 = vmul.f32 %v718, %v2647
      %v2664 = vrot.slane %v2648, 4
      %v2665 = vrot.slane %v2649, 4
      %v2666 = vrot.slane %v2650, 4
      %v2667 = vrot.slane %v2651, 4
      %v2668 = vrot.slane %v2652, 4
      %v2669 = vrot.slane %v2653, 4
      %v2670 = vrot.slane %v2654, 4
      %v2671 = vrot.slane %v2655, 4
      %v2680 = vadd.f32 %v2628, %v2664
      %v2681 = vadd.f32 %v2629, %v2665
      %v2682 = vadd.f32 %v2630, %v2666
      %v2683 = vadd.f32 %v2631, %v2667
      %v2684 = vadd.f32 %v2632, %v2668
      %v2685 = vadd.f32 %v2633, %v2669
      %v2686 = vadd.f32 %v2634, %v2670
      %v2687 = vadd.f32 %v2635, %v2671
      %v2688 = vrot.slane %v2648, 5
      %v2689 = vrot.slane %v2649, 5
      %v2690 = vrot.slane %v2650, 5
      %v2691 = vrot.slane %v2651, 5
      %v2692 = vrot.slane %v2652, 5
      %v2693 = vrot.slane %v2653, 5
      %v2694 = vrot.slane %v2654, 5
      %v2695 = vrot.slane %v2655, 5
      %v2704 = vadd.f32 %v2680, %v2688
      %v2705 = vadd.f32 %v2681, %v2689
      %v2706 = vadd.f32 %v2682, %v2690
      %v2707 = vadd.f32 %v2683, %v2691
      %v2708 = vadd.f32 %v2684, %v2692
      %v2709 = vadd.f32 %v2685, %v2693
      %v2710 = vadd.f32 %v2686, %v2694
      %v2711 = vadd.f32 %v2687, %v2695
      %v2712 = vld [vmem:[%s2507] sm:$0x88]
      %v2713 = vld [vmem:[%s2507 + $0x10] sm:$0x88]
      %v2714 = vld [vmem:[%s2507 + $0x20] sm:$0x88]
      %v2715 = vld [vmem:[%s2507 + $0x30] sm:$0x88]
      %v2716 = vunpack.c.l.bf16 %v2712
      %v2717 = vunpack.c.h.bf16 %v2712
      %v2718 = vunpack.c.l.bf16 %v2713
      %v2719 = vunpack.c.h.bf16 %v2713
      %v2720 = vunpack.c.l.bf16 %v2714
      %v2721 = vunpack.c.h.bf16 %v2714
      %v2722 = vunpack.c.l.bf16 %v2715
      %v2723 = vunpack.c.h.bf16 %v2715
      %v2724 = vmul.f32 %v705, %v2716
      %v2725 = vmul.f32 %v706, %v2717
      %v2726 = vmul.f32 %v709, %v2718
      %v2727 = vmul.f32 %v710, %v2719
      %v2728 = vmul.f32 %v713, %v2720
      %v2729 = vmul.f32 %v714, %v2721
      %v2730 = vmul.f32 %v717, %v2722
      %v2731 = vmul.f32 %v718, %v2723
      %v2740 = vrot.slane %v2724, 6
      %v2741 = vrot.slane %v2725, 6
      %v2742 = vrot.slane %v2726, 6
      %v2743 = vrot.slane %v2727, 6
      %v2744 = vrot.slane %v2728, 6
      %v2745 = vrot.slane %v2729, 6
      %v2746 = vrot.slane %v2730, 6
      %v2747 = vrot.slane %v2731, 6
      %v2756 = vadd.f32 %v2704, %v2740
      %v2757 = vadd.f32 %v2705, %v2741
      %v2758 = vadd.f32 %v2706, %v2742
      %v2759 = vadd.f32 %v2707, %v2743
      %v2760 = vadd.f32 %v2708, %v2744
      %v2761 = vadd.f32 %v2709, %v2745
      %v2762 = vadd.f32 %v2710, %v2746
      %v2763 = vadd.f32 %v2711, %v2747
      %v2764 = vrot.slane %v2724, 7
      %v2765 = vrot.slane %v2725, 7
      %v2766 = vrot.slane %v2726, 7
      %v2767 = vrot.slane %v2727, 7
      %v2768 = vrot.slane %v2728, 7
      %v2769 = vrot.slane %v2729, 7
      %v2770 = vrot.slane %v2730, 7
      %v2771 = vrot.slane %v2731, 7
      %v2780 = vadd.f32 %v2756, %v2764
      %v2781 = vadd.f32 %v2757, %v2765
      %v2782 = vadd.f32 %v2758, %v2766
      %v2783 = vadd.f32 %v2759, %v2767
      %v2784 = vadd.f32 %v2760, %v2768
      %v2785 = vadd.f32 %v2761, %v2769
      %v2786 = vadd.f32 %v2762, %v2770
      %v2787 = vadd.f32 %v2763, %v2771
      %v2788 = vld [vmem:[%s2507 + $0x8] sm:$0x11]
      %v2789 = vld [vmem:[%s2507 + $0x18] sm:$0x11]
      %v2790 = vld [vmem:[%s2507 + $0x28] sm:$0x11]
      %v2791 = vld [vmem:[%s2507 + $0x38] sm:$0x11]
      %v2792 = vunpack.c.l.bf16 %v2788
      %v2793 = vunpack.c.h.bf16 %v2788
      %v2794 = vunpack.c.l.bf16 %v2789
      %v2795 = vunpack.c.h.bf16 %v2789
      %v2796 = vunpack.c.l.bf16 %v2790
      %v2797 = vunpack.c.h.bf16 %v2790
      %v2798 = vunpack.c.l.bf16 %v2791
      %v2799 = vunpack.c.h.bf16 %v2791
      %v2800 = vmul.f32 %v707, %v2792
      %v2801 = vmul.f32 %v708, %v2793
      %v2802 = vmul.f32 %v711, %v2794
      %v2803 = vmul.f32 %v712, %v2795
      %v2804 = vmul.f32 %v715, %v2796
      %v2805 = vmul.f32 %v716, %v2797
      %v2806 = vmul.f32 %v719, %v2798
      %v2807 = vmul.f32 %v720, %v2799
      %v2808 = vadd.f32 %v2780, %v2800
      %v2809 = vadd.f32 %v2781, %v2801
      %v2810 = vadd.f32 %v2782, %v2802
      %v2811 = vadd.f32 %v2783, %v2803
      %v2812 = vadd.f32 %v2784, %v2804
      %v2813 = vadd.f32 %v2785, %v2805
      %v2814 = vadd.f32 %v2786, %v2806
      %v2815 = vadd.f32 %v2787, %v2807
      %v2824 = vrot.slane %v2800, 1
      %v2825 = vrot.slane %v2801, 1
      %v2826 = vrot.slane %v2802, 1
      %v2827 = vrot.slane %v2803, 1
      %v2828 = vrot.slane %v2804, 1
      %v2829 = vrot.slane %v2805, 1
      %v2830 = vrot.slane %v2806, 1
      %v2831 = vrot.slane %v2807, 1
      %v2840 = vadd.f32 %v2808, %v2824
      %v2841 = vadd.f32 %v2809, %v2825
      %v2842 = vadd.f32 %v2810, %v2826
      %v2843 = vadd.f32 %v2811, %v2827
      %v2844 = vadd.f32 %v2812, %v2828
      %v2845 = vadd.f32 %v2813, %v2829
      %v2846 = vadd.f32 %v2814, %v2830
      %v2847 = vadd.f32 %v2815, %v2831
      %v2848 = vld [vmem:[%s2507 + $0x8] sm:$0x22]
      %v2849 = vld [vmem:[%s2507 + $0x18] sm:$0x22]
      %v2850 = vld [vmem:[%s2507 + $0x28] sm:$0x22]
      %v2851 = vld [vmem:[%s2507 + $0x38] sm:$0x22]
      %v2852 = vunpack.c.l.bf16 %v2848
      %v2853 = vunpack.c.h.bf16 %v2848
      %v2854 = vunpack.c.l.bf16 %v2849
      %v2855 = vunpack.c.h.bf16 %v2849
      %v2856 = vunpack.c.l.bf16 %v2850
      %v2857 = vunpack.c.h.bf16 %v2850
      %v2858 = vunpack.c.l.bf16 %v2851
      %v2859 = vunpack.c.h.bf16 %v2851
      %v2860 = vmul.f32 %v707, %v2852
      %v2861 = vmul.f32 %v708, %v2853
      %v2862 = vmul.f32 %v711, %v2854
      %v2863 = vmul.f32 %v712, %v2855
      %v2864 = vmul.f32 %v715, %v2856
      %v2865 = vmul.f32 %v716, %v2857
      %v2866 = vmul.f32 %v719, %v2858
      %v2867 = vmul.f32 %v720, %v2859
      %v2876 = vrot.slane %v2860, 2
      %v2877 = vrot.slane %v2861, 2
      %v2878 = vrot.slane %v2862, 2
      %v2879 = vrot.slane %v2863, 2
      %v2880 = vrot.slane %v2864, 2
      %v2881 = vrot.slane %v2865, 2
      %v2882 = vrot.slane %v2866, 2
      %v2883 = vrot.slane %v2867, 2
      %v2892 = vadd.f32 %v2840, %v2876
      %v2893 = vadd.f32 %v2841, %v2877
      %v2894 = vadd.f32 %v2842, %v2878
      %v2895 = vadd.f32 %v2843, %v2879
      %v2896 = vadd.f32 %v2844, %v2880
      %v2897 = vadd.f32 %v2845, %v2881
      %v2898 = vadd.f32 %v2846, %v2882
      %v2899 = vadd.f32 %v2847, %v2883
      %v2900 = vrot.slane %v2860, 3
      %v2901 = vrot.slane %v2861, 3
      %v2902 = vrot.slane %v2862, 3
      %v2903 = vrot.slane %v2863, 3
      %v2904 = vrot.slane %v2864, 3
      %v2905 = vrot.slane %v2865, 3
      %v2906 = vrot.slane %v2866, 3
      %v2907 = vrot.slane %v2867, 3
      %v2916 = vadd.f32 %v2892, %v2900
      %v2917 = vadd.f32 %v2893, %v2901
      %v2918 = vadd.f32 %v2894, %v2902
      %v2919 = vadd.f32 %v2895, %v2903
      %v2920 = vadd.f32 %v2896, %v2904
      %v2921 = vadd.f32 %v2897, %v2905
      %v2922 = vadd.f32 %v2898, %v2906
      %v2923 = vadd.f32 %v2899, %v2907
      %v2924 = vld [vmem:[%s2507 + $0x8] sm:$0x44]
      %v2925 = vld [vmem:[%s2507 + $0x18] sm:$0x44]
      %v2926 = vld [vmem:[%s2507 + $0x28] sm:$0x44]
      %v2927 = vld [vmem:[%s2507 + $0x38] sm:$0x44]
      %v2928 = vunpack.c.l.bf16 %v2924
      %v2929 = vunpack.c.h.bf16 %v2924
      %v2930 = vunpack.c.l.bf16 %v2925
      %v2931 = vunpack.c.h.bf16 %v2925
      %v2932 = vunpack.c.l.bf16 %v2926
      %v2933 = vunpack.c.h.bf16 %v2926
      %v2934 = vunpack.c.l.bf16 %v2927
      %v2935 = vunpack.c.h.bf16 %v2927
      %v2936 = vmul.f32 %v707, %v2928
      %v2937 = vmul.f32 %v708, %v2929
      %v2938 = vmul.f32 %v711, %v2930
      %v2939 = vmul.f32 %v712, %v2931
      %v2940 = vmul.f32 %v715, %v2932
      %v2941 = vmul.f32 %v716, %v2933
      %v2942 = vmul.f32 %v719, %v2934
      %v2943 = vmul.f32 %v720, %v2935
      %v2952 = vrot.slane %v2936, 4
      %v2953 = vrot.slane %v2937, 4
      %v2954 = vrot.slane %v2938, 4
      %v2955 = vrot.slane %v2939, 4
      %v2956 = vrot.slane %v2940, 4
      %v2957 = vrot.slane %v2941, 4
      %v2958 = vrot.slane %v2942, 4
      %v2959 = vrot.slane %v2943, 4
      %v2968 = vadd.f32 %v2916, %v2952
      %v2969 = vadd.f32 %v2917, %v2953
      %v2970 = vadd.f32 %v2918, %v2954
      %v2971 = vadd.f32 %v2919, %v2955
      %v2972 = vadd.f32 %v2920, %v2956
      %v2973 = vadd.f32 %v2921, %v2957
      %v2974 = vadd.f32 %v2922, %v2958
      %v2975 = vadd.f32 %v2923, %v2959
      %v2976 = vrot.slane %v2936, 5
      %v2977 = vrot.slane %v2937, 5
      %v2978 = vrot.slane %v2938, 5
      %v2979 = vrot.slane %v2939, 5
      %v2980 = vrot.slane %v2940, 5
      %v2981 = vrot.slane %v2941, 5
      %v2982 = vrot.slane %v2942, 5
      %v2983 = vrot.slane %v2943, 5
      %v2992 = vadd.f32 %v2968, %v2976
      %v2993 = vadd.f32 %v2969, %v2977
      %v2994 = vadd.f32 %v2970, %v2978
      %v2995 = vadd.f32 %v2971, %v2979
      %v2996 = vadd.f32 %v2972, %v2980
      %v2997 = vadd.f32 %v2973, %v2981
      %v2998 = vadd.f32 %v2974, %v2982
      %v2999 = vadd.f32 %v2975, %v2983
      %v3000 = vld [vmem:[%s2507 + $0x8] sm:$0x88]
      %v3001 = vld [vmem:[%s2507 + $0x18] sm:$0x88]
      %v3002 = vld [vmem:[%s2507 + $0x28] sm:$0x88]
      %v3003 = vld [vmem:[%s2507 + $0x38] sm:$0x88]
      %v3004 = vunpack.c.l.bf16 %v3000
      %v3005 = vunpack.c.h.bf16 %v3000
      %v3006 = vunpack.c.l.bf16 %v3001
      %v3007 = vunpack.c.h.bf16 %v3001
      %v3008 = vunpack.c.l.bf16 %v3002
      %v3009 = vunpack.c.h.bf16 %v3002
      %v3010 = vunpack.c.l.bf16 %v3003
      %v3011 = vunpack.c.h.bf16 %v3003
      %v3012 = vmul.f32 %v707, %v3004
      %v3013 = vmul.f32 %v708, %v3005
      %v3014 = vmul.f32 %v711, %v3006
      %v3015 = vmul.f32 %v712, %v3007
      %v3016 = vmul.f32 %v715, %v3008
      %v3017 = vmul.f32 %v716, %v3009
      %v3018 = vmul.f32 %v719, %v3010
      %v3019 = vmul.f32 %v720, %v3011
      %v3028 = vrot.slane %v3012, 6
      %v3029 = vrot.slane %v3013, 6
      %v3030 = vrot.slane %v3014, 6
      %v3031 = vrot.slane %v3015, 6
      %v3032 = vrot.slane %v3016, 6
      %v3033 = vrot.slane %v3017, 6
      %v3034 = vrot.slane %v3018, 6
      %v3035 = vrot.slane %v3019, 6
      %v3044 = vadd.f32 %v2992, %v3028
      %v3045 = vadd.f32 %v2993, %v3029
      %v3046 = vadd.f32 %v2994, %v3030
      %v3047 = vadd.f32 %v2995, %v3031
      %v3048 = vadd.f32 %v2996, %v3032
      %v3049 = vadd.f32 %v2997, %v3033
      %v3050 = vadd.f32 %v2998, %v3034
      %v3051 = vadd.f32 %v2999, %v3035
      %v3052 = vrot.slane %v3012, 7
      %v3053 = vrot.slane %v3013, 7
      %v3054 = vrot.slane %v3014, 7
      %v3055 = vrot.slane %v3015, 7
      %v3056 = vrot.slane %v3016, 7
      %v3057 = vrot.slane %v3017, 7
      %v3058 = vrot.slane %v3018, 7
      %v3059 = vrot.slane %v3019, 7
      %v3068 = vadd.f32 %v3044, %v3052
      %v3069 = vadd.f32 %v3045, %v3053
      %v3070 = vadd.f32 %v3046, %v3054
      %v3071 = vadd.f32 %v3047, %v3055
      %v3072 = vadd.f32 %v3048, %v3056
      %v3073 = vadd.f32 %v3049, %v3057
      %v3074 = vadd.f32 %v3050, %v3058
      %v3075 = vadd.f32 %v3051, %v3059
      %v3084 = vrot.slane %v3068, 4
      %v3085 = vrot.slane %v3070, 3
      %v3086 = vsel %vm1895, %v3085, %v3084
      %v3087 = vrot.slane %v3072, 2
      %v3088 = vsel %vm1898, %v3087, %v3086
      %v3089 = vrot.slane %v3074, 1
      %v3090 = vsel %vm1901, %v3089, %v3088
      %v3091 = vrot.slane %v3069, 4
      %v3092 = vrot.slane %v3071, 3
      %v3093 = vsel %vm1895, %v3092, %v3091
      %v3094 = vrot.slane %v3073, 2
      %v3095 = vsel %vm1898, %v3094, %v3093
      %v3096 = vrot.slane %v3075, 1
      %v3097 = vsel %vm1901, %v3096, %v3095
      %3100 = vst [vmem:[#allocation2 + $0x10] sm:$0xf0] %v3090
      %3101 = vst [vmem:[#allocation2 + $0x18] sm:$0xf0] %v3097
      %v3102 = vld [vmem:[#allocation2] sm:$0xff]
      %v3103 = vld [vmem:[#allocation2 + $0x8] sm:$0xff]
      %v3104 = vld [vmem:[#allocation2 + $0x10] sm:$0xff]
      %v3105 = vld [vmem:[#allocation2 + $0x18] sm:$0xff]
      %v3106 = vpack.c.bf16 %v3104, %v3102
      %v3107 = vpack.c.bf16 %v3105, %v3103
      %v3108 = vld [vmem:[%s4] sm:$0xf]
      %v3109 = vld [vmem:[%s4 + $0x4] sm:$0xf]
      %v3110 = vld [vmem:[%s5] sm:$0xff]
      %v3111 = vld [vmem:[%s5 + $0x8] sm:$0xff]
      %3113 = vset.pattern.permute.xlu0 0
      %3114 = vperm.xlu0 %3113, %v3110
      %v3115 = vpop.permute.xlu0 %3114
      %3118 = vset.pattern.permute.xlu0 0
      %3119 = vperm.xlu0 %3118, %v3111
      %v3120 = vpop.permute.xlu0 %3119
      %v3124 = vunpack.c.l.b16 %v3108
      %v3125 = vunpack.c.l.b16 %v3109
      %v3126 = vpack.c.b16 %v3125, %v3124
      %vm3127 = vcmask 130048
      %v3129 = vsel %vm3127, %v3126, 0
      %3131 = vmatprep.subr.bf16.mxu0 %v3107
      %3132 = vmatpush1.bf16.msra.mxu0 %v3106
      %3133 = vmatprep.subr.bf16.mxu0 0
      %3134 = vmatpush1.bf16.msra.mxu0 0
      %3135 = vmatprep.subr.bf16.mxu0 0
      %3136 = vmatpush1.bf16.msra.mxu0 0
      %3137 = vmatprep.subr.bf16.mxu0 0
      %3138 = vmatpush1.bf16.msra.mxu0 0
      %3139 = vmatprep.subr.bf16.mxu0 0
      %3140 = vmatpush1.bf16.msra.mxu0 0
      %3141 = vmatprep.subr.bf16.mxu0 0
      %3142 = vmatpush1.bf16.msra.mxu0 0
      %3143 = vmatprep.subr.bf16.mxu0 0
      %3144 = vmatpush1.bf16.msra.mxu0 0
      %3145 = vmatprep.subr.bf16.mxu0 0
      %3146 = vmatpush1.bf16.msra.mxu0 0
      %3147 = vmatprep.subr.bf16.mxu0 0
      %3148 = vmatpush1.bf16.msra.mxu0 0
      %3149 = vmatprep.subr.bf16.mxu0 0
      %3150 = vmatpush1.bf16.msra.mxu0 0
      %3151 = vmatprep.subr.bf16.mxu0 0
      %3152 = vmatpush1.bf16.msra.mxu0 0
      %3153 = vmatprep.subr.bf16.mxu0 0
      %3154 = vmatpush1.bf16.msra.mxu0 0
      %3155 = vmatprep.subr.bf16.mxu0 0
      %3156 = vmatpush1.bf16.msra.mxu0 0
      %3157 = vmatprep.subr.bf16.mxu0 0
      %3158 = vmatpush1.bf16.msra.mxu0 0
      %3159 = vmatprep.subr.bf16.mxu0 0
      %3160 = vmatpush1.bf16.msra.mxu0 0
      %3161 = vmatprep.subr.bf16.mxu0 0
      %3162 = vmatpush1.bf16.msra.mxu0 0
      %3163 = vmatprep.mubr.bf16.mxu0 0
      %3164 = vmatmul.mubr.bf16.gmra.mrb[0].mxu0 %v3129
      %v3165 = vpop.f32.mrb[0].mxu0
      %v3166 = vadd.f32 %v3115, %v3165
      %v3167 = vpop.f32.mrb[0].mxu0
      %v3168 = vadd.f32 %v3115, %v3167
      %v3169 = vpop.f32.mrb[0].mxu0
      %v3170 = vadd.f32 %v3120, %v3169
      %v3171 = vpop.f32.mrb[0].mxu0
      %v3172 = vadd.f32 %v3120, %v3171
      %3173 = vdwg.mxu0
      %3174 = vst [vmem:[%s358] sm:$0xff] %v3166
      %3175 = vst [vmem:[%s358 + $0x8] sm:$0xff] %v3168
      %3176 = vst [vmem:[%s358 + $0x10] sm:$0xff] %v3170
      %3177 = vst [vmem:[%s358 + $0x18] sm:$0xff] %v3172
      %s3178 = smul.u32 2, %s22
      %p3179 = scmp.lt.s32.totalorder %s21, 1
      %s3180 = scalar_select %p3179, %s21, 1
      %p3181 = scmp.lt.s32.totalorder %s3178, 1
      %s3182 = scalar_select %p3181, %s3178, 1
      %s3183 = smul.addr %s3180, 4
      %s3184 = sadd.s32 %s3182, %s3183
      %s3185 = smul.addr %s3184, 8
      %s3186 = scalar_lea.vmem %s6, %s3185
      // Predicated region
      $region45: #{_lambda_.3} parent=43 // pred_check
        %p3187 = pneg %p196
      $region46: #{_lambda_.3} parent=43 // pred_check_branch
        %3189 = sbr.rel (%p3187) target = $region48
      $region47: #{_lambda_.3} parent=43 // pred_region
        %s3190 = smul.u32 2, %s22
      $region48: #{_lambda_.3} parent=43 // pred_fallthru
        _
    $region44: #{_lambda_.3} parent=5 // pred_fallthru
      _
    %p3191 = scmp.le.s32.totalorder 2, %s12
    // Predicated region
    $region49: #{_lambda_.3} parent=5 // pred_check
      %p3192 = pneg %p3191
    $region50: #{_lambda_.3} parent=5 // pred_check_branch
      %3194 = sbr.rel (%p3192) target = $region52
    $region51: #{_lambda_.3} parent=5 // pred_region
      %s3195 = ssub.s32 %s12, 2
      // Predicated region
      $region53: #{_lambda_.3} parent=51 // pred_check
        %p3196 = pneg %p202
      $region54: #{_lambda_.3} parent=51 // pred_check_branch
        %3198 = sbr.rel (%p3196) target = $region56
      $region55: #{_lambda_.3} parent=51 // pred_region
        %s3199 = smul.u32 2, %s24
        %p3200 = scmp.lt.s32.totalorder %s23, 1
        %s3201 = scalar_select %p3200, %s23, 1
        %p3202 = scmp.lt.s32.totalorder %s3199, 1
        %s3203 = scalar_select %p3202, %s3199, 1
        %s3204 = smul.addr %s3201, 4
        %s3205 = sadd.s32 %s3203, %s3204
        %s3206 = smul.addr %s3205, 8
        %s3207 = scalar_lea.vmem %s6, %s3206
      $region56: #{_lambda_.3} parent=51 // pred_fallthru
        _
    $region52: #{_lambda_.3} parent=5 // pred_fallthru
      _
  $region6: #{_lambda_.3} parent=0 // loop_footer
    %s16 = sadd.s32 1, %s12
  $region7: #{_lambda_.3} parent=0 // loop_footer_branch
    %11 = sbr.rel target = $region3
  $region8: #{_lambda_.3} parent=0 // loop_exit
    _

</llo_original>
